<compile_context>
chip_gen: v6e
topology: v6e:2x2x1
jax: 0.10.0
libtpu: 0.0.40
codegen_flags: <defaults>
</compile_context>

<pallas_src>
import functools
import numpy as np

import jax
import jax.numpy as jnp
from jax.experimental import pallas as pl
from jax.experimental.pallas import tpu as pltpu


# --------------------------------------------------------------------------------------
# Fused per-layer kernel: 3x3 conv (pad=1) + bias + GroupNorm + ReLU [+ 2x bilinear up].
# One batch sample per grid step, NHWC layout inside the kernel.
# --------------------------------------------------------------------------------------
def _fused_layer_kernel(xpad_ref, w_ref, b_ref, gamma_ref, beta_ref, s_ref, out_ref,
                        *, H, W, Cin, Cout, eps, upsample):
    xp = xpad_ref[0]                                              # (H+2, W+2, Cin)

    # --- conv: single im2col matmul with K = 9*Cin ----------------------------------
    taps = []
    for dy in range(3):
        for dx in range(3):
            taps.append(xp[dy:dy + H, dx:dx + W, :].reshape(H * W, Cin))
    patch = jnp.concatenate(taps, axis=1).astype(jnp.float32)     # (H*W, 9*Cin)
    acc = jnp.dot(patch, w_ref[...].astype(jnp.float32),
                  preferred_element_type=jnp.float32)             # (H*W, Cout)
    acc = acc + b_ref[...]                                        # (1, Cout) broadcast

    # --- GroupNorm (centered two-pass) + affine + ReLU -------------------------------
    # s_ref is the (Cout, Cout) group-pooling matrix pre-scaled by 1/(Cg*H*W):
    # per-channel sums @ S  ==  per-group mean, already broadcast back to channels.
    sum_c = jnp.sum(acc, axis=0, keepdims=True)                   # (1, Cout)
    mean_c = jnp.dot(sum_c, s_ref[...], preferred_element_type=jnp.float32)
    d = acc - mean_c
    ssq_c = jnp.sum(d * d, axis=0, keepdims=True)                 # (1, Cout)
    var_c = jnp.dot(ssq_c, s_ref[...], preferred_element_type=jnp.float32)
    y = d * jax.lax.rsqrt(var_c + eps) * gamma_ref[...] + beta_ref[...]
    y = jnp.maximum(y, 0.0)                                       # ReLU, (H*W, Cout)

    if not upsample:
        out_ref[0] = y.reshape(H, W, Cout).astype(out_ref.dtype)
        return

    # --- fused 2x bilinear upsample (align_corners=False), shift-and-add -------------
    y3 = y.reshape(H, W, Cout)
    # height neighbours (edge replicated): y3[max(h-1,0)], y3[min(h+1,H-1)]
    hm = jnp.concatenate([y3[:1], y3[:-1]], axis=0)
    hp = jnp.concatenate([y3[1:], y3[-1:]], axis=0)
    r_even = 0.75 * y3 + 0.25 * hm                                # output rows 2h
    r_odd = 0.75 * y3 + 0.25 * hp                                 # output rows 2h+1
    # interleave along H (leading dims only -> free): (H,2,W,C) -> (2H,W,C)
    z = jnp.stack([r_even, r_odd], axis=1).reshape(2 * H, W, Cout)

    # width neighbours (edge replicated) via static sublane slices + concat
    wm = jnp.concatenate([z[:, :1, :], z[:, :W - 1, :]], axis=1)  # z[:, max(w-1,0), :]
    wp = jnp.concatenate([z[:, 1:, :], z[:, W - 1:, :]], axis=1)  # z[:, min(w+1,W-1), :]
    c_even = 0.75 * z + 0.25 * wm                                 # output cols 2w
    c_odd = 0.75 * z + 0.25 * wp                                  # output cols 2w+1
    # lane-concat: (2H, W, 2*Cout); out[:, w, b*C+c] == upsampled[:, 2w+b, c], so the
    # wrapper's reshape to (2H, 2W, Cout) is a free row-major reinterpretation.
    up = jnp.concatenate([c_even, c_odd], axis=-1)
    out_ref[0] = up.astype(out_ref.dtype)


def _group_pool_matrix(cout, num_groups, hw):
    cg = cout // num_groups
    gid = np.arange(cout) // cg
    s = (gid[:, None] == gid[None, :]).astype(np.float32) / float(cg * hw)
    return jnp.asarray(s)


def _conv_gn_relu_up(x_nhwc, wmat, b, gamma, beta, s_mat, *, upsample, eps=1e-5):
    N, H, W, Cin = x_nhwc.shape
    Cout = wmat.shape[-1]
    xpad = jnp.pad(x_nhwc, ((0, 0), (1, 1), (1, 1), (0, 0)))

    kern = functools.partial(_fused_layer_kernel, H=H, W=W, Cin=Cin, Cout=Cout,
                             eps=eps, upsample=upsample)
    if upsample:
        out_shape = jax.ShapeDtypeStruct((N, 2 * H, W, 2 * Cout), x_nhwc.dtype)
        out_spec = pl.BlockSpec((1, 2 * H, W, 2 * Cout), lambda n: (n, 0, 0, 0))
    else:
        out_shape = jax.ShapeDtypeStruct((N, H, W, Cout), x_nhwc.dtype)
        out_spec = pl.BlockSpec((1, H, W, Cout), lambda n: (n, 0, 0, 0))

    out = pl.pallas_call(
        kern,
        out_shape=out_shape,
        grid_spec=pltpu.PrefetchScalarGridSpec(
            num_scalar_prefetch=0,
            grid=(N,),
            in_specs=[
                pl.BlockSpec((1, H + 2, W + 2, Cin), lambda n: (n, 0, 0, 0)),
                pl.BlockSpec((9 * Cin, Cout), lambda n: (0, 0)),
                pl.BlockSpec((1, Cout), lambda n: (0, 0)),
                pl.BlockSpec((1, Cout), lambda n: (0, 0)),
                pl.BlockSpec((1, Cout), lambda n: (0, 0)),
                pl.BlockSpec((Cout, Cout), lambda n: (0, 0)),
            ],
            out_specs=out_spec,
        ),
        compiler_params=pltpu.CompilerParams(
            dimension_semantics=("parallel",),
            vmem_limit_bytes=32 * 1024 * 1024,
        ),
    )(xpad, wmat, b.reshape(1, Cout), gamma.reshape(1, Cout), beta.reshape(1, Cout), s_mat)

    if upsample:
        out = out.reshape(N, 2 * H, 2 * W, Cout)   # free row-major reinterpretation
    return out


# --------------------------------------------------------------------------------------
# SegLateralLayer forward (NCHW in / NCHW out, like the PyTorch module)
# --------------------------------------------------------------------------------------
def seg_lateral_layer_forward(x_nchw, params, *, num_groups, num_layers, base_scale_factor=2):
    enables_upsample = num_layers > 0
    n_layers = max(num_layers, 1)
    if enables_upsample and base_scale_factor != 2:
        # TODO(synk): shift-and-add stencil is specialized to the module default 2x upsample.
        raise NotImplementedError("fused upsample only implements base_scale_factor=2")

    x = jnp.transpose(x_nchw, (0, 2, 3, 1))            # NHWC for the fused kernel
    for idx in range(n_layers):
        w, b, gamma, beta = params[idx]                # w: (Cout, Cin, 3, 3)
        Cout, Cin = w.shape[0], w.shape[1]
        wmat = jnp.transpose(w, (2, 3, 1, 0)).reshape(9 * Cin, Cout)  # tap-major rows
        N, H, W, _ = x.shape
        s_mat = _group_pool_matrix(Cout, num_groups, H * W)
        x = _conv_gn_relu_up(x, wmat, b, gamma, beta, s_mat, upsample=enables_upsample)
    return jnp.transpose(x, (0, 3, 1, 2))              # back to NCHW


# --------------------------------------------------------------------------------------
# Pure-JAX reference (for correctness check)
# --------------------------------------------------------------------------------------
def _bilinear_matrix(n_in, scale):
    n_out = n_in * scale
    i = np.arange(n_out, dtype=np.float64)
    src = np.maximum((i + 0.5) / scale - 0.5, 0.0)
    i0 = np.floor(src).astype(np.int64)
    i1 = np.minimum(i0 + 1, n_in - 1)
    frac = (src - i0).astype(np.float32)
    A = np.zeros((n_out, n_in), np.float32)
    A[np.arange(n_out), i0] += 1.0 - frac
    A[np.arange(n_out), i1] += frac
    return jnp.asarray(A)


def reference_forward(x, params, *, num_groups, num_layers, base_scale_factor=2, eps=1e-5):
    enables_upsample = num_layers > 0
    n_layers = max(num_layers, 1)
    for idx in range(n_layers):
        w, b, gamma, beta = params[idx]
        x = jax.lax.conv_general_dilated(x, w, (1, 1), ((1, 1), (1, 1)),
                                         dimension_numbers=('NCHW', 'OIHW', 'NCHW'))
        x = x + b[None, :, None, None]
        N, C, H, W = x.shape
        G = num_groups
        xg = x.reshape(N, G, C // G, H, W)
        mean = jnp.mean(xg, axis=(2, 3, 4), keepdims=True)
        var = jnp.mean((xg - mean) ** 2, axis=(2, 3, 4), keepdims=True)
        xg = (xg - mean) / jnp.sqrt(var + eps)
        x = xg.reshape(N, C, H, W) * gamma[None, :, None, None] + beta[None, :, None, None]
        x = jnp.maximum(x, 0.0)
        if enables_upsample:
            ah = _bilinear_matrix(H, base_scale_factor)
            aw = _bilinear_matrix(W, base_scale_factor)
            x = jnp.einsum('ih,nchw,jw->ncij', ah, x, aw)
    return x


if __name__ == "__main__":
    # SegLateralLayer(in_channels=4, out_channels=8, num_groups=2, num_layers=2)
    N, Cin, H, W = 2, 4, 16, 16
    Cout, num_groups, num_layers, base_scale = 8, 2, 2, 2

    key = jax.random.PRNGKey(0)
    keys = jax.random.split(key, 1 + 4 * num_layers)
    x = jax.random.normal(keys[0], (N, Cin, H, W), jnp.float32)

    params = []
    ki = 1
    c_in = Cin
    for _ in range(num_layers):
        w = 0.1 * jax.random.normal(keys[ki], (Cout, c_in, 3, 3), jnp.float32); ki += 1
        b = 0.1 * jax.random.normal(keys[ki], (Cout,), jnp.float32); ki += 1
        gamma = 1.0 + 0.1 * jax.random.normal(keys[ki], (Cout,), jnp.float32); ki += 1
        beta = 0.1 * jax.random.normal(keys[ki], (Cout,), jnp.float32); ki += 1
        params.append((w, b, gamma, beta))
        c_in = Cout

    out = seg_lateral_layer_forward(x, params, num_groups=num_groups,
                                    num_layers=num_layers, base_scale_factor=base_scale)
    out = jax.block_until_ready(out)

    ref = reference_forward(x, params, num_groups=num_groups,
                            num_layers=num_layers, base_scale_factor=base_scale)
    ref = jax.block_until_ready(ref)

    assert out.shape == ref.shape == (N, Cout, H * base_scale ** num_layers,
                                      W * base_scale ** num_layers), out.shape
    err = float(jnp.max(jnp.abs(out - ref)))
    if not np.isfinite(err) or err > 1e-3:
        raise AssertionError(f"kernel/reference mismatch: max abs err = {err}")
    print("KERNEL_OK")
</pallas_src>

<mosaic_0001>
module attributes {stable_mosaic.version = 11 : i64} {
  func.func @_fused_layer_kernel(%arg0: i32, %arg1: memref<1x18x18x4xf32, #tpu.memory_space<vmem>>, %arg2: memref<36x8xf32, #tpu.memory_space<vmem>>, %arg3: memref<1x8xf32, #tpu.memory_space<vmem>>, %arg4: memref<1x8xf32, #tpu.memory_space<vmem>>, %arg5: memref<1x8xf32, #tpu.memory_space<vmem>>, %arg6: memref<8x8xf32, #tpu.memory_space<vmem>>, %arg7: memref<1x32x16x16xf32, #tpu.memory_space<vmem>>) attributes {dimension_semantics = [#tpu.dimension_semantics<parallel>], iteration_bounds = array<i64: 2>, scalar_prefetch = 0 : i64, scratch_operands = 0 : i64, tpu.core_type = #tpu.core_type<tc>, window_params = [{transform_indices = @transform_0, window_bounds = array<i64: 1, 18, 18, 4>}, {pipeline_mode = #tpu.pipeline_mode<synchronous>, transform_indices = @transform_1, window_bounds = array<i64: 36, 8>}, {pipeline_mode = #tpu.pipeline_mode<synchronous>, transform_indices = @transform_2, window_bounds = array<i64: 1, 8>}, {pipeline_mode = #tpu.pipeline_mode<synchronous>, transform_indices = @transform_3, window_bounds = array<i64: 1, 8>}, {pipeline_mode = #tpu.pipeline_mode<synchronous>, transform_indices = @transform_4, window_bounds = array<i64: 1, 8>}, {pipeline_mode = #tpu.pipeline_mode<synchronous>, transform_indices = @transform_5, window_bounds = array<i64: 8, 8>}, {transform_indices = @transform_6, window_bounds = array<i64: 1, 32, 16, 16>}]} {
    %c0 = arith.constant 0 : index
    %c0_0 = arith.constant 0 : index
    %c0_1 = arith.constant 0 : index
    %c0_2 = arith.constant 0 : index
    %0 = vector.load %arg1[%c0, %c0_0, %c0_1, %c0_2] : memref<1x18x18x4xf32, #tpu.memory_space<vmem>>, vector<1x18x18x4xf32>
    %1 = vector.shape_cast %0 : vector<1x18x18x4xf32> to vector<18x18x4xf32>
    %2 = vector.extract_strided_slice %1 {offsets = [0, 0, 0], sizes = [16, 16, 4], strides = [1, 1, 1]} : vector<18x18x4xf32> to vector<16x16x4xf32>
    %3 = vector.shape_cast %2 : vector<16x16x4xf32> to vector<256x4xf32>
    %4 = vector.extract_strided_slice %1 {offsets = [0, 1, 0], sizes = [16, 16, 4], strides = [1, 1, 1]} : vector<18x18x4xf32> to vector<16x16x4xf32>
    %5 = vector.shape_cast %4 : vector<16x16x4xf32> to vector<256x4xf32>
    %6 = vector.extract_strided_slice %1 {offsets = [0, 2, 0], sizes = [16, 16, 4], strides = [1, 1, 1]} : vector<18x18x4xf32> to vector<16x16x4xf32>
    %7 = vector.shape_cast %6 : vector<16x16x4xf32> to vector<256x4xf32>
    %8 = vector.extract_strided_slice %1 {offsets = [1, 0, 0], sizes = [16, 16, 4], strides = [1, 1, 1]} : vector<18x18x4xf32> to vector<16x16x4xf32>
    %9 = vector.shape_cast %8 : vector<16x16x4xf32> to vector<256x4xf32>
    %10 = vector.extract_strided_slice %1 {offsets = [1, 1, 0], sizes = [16, 16, 4], strides = [1, 1, 1]} : vector<18x18x4xf32> to vector<16x16x4xf32>
    %11 = vector.shape_cast %10 : vector<16x16x4xf32> to vector<256x4xf32>
    %12 = vector.extract_strided_slice %1 {offsets = [1, 2, 0], sizes = [16, 16, 4], strides = [1, 1, 1]} : vector<18x18x4xf32> to vector<16x16x4xf32>
    %13 = vector.shape_cast %12 : vector<16x16x4xf32> to vector<256x4xf32>
    %14 = vector.extract_strided_slice %1 {offsets = [2, 0, 0], sizes = [16, 16, 4], strides = [1, 1, 1]} : vector<18x18x4xf32> to vector<16x16x4xf32>
    %15 = vector.shape_cast %14 : vector<16x16x4xf32> to vector<256x4xf32>
    %16 = vector.extract_strided_slice %1 {offsets = [2, 1, 0], sizes = [16, 16, 4], strides = [1, 1, 1]} : vector<18x18x4xf32> to vector<16x16x4xf32>
    %17 = vector.shape_cast %16 : vector<16x16x4xf32> to vector<256x4xf32>
    %18 = vector.extract_strided_slice %1 {offsets = [2, 2, 0], sizes = [16, 16, 4], strides = [1, 1, 1]} : vector<18x18x4xf32> to vector<16x16x4xf32>
    %19 = vector.shape_cast %18 : vector<16x16x4xf32> to vector<256x4xf32>
    %20 = tpu.concatenate %3, %5, %7, %9, %11, %13, %15, %17, %19 in 1 : vector<256x4xf32>, vector<256x4xf32>, vector<256x4xf32>, vector<256x4xf32>, vector<256x4xf32>, vector<256x4xf32>, vector<256x4xf32>, vector<256x4xf32>, vector<256x4xf32> -> vector<256x36xf32>
    %c0_3 = arith.constant 0 : index
    %c0_4 = arith.constant 0 : index
    %21 = vector.load %arg2[%c0_3, %c0_4] : memref<36x8xf32, #tpu.memory_space<vmem>>, vector<36x8xf32>
    %cst = arith.constant dense<0.000000e+00> : vector<256x8xf32>
    %22 = tpu.matmul %20, %21, %cst {dimension_numbers = #tpu.dot_dimension_numbers<[1], [0], [0], [1], [0, 0, 1, 1], [], []>} : vector<256x36xf32>, vector<36x8xf32>, vector<256x8xf32> -> vector<256x8xf32>
    %c0_5 = arith.constant 0 : index
    %c0_6 = arith.constant 0 : index
    %23 = vector.load %arg3[%c0_5, %c0_6] : memref<1x8xf32, #tpu.memory_space<vmem>>, vector<1x8xf32>
    %24 = vector.broadcast %23 : vector<1x8xf32> to vector<256x8xf32>
    %25 = arith.addf %22, %24 : vector<256x8xf32>
    %cst_7 = arith.constant dense<0.000000e+00> : vector<8xf32>
    %26 = vector.multi_reduction <add>, %25, %cst_7 [0] : vector<256x8xf32> to vector<8xf32>
    %27 = vector.shape_cast %26 : vector<8xf32> to vector<1x8xf32>
    %c0_8 = arith.constant 0 : index
    %c0_9 = arith.constant 0 : index
    %28 = vector.load %arg6[%c0_8, %c0_9] : memref<8x8xf32, #tpu.memory_space<vmem>>, vector<8x8xf32>
    %cst_10 = arith.constant dense<0.000000e+00> : vector<1x8xf32>
    %29 = tpu.matmul %27, %28, %cst_10 {dimension_numbers = #tpu.dot_dimension_numbers<[1], [0], [0], [1], [0, 0, 1, 1], [], []>} : vector<1x8xf32>, vector<8x8xf32>, vector<1x8xf32> -> vector<1x8xf32>
    %30 = vector.broadcast %29 : vector<1x8xf32> to vector<256x8xf32>
    %31 = arith.subf %25, %30 : vector<256x8xf32>
    %32 = arith.mulf %31, %31 : vector<256x8xf32>
    %cst_11 = arith.constant dense<0.000000e+00> : vector<8xf32>
    %33 = vector.multi_reduction <add>, %32, %cst_11 [0] : vector<256x8xf32> to vector<8xf32>
    %34 = vector.shape_cast %33 : vector<8xf32> to vector<1x8xf32>
    %c0_12 = arith.constant 0 : index
    %c0_13 = arith.constant 0 : index
    %35 = vector.load %arg6[%c0_12, %c0_13] : memref<8x8xf32, #tpu.memory_space<vmem>>, vector<8x8xf32>
    %cst_14 = arith.constant dense<0.000000e+00> : vector<1x8xf32>
    %36 = tpu.matmul %34, %35, %cst_14 {dimension_numbers = #tpu.dot_dimension_numbers<[1], [0], [0], [1], [0, 0, 1, 1], [], []>} : vector<1x8xf32>, vector<8x8xf32>, vector<1x8xf32> -> vector<1x8xf32>
    %cst_15 = arith.constant 9.99999974E-6 : f32
    %37 = vector.broadcast %cst_15 : f32 to vector<1x8xf32>
    %38 = arith.addf %36, %37 : vector<1x8xf32>
    %39 = math.rsqrt %38 : vector<1x8xf32>
    %40 = vector.broadcast %39 : vector<1x8xf32> to vector<256x8xf32>
    %41 = arith.mulf %31, %40 : vector<256x8xf32>
    %c0_16 = arith.constant 0 : index
    %c0_17 = arith.constant 0 : index
    %42 = vector.load %arg4[%c0_16, %c0_17] : memref<1x8xf32, #tpu.memory_space<vmem>>, vector<1x8xf32>
    %43 = vector.broadcast %42 : vector<1x8xf32> to vector<256x8xf32>
    %44 = arith.mulf %41, %43 : vector<256x8xf32>
    %c0_18 = arith.constant 0 : index
    %c0_19 = arith.constant 0 : index
    %45 = vector.load %arg5[%c0_18, %c0_19] : memref<1x8xf32, #tpu.memory_space<vmem>>, vector<1x8xf32>
    %46 = vector.broadcast %45 : vector<1x8xf32> to vector<256x8xf32>
    %47 = arith.addf %44, %46 : vector<256x8xf32>
    %cst_20 = arith.constant 0.000000e+00 : f32
    %48 = vector.broadcast %cst_20 : f32 to vector<256x8xf32>
    %49 = arith.maximumf %47, %48 : vector<256x8xf32>
    %50 = vector.shape_cast %49 : vector<256x8xf32> to vector<16x16x8xf32>
    %51 = vector.extract_strided_slice %50 {offsets = [0, 0, 0], sizes = [1, 16, 8], strides = [1, 1, 1]} : vector<16x16x8xf32> to vector<1x16x8xf32>
    %52 = vector.extract_strided_slice %50 {offsets = [0, 0, 0], sizes = [15, 16, 8], strides = [1, 1, 1]} : vector<16x16x8xf32> to vector<15x16x8xf32>
    %53 = tpu.concatenate %51, %52 in 0 : vector<1x16x8xf32>, vector<15x16x8xf32> -> vector<16x16x8xf32>
    %54 = vector.extract_strided_slice %50 {offsets = [1, 0, 0], sizes = [15, 16, 8], strides = [1, 1, 1]} : vector<16x16x8xf32> to vector<15x16x8xf32>
    %55 = vector.extract_strided_slice %50 {offsets = [15, 0, 0], sizes = [1, 16, 8], strides = [1, 1, 1]} : vector<16x16x8xf32> to vector<1x16x8xf32>
    %56 = tpu.concatenate %54, %55 in 0 : vector<15x16x8xf32>, vector<1x16x8xf32> -> vector<16x16x8xf32>
    %cst_21 = arith.constant 7.500000e-01 : f32
    %57 = vector.broadcast %cst_21 : f32 to vector<16x16x8xf32>
    %58 = arith.mulf %57, %50 : vector<16x16x8xf32>
    %cst_22 = arith.constant 2.500000e-01 : f32
    %59 = vector.broadcast %cst_22 : f32 to vector<16x16x8xf32>
    %60 = arith.mulf %59, %53 : vector<16x16x8xf32>
    %61 = arith.addf %58, %60 : vector<16x16x8xf32>
    %cst_23 = arith.constant 7.500000e-01 : f32
    %62 = vector.broadcast %cst_23 : f32 to vector<16x16x8xf32>
    %63 = arith.mulf %62, %50 : vector<16x16x8xf32>
    %cst_24 = arith.constant 2.500000e-01 : f32
    %64 = vector.broadcast %cst_24 : f32 to vector<16x16x8xf32>
    %65 = arith.mulf %64, %56 : vector<16x16x8xf32>
    %66 = arith.addf %63, %65 : vector<16x16x8xf32>
    %67 = vector.shape_cast %61 : vector<16x16x8xf32> to vector<16x1x16x8xf32>
    %68 = vector.shape_cast %66 : vector<16x16x8xf32> to vector<16x1x16x8xf32>
    %69 = tpu.concatenate %67, %68 in 1 : vector<16x1x16x8xf32>, vector<16x1x16x8xf32> -> vector<16x2x16x8xf32>
    %70 = vector.shape_cast %69 : vector<16x2x16x8xf32> to vector<32x16x8xf32>
    %71 = vector.extract_strided_slice %70 {offsets = [0, 0, 0], sizes = [32, 1, 8], strides = [1, 1, 1]} : vector<32x16x8xf32> to vector<32x1x8xf32>
    %72 = vector.extract_strided_slice %70 {offsets = [0, 0, 0], sizes = [32, 15, 8], strides = [1, 1, 1]} : vector<32x16x8xf32> to vector<32x15x8xf32>
    %73 = tpu.concatenate %71, %72 in 1 : vector<32x1x8xf32>, vector<32x15x8xf32> -> vector<32x16x8xf32>
    %74 = vector.extract_strided_slice %70 {offsets = [0, 1, 0], sizes = [32, 15, 8], strides = [1, 1, 1]} : vector<32x16x8xf32> to vector<32x15x8xf32>
    %75 = vector.extract_strided_slice %70 {offsets = [0, 15, 0], sizes = [32, 1, 8], strides = [1, 1, 1]} : vector<32x16x8xf32> to vector<32x1x8xf32>
    %76 = tpu.concatenate %74, %75 in 1 : vector<32x15x8xf32>, vector<32x1x8xf32> -> vector<32x16x8xf32>
    %cst_25 = arith.constant 7.500000e-01 : f32
    %77 = vector.broadcast %cst_25 : f32 to vector<32x16x8xf32>
    %78 = arith.mulf %77, %70 : vector<32x16x8xf32>
    %cst_26 = arith.constant 2.500000e-01 : f32
    %79 = vector.broadcast %cst_26 : f32 to vector<32x16x8xf32>
    %80 = arith.mulf %79, %73 : vector<32x16x8xf32>
    %81 = arith.addf %78, %80 : vector<32x16x8xf32>
    %cst_27 = arith.constant 7.500000e-01 : f32
    %82 = vector.broadcast %cst_27 : f32 to vector<32x16x8xf32>
    %83 = arith.mulf %82, %70 : vector<32x16x8xf32>
    %cst_28 = arith.constant 2.500000e-01 : f32
    %84 = vector.broadcast %cst_28 : f32 to vector<32x16x8xf32>
    %85 = arith.mulf %84, %76 : vector<32x16x8xf32>
    %86 = arith.addf %83, %85 : vector<32x16x8xf32>
    %87 = tpu.concatenate %81, %86 in 2 : vector<32x16x8xf32>, vector<32x16x8xf32> -> vector<32x16x16xf32>
    %c0_29 = arith.constant 0 : index
    %c0_30 = arith.constant 0 : index
    %c0_31 = arith.constant 0 : index
    %c0_32 = arith.constant 0 : index
    %88 = vector.load %arg7[%c0_29, %c0_30, %c0_31, %c0_32] : memref<1x32x16x16xf32, #tpu.memory_space<vmem>>, vector<1x32x16x16xf32>
    %89 = vector.shape_cast %88 : vector<1x32x16x16xf32> to vector<32x16x16xf32>
    %90 = vector.shape_cast %87 : vector<32x16x16xf32> to vector<1x32x16x16xf32>
    tpu.vector_store %arg7[%c0_29, %c0_30, %c0_31, %c0_32], %90 {strides = array<i32>} : memref<1x32x16x16xf32, #tpu.memory_space<vmem>>, vector<1x32x16x16xf32>,
    return
  }
  func.func @transform_0(%arg0: i32) -> (i32, i32, i32, i32) {
    %c0_i32 = arith.constant 0 : i32
    %c0_i32_0 = arith.constant 0 : i32
    %c0_i32_1 = arith.constant 0 : i32
    %c0_i32_2 = arith.constant 0 : i32
    return %arg0, %c0_i32, %c0_i32_0, %c0_i32_1 : i32, i32, i32, i32
  }
  func.func @transform_1(%arg0: i32) -> (i32, i32) {
    %c0_i32 = arith.constant 0 : i32
    %c0_i32_0 = arith.constant 0 : i32
    %c0_i32_1 = arith.constant 0 : i32
    return %c0_i32, %c0_i32_0 : i32, i32
  }
  func.func @transform_2(%arg0: i32) -> (i32, i32) {
    %c0_i32 = arith.constant 0 : i32
    %c0_i32_0 = arith.constant 0 : i32
    %c0_i32_1 = arith.constant 0 : i32
    return %c0_i32, %c0_i32_0 : i32, i32
  }
  func.func @transform_3(%arg0: i32) -> (i32, i32) {
    %c0_i32 = arith.constant 0 : i32
    %c0_i32_0 = arith.constant 0 : i32
    %c0_i32_1 = arith.constant 0 : i32
    return %c0_i32, %c0_i32_0 : i32, i32
  }
  func.func @transform_4(%arg0: i32) -> (i32, i32) {
    %c0_i32 = arith.constant 0 : i32
    %c0_i32_0 = arith.constant 0 : i32
    %c0_i32_1 = arith.constant 0 : i32
    return %c0_i32, %c0_i32_0 : i32, i32
  }
  func.func @transform_5(%arg0: i32) -> (i32, i32) {
    %c0_i32 = arith.constant 0 : i32
    %c0_i32_0 = arith.constant 0 : i32
    %c0_i32_1 = arith.constant 0 : i32
    return %c0_i32, %c0_i32_0 : i32, i32
  }
  func.func @transform_6(%arg0: i32) -> (i32, i32, i32, i32) {
    %c0_i32 = arith.constant 0 : i32
    %c0_i32_0 = arith.constant 0 : i32
    %c0_i32_1 = arith.constant 0 : i32
    %c0_i32_2 = arith.constant 0 : i32
    return %arg0, %c0_i32, %c0_i32_0, %c0_i32_1 : i32, i32, i32, i32
  }
}

</mosaic_0001>

<llo_original>
// kernel: tpu_custom_call.1
$region0: #{tpu_custom_call.1}
  #allocation0 [shape = 'u32[]', space=smem, size = 0x4, offset = 0x4, fixed_abs, tag = 'smem constant byte address 0x4 - core index']
  #allocation1 [shape = 'u32[144,128]{1,0:T(1,128)}', space=vmem, size = 0x12000, scoped, tag = 'internal scratch']
  %s0 = inlined_call_operand.vmem [shape: f32[2,18,18,4], index: 0, kind: input, shape index: {}]
  %s1 = inlined_call_operand.vmem [shape: f32[36,8], index: 1, kind: input, shape index: {}]
  %s2 = inlined_call_operand.vmem [shape: f32[1,8], index: 2, kind: input, shape index: {}]
  %s3 = inlined_call_operand.vmem [shape: f32[1,8], index: 3, kind: input, shape index: {}]
  %s4 = inlined_call_operand.vmem [shape: f32[1,8], index: 4, kind: input, shape index: {}]
  %s5 = inlined_call_operand.vmem [shape: f32[8,8], index: 5, kind: input, shape index: {}]
  %s6 = inlined_call_operand.vmem [shape: f32[2,32,16,16], index: 6, kind: output, shape index: {}]
  %s7 = sld [smem:[#allocation0]]
  $region57: #{tpu_custom_call.1} parent=0
    _
  %s9 = ssub.s32 1, %s7
  %s10 = scalar_select 0, %s9, %s7
  loop: start=0, step=1, limit=4
  $region2: #{tpu_custom_call.1} parent=0 // loop_pre_header
    _
  $region3: #{tpu_custom_call.1} parent=0 // loop_header
    %s12 = sphi 0, %s16
    %p13 = scmp.ge.s32.totalorder %s12, 4
    %s22 = sphi 0, %s24
    %s25 = sphi 0, %s22
    %s26 = sphi 0, %s25
    %s42 = sphi 0, %s26
    %s46 = sphi 0, %s46
    %s48 = sphi 0, %s46
    %s49 = sphi 0, %s48
    %s63 = sphi 0, %s49
    %s67 = sphi 0, %s67
    %s69 = sphi 0, %s67
    %s70 = sphi 0, %s69
    %s84 = sphi 0, %s70
    %s88 = sphi 0, %s88
    %s90 = sphi 0, %s88
    %s91 = sphi 0, %s90
    %s105 = sphi 0, %s91
    %s109 = sphi 0, %s109
    %s111 = sphi 0, %s109
    %s112 = sphi 0, %s111
    %s126 = sphi 0, %s112
    %s130 = sphi 0, %s130
    %s132 = sphi 0, %s130
    %s133 = sphi 0, %s132
    %s147 = sphi 0, %s133
    %s153 = sphi 0, %s155
    %s156 = sphi 0, %s153
    %s157 = sphi 0, %s156
    %s173 = sphi 0, %s157
  $region4: #{tpu_custom_call.1} parent=0 // loop_header_branch
    %15 = sbr.rel (%p13) target = $region8
  $region5: #{tpu_custom_call.1} parent=0 // loop_body
    %s17 = ssub.s32 %s12, 1
    %s18 = ssub.s32 %s12, 2
    %s19 = sadd.s32 %s12, 1
    %s20 = ssub.s32 %s12, %s19
    %p21 = scmp.eq.s32.totalorder %s20, 0
    %s23 = sadd.s32 %s22, 1
    %s24 = scalar_select %p21, %s22, %s23
    %p27 = pneg %p21
    %p28 = scmp.eq.s32.totalorder %s12, 1
    %p29 = por %p27, %p28
    %p30 = scmp.ne.s32.totalorder %s22, %s25
    %p31 = scmp.eq.s32.totalorder %s12, 0
    %p32 = por %p30, %p31
    %p33 = scmp.ne.s32.totalorder %s22, %s25
    %p34 = scmp.eq.s32.totalorder %s17, 1
    %p35 = por %p33, %p34
    %p36 = scmp.ne.s32.totalorder %s25, %s26
    %p37 = scmp.eq.s32.totalorder %s17, 0
    %p38 = por %p36, %p37
    %p39 = scmp.ne.s32.totalorder %s25, %s26
    %p40 = scmp.eq.s32.totalorder %s18, 1
    %p41 = por %p39, %p40
    %p43 = scmp.ne.s32.totalorder %s26, %s42
    %p44 = scmp.eq.s32.totalorder %s18, 0
    %p45 = por %p43, %p44
    %s47 = sadd.s32 %s46, 1
    %p50 = scmp.eq.s32.totalorder %s12, 1
    %p51 = scmp.ne.s32.totalorder %s46, %s48
    %p52 = scmp.eq.s32.totalorder %s12, 0
    %p53 = por %p51, %p52
    %p54 = scmp.ne.s32.totalorder %s46, %s48
    %p55 = scmp.eq.s32.totalorder %s17, 1
    %p56 = por %p54, %p55
    %p57 = scmp.ne.s32.totalorder %s48, %s49
    %p58 = scmp.eq.s32.totalorder %s17, 0
    %p59 = por %p57, %p58
    %p60 = scmp.ne.s32.totalorder %s48, %s49
    %p61 = scmp.eq.s32.totalorder %s18, 1
    %p62 = por %p60, %p61
    %p64 = scmp.ne.s32.totalorder %s49, %s63
    %p65 = scmp.eq.s32.totalorder %s18, 0
    %p66 = por %p64, %p65
    %s68 = sadd.s32 %s67, 1
    %p71 = scmp.eq.s32.totalorder %s12, 1
    %p72 = scmp.ne.s32.totalorder %s67, %s69
    %p73 = scmp.eq.s32.totalorder %s12, 0
    %p74 = por %p72, %p73
    %p75 = scmp.ne.s32.totalorder %s67, %s69
    %p76 = scmp.eq.s32.totalorder %s17, 1
    %p77 = por %p75, %p76
    %p78 = scmp.ne.s32.totalorder %s69, %s70
    %p79 = scmp.eq.s32.totalorder %s17, 0
    %p80 = por %p78, %p79
    %p81 = scmp.ne.s32.totalorder %s69, %s70
    %p82 = scmp.eq.s32.totalorder %s18, 1
    %p83 = por %p81, %p82
    %p85 = scmp.ne.s32.totalorder %s70, %s84
    %p86 = scmp.eq.s32.totalorder %s18, 0
    %p87 = por %p85, %p86
    %s89 = sadd.s32 %s88, 1
    %p92 = scmp.eq.s32.totalorder %s12, 1
    %p93 = scmp.ne.s32.totalorder %s88, %s90
    %p94 = scmp.eq.s32.totalorder %s12, 0
    %p95 = por %p93, %p94
    %p96 = scmp.ne.s32.totalorder %s88, %s90
    %p97 = scmp.eq.s32.totalorder %s17, 1
    %p98 = por %p96, %p97
    %p99 = scmp.ne.s32.totalorder %s90, %s91
    %p100 = scmp.eq.s32.totalorder %s17, 0
    %p101 = por %p99, %p100
    %p102 = scmp.ne.s32.totalorder %s90, %s91
    %p103 = scmp.eq.s32.totalorder %s18, 1
    %p104 = por %p102, %p103
    %p106 = scmp.ne.s32.totalorder %s91, %s105
    %p107 = scmp.eq.s32.totalorder %s18, 0
    %p108 = por %p106, %p107
    %s110 = sadd.s32 %s109, 1
    %p113 = scmp.eq.s32.totalorder %s12, 1
    %p114 = scmp.ne.s32.totalorder %s109, %s111
    %p115 = scmp.eq.s32.totalorder %s12, 0
    %p116 = por %p114, %p115
    %p117 = scmp.ne.s32.totalorder %s109, %s111
    %p118 = scmp.eq.s32.totalorder %s17, 1
    %p119 = por %p117, %p118
    %p120 = scmp.ne.s32.totalorder %s111, %s112
    %p121 = scmp.eq.s32.totalorder %s17, 0
    %p122 = por %p120, %p121
    %p123 = scmp.ne.s32.totalorder %s111, %s112
    %p124 = scmp.eq.s32.totalorder %s18, 1
    %p125 = por %p123, %p124
    %p127 = scmp.ne.s32.totalorder %s112, %s126
    %p128 = scmp.eq.s32.totalorder %s18, 0
    %p129 = por %p127, %p128
    %s131 = sadd.s32 %s130, 1
    %p134 = scmp.eq.s32.totalorder %s12, 1
    %p135 = scmp.ne.s32.totalorder %s130, %s132
    %p136 = scmp.eq.s32.totalorder %s12, 0
    %p137 = por %p135, %p136
    %p138 = scmp.ne.s32.totalorder %s130, %s132
    %p139 = scmp.eq.s32.totalorder %s17, 1
    %p140 = por %p138, %p139
    %p141 = scmp.ne.s32.totalorder %s132, %s133
    %p142 = scmp.eq.s32.totalorder %s17, 0
    %p143 = por %p141, %p142
    %p144 = scmp.ne.s32.totalorder %s132, %s133
    %p145 = scmp.eq.s32.totalorder %s18, 1
    %p146 = por %p144, %p145
    %p148 = scmp.ne.s32.totalorder %s133, %s147
    %p149 = scmp.eq.s32.totalorder %s18, 0
    %p150 = por %p148, %p149
    %s151 = ssub.s32 %s12, %s19
    %p152 = scmp.eq.s32.totalorder %s151, 0
    %s154 = sadd.s32 %s153, 1
    %s155 = scalar_select %p152, %s153, %s154
    %p158 = pneg %p152
    %p159 = scmp.eq.s32.totalorder %s12, 1
    %p160 = por %p158, %p159
    %p161 = scmp.ne.s32.totalorder %s153, %s156
    %p162 = scmp.eq.s32.totalorder %s12, 0
    %p163 = por %p161, %p162
    %p164 = scmp.ne.s32.totalorder %s153, %s156
    %p165 = scmp.eq.s32.totalorder %s17, 1
    %p166 = por %p164, %p165
    %p167 = scmp.ne.s32.totalorder %s156, %s157
    %p168 = scmp.eq.s32.totalorder %s17, 0
    %p169 = por %p167, %p168
    %p170 = scmp.ne.s32.totalorder %s156, %s157
    %p171 = scmp.eq.s32.totalorder %s18, 1
    %p172 = por %p170, %p171
    %p174 = scmp.ne.s32.totalorder %s157, %s173
    %p175 = scmp.eq.s32.totalorder %s18, 0
    %p176 = por %p174, %p175
    %p177 = scmp.le.s32.totalorder 1, %s12
    %p178 = scmp.lt.s32.totalorder %s12, 3
    %p179 = pnand %p177, %p178
    %p180 = pneg %p179
    // Predicated region
    $region9: #{tpu_custom_call.1} parent=5 // pred_check
      _
    $region10: #{tpu_custom_call.1} parent=5 // pred_check_branch
      %182 = sbr.rel (%p179) target = $region12
    $region11: #{tpu_custom_call.1} parent=5 // pred_region
      %s183 = ssub.s32 %s12, 1
      // Predicated region
      $region13: #{tpu_custom_call.1} parent=11 // pred_check
        %p184 = pneg %p59
      $region14: #{tpu_custom_call.1} parent=11 // pred_check_branch
        %186 = sbr.rel (%p184) target = $region16
      $region15: #{tpu_custom_call.1} parent=11 // pred_region
        _
      $region16: #{tpu_custom_call.1} parent=11 // pred_fallthru
        _
      // Predicated region
      $region17: #{tpu_custom_call.1} parent=11 // pred_check
        %p187 = pneg %p80
      $region18: #{tpu_custom_call.1} parent=11 // pred_check_branch
        %189 = sbr.rel (%p187) target = $region20
      $region19: #{tpu_custom_call.1} parent=11 // pred_region
        _
      $region20: #{tpu_custom_call.1} parent=11 // pred_fallthru
        _
      // Predicated region
      $region21: #{tpu_custom_call.1} parent=11 // pred_check
        %p190 = pneg %p101
      $region22: #{tpu_custom_call.1} parent=11 // pred_check_branch
        %192 = sbr.rel (%p190) target = $region24
      $region23: #{tpu_custom_call.1} parent=11 // pred_region
        _
      $region24: #{tpu_custom_call.1} parent=11 // pred_fallthru
        _
      // Predicated region
      $region25: #{tpu_custom_call.1} parent=11 // pred_check
        %p193 = pneg %p122
      $region26: #{tpu_custom_call.1} parent=11 // pred_check_branch
        %195 = sbr.rel (%p193) target = $region28
      $region27: #{tpu_custom_call.1} parent=11 // pred_region
        _
      $region28: #{tpu_custom_call.1} parent=11 // pred_fallthru
        _
      // Predicated region
      $region29: #{tpu_custom_call.1} parent=11 // pred_check
        %p196 = pneg %p143
      $region30: #{tpu_custom_call.1} parent=11 // pred_check_branch
        %198 = sbr.rel (%p196) target = $region32
      $region31: #{tpu_custom_call.1} parent=11 // pred_region
        _
      $region32: #{tpu_custom_call.1} parent=11 // pred_fallthru
        _
    $region12: #{tpu_custom_call.1} parent=5 // pred_fallthru
      _
    %p199 = scmp.lt.s32.totalorder %s12, 2
    // Predicated region
    $region33: #{tpu_custom_call.1} parent=5 // pred_check
      %p200 = pneg %p199
    $region34: #{tpu_custom_call.1} parent=5 // pred_check_branch
      %202 = sbr.rel (%p200) target = $region36
    $region35: #{tpu_custom_call.1} parent=5 // pred_region
      // Predicated region
      $region37: #{tpu_custom_call.1} parent=35 // pred_check
        %p203 = pneg %p32
      $region38: #{tpu_custom_call.1} parent=35 // pred_check_branch
        %205 = sbr.rel (%p203) target = $region40
      $region39: #{tpu_custom_call.1} parent=35 // pred_region
        %p206 = scmp.lt.s32.totalorder %s12, 1
        %s207 = scalar_select %p206, %s12, 1
        %s208 = smul.addr %s207, 54
        %s209 = smul.addr %s208, 8
        %s210 = scalar_lea.vmem %s0, %s209
      $region40: #{tpu_custom_call.1} parent=35 // pred_fallthru
        _
    $region36: #{tpu_custom_call.1} parent=5 // pred_fallthru
      _
    %p211 = scmp.le.s32.totalorder 1, %s12
    %p212 = scmp.lt.s32.totalorder %s12, 3
    %p213 = pnand %p211, %p212
    %p214 = pneg %p213
    // Predicated region
    $region41: #{tpu_custom_call.1} parent=5 // pred_check
      _
    $region42: #{tpu_custom_call.1} parent=5 // pred_check_branch
      %216 = sbr.rel (%p213) target = $region44
    $region43: #{tpu_custom_call.1} parent=5 // pred_region
      %s217 = ssub.s32 %s12, 1
      %p218 = scmp.lt.s32.totalorder %s17, 1
      %s219 = scalar_select %p218, %s17, 1
      %s220 = smul.addr %s219, 54
      %s221 = smul.addr %s220, 8
      %s222 = scalar_lea.vmem %s0, %s221
      %p223 = pneg %p38
      %p224 = pneg %p35
      %p225 = pneg %p59
      %p226 = pneg %p56
      %p227 = pneg %p80
      %p228 = pneg %p77
      %p229 = pneg %p101
      %p230 = pneg %p98
      %p231 = pneg %p122
      %p232 = pneg %p119
      %p233 = pneg %p143
      %p234 = pneg %p140
      %p235 = pneg %p169
      %p236 = pneg %p166
      %p237 = scmp.lt.s32.totalorder %s17, 1
      %s238 = scalar_select %p237, %s17, 1
      %s239 = smul.addr %s238, 64
      %s240 = smul.addr %s239, 8
      %s241 = scalar_lea.vmem %s6, %s240
      %p242 = scmp.lt.s32.totalorder %s17, 1
      %s243 = scalar_select %p242, %s17, 1
      %s244 = smul.addr %s243, 54
      %s245 = smul.addr %s244, 8
      %s246 = scalar_lea.vmem %s0, %s245
      %p247 = scmp.lt.s32.totalorder %s17, 1
      %s248 = scalar_select %p247, %s17, 1
      %s249 = smul.addr %s248, 64
      %s250 = smul.addr %s249, 8
      %s251 = scalar_lea.vmem %s6, %s250
      %v252 = vld [vmem:[%s246] sm:$0xff]
      %v253 = vld [vmem:[%s246 + $0x8] sm:$0xff]
      %v254 = vld [vmem:[%s246 + $0x10] sm:$0x3]
      %v255 = vld [vmem:[%s246 + $0x18] sm:$0xff]
      %v256 = vld [vmem:[%s246 + $0x20] sm:$0xff]
      %v257 = vld [vmem:[%s246 + $0x28] sm:$0x3]
      %v258 = vld [vmem:[%s246 + $0x30] sm:$0xff]
      %v259 = vld [vmem:[%s246 + $0x38] sm:$0xff]
      %v260 = vld [vmem:[%s246 + $0x40] sm:$0x3]
      %v261 = vld [vmem:[%s246 + $0x48] sm:$0xff]
      %v262 = vld [vmem:[%s246 + $0x50] sm:$0xff]
      %v263 = vld [vmem:[%s246 + $0x58] sm:$0x3]
      %v264 = vld [vmem:[%s246 + $0x60] sm:$0xff]
      %v265 = vld [vmem:[%s246 + $0x68] sm:$0xff]
      %v266 = vld [vmem:[%s246 + $0x70] sm:$0x3]
      %v267 = vld [vmem:[%s246 + $0x78] sm:$0xff]
      %v268 = vld [vmem:[%s246 + $0x80] sm:$0xff]
      %v269 = vld [vmem:[%s246 + $0x88] sm:$0x3]
      %v270 = vld [vmem:[%s246 + $0x90] sm:$0xff]
      %v271 = vld [vmem:[%s246 + $0x98] sm:$0xff]
      %v272 = vld [vmem:[%s246 + $0xa0] sm:$0x3]
      %v273 = vld [vmem:[%s246 + $0xa8] sm:$0xff]
      %v274 = vld [vmem:[%s246 + $0xb0] sm:$0xff]
      %v275 = vld [vmem:[%s246 + $0xb8] sm:$0x3]
      %v276 = vld [vmem:[%s246 + $0xc0] sm:$0xff]
      %v277 = vld [vmem:[%s246 + $0xc8] sm:$0xff]
      %v278 = vld [vmem:[%s246 + $0xd0] sm:$0x3]
      %v279 = vld [vmem:[%s246 + $0xd8] sm:$0xff]
      %v280 = vld [vmem:[%s246 + $0xe0] sm:$0xff]
      %v281 = vld [vmem:[%s246 + $0xe8] sm:$0x3]
      %v282 = vld [vmem:[%s246 + $0xf0] sm:$0xff]
      %v283 = vld [vmem:[%s246 + $0xf8] sm:$0xff]
      %v284 = vld [vmem:[%s246 + $0x100] sm:$0x3]
      %v285 = vld [vmem:[%s246 + $0x108] sm:$0xff]
      %v286 = vld [vmem:[%s246 + $0x110] sm:$0xff]
      %v287 = vld [vmem:[%s246 + $0x118] sm:$0x3]
      %v288 = vld [vmem:[%s246 + $0x120] sm:$0xff]
      %v289 = vld [vmem:[%s246 + $0x128] sm:$0xff]
      %v290 = vld [vmem:[%s246 + $0x130] sm:$0x3]
      %v291 = vld [vmem:[%s246 + $0x138] sm:$0xff]
      %v292 = vld [vmem:[%s246 + $0x140] sm:$0xff]
      %v293 = vld [vmem:[%s246 + $0x148] sm:$0x3]
      %v294 = vld [vmem:[%s246 + $0x150] sm:$0xff]
      %v295 = vld [vmem:[%s246 + $0x158] sm:$0xff]
      %v296 = vld [vmem:[%s246 + $0x160] sm:$0x3]
      %v297 = vld [vmem:[%s246 + $0x168] sm:$0xff]
      %v298 = vld [vmem:[%s246 + $0x170] sm:$0xff]
      %v299 = vld [vmem:[%s246 + $0x178] sm:$0x3]
      %v300 = vld [vmem:[%s246 + $0x180] sm:$0xff]
      %v301 = vld [vmem:[%s246 + $0x188] sm:$0xff]
      %v302 = vld [vmem:[%s246 + $0x190] sm:$0x3]
      %v303 = vld [vmem:[%s246 + $0x198] sm:$0xff]
      %v304 = vld [vmem:[%s246 + $0x1a0] sm:$0xff]
      %v305 = vld [vmem:[%s246 + $0x1a8] sm:$0x3]
      %vm354 = vcmask 1046528
      %v355 = vrot.slane %v252, 1
      %v356 = vrot.slane %v253, 1
      %v357 = vsel %vm354, %v355, %v356
      %v358 = vrot.slane %v254, 1
      %v359 = vsel %vm354, %v356, %v358
      %v360 = vrot.slane %v255, 1
      %v361 = vrot.slane %v256, 1
      %v362 = vsel %vm354, %v360, %v361
      %v363 = vrot.slane %v257, 1
      %v364 = vsel %vm354, %v361, %v363
      %v365 = vrot.slane %v258, 1
      %v366 = vrot.slane %v259, 1
      %v367 = vsel %vm354, %v365, %v366
      %v368 = vrot.slane %v260, 1
      %v369 = vsel %vm354, %v366, %v368
      %v370 = vrot.slane %v261, 1
      %v371 = vrot.slane %v262, 1
      %v372 = vsel %vm354, %v370, %v371
      %v373 = vrot.slane %v263, 1
      %v374 = vsel %vm354, %v371, %v373
      %v375 = vrot.slane %v264, 1
      %v376 = vrot.slane %v265, 1
      %v377 = vsel %vm354, %v375, %v376
      %v378 = vrot.slane %v266, 1
      %v379 = vsel %vm354, %v376, %v378
      %v380 = vrot.slane %v267, 1
      %v381 = vrot.slane %v268, 1
      %v382 = vsel %vm354, %v380, %v381
      %v383 = vrot.slane %v269, 1
      %v384 = vsel %vm354, %v381, %v383
      %v385 = vrot.slane %v270, 1
      %v386 = vrot.slane %v271, 1
      %v387 = vsel %vm354, %v385, %v386
      %v388 = vrot.slane %v272, 1
      %v389 = vsel %vm354, %v386, %v388
      %v390 = vrot.slane %v273, 1
      %v391 = vrot.slane %v274, 1
      %v392 = vsel %vm354, %v390, %v391
      %v393 = vrot.slane %v275, 1
      %v394 = vsel %vm354, %v391, %v393
      %v395 = vrot.slane %v276, 1
      %v396 = vrot.slane %v277, 1
      %v397 = vsel %vm354, %v395, %v396
      %v398 = vrot.slane %v278, 1
      %v399 = vsel %vm354, %v396, %v398
      %v400 = vrot.slane %v279, 1
      %v401 = vrot.slane %v280, 1
      %v402 = vsel %vm354, %v400, %v401
      %v403 = vrot.slane %v281, 1
      %v404 = vsel %vm354, %v401, %v403
      %v405 = vrot.slane %v282, 1
      %v406 = vrot.slane %v283, 1
      %v407 = vsel %vm354, %v405, %v406
      %v408 = vrot.slane %v284, 1
      %v409 = vsel %vm354, %v406, %v408
      %v410 = vrot.slane %v285, 1
      %v411 = vrot.slane %v286, 1
      %v412 = vsel %vm354, %v410, %v411
      %v413 = vrot.slane %v287, 1
      %v414 = vsel %vm354, %v411, %v413
      %v415 = vrot.slane %v288, 1
      %v416 = vrot.slane %v289, 1
      %v417 = vsel %vm354, %v415, %v416
      %v418 = vrot.slane %v290, 1
      %v419 = vsel %vm354, %v416, %v418
      %v420 = vrot.slane %v291, 1
      %v421 = vrot.slane %v292, 1
      %v422 = vsel %vm354, %v420, %v421
      %v423 = vrot.slane %v293, 1
      %v424 = vsel %vm354, %v421, %v423
      %v425 = vrot.slane %v294, 1
      %v426 = vrot.slane %v295, 1
      %v427 = vsel %vm354, %v425, %v426
      %v428 = vrot.slane %v296, 1
      %v429 = vsel %vm354, %v426, %v428
      %v430 = vrot.slane %v297, 1
      %v431 = vrot.slane %v298, 1
      %v432 = vsel %vm354, %v430, %v431
      %v433 = vrot.slane %v299, 1
      %v434 = vsel %vm354, %v431, %v433
      %vm435 = vcmask 1045504
      %v436 = vrot.slane %v252, 2
      %v437 = vrot.slane %v253, 2
      %v438 = vsel %vm435, %v436, %v437
      %v439 = vrot.slane %v254, 2
      %v440 = vsel %vm435, %v437, %v439
      %v441 = vrot.slane %v255, 2
      %v442 = vrot.slane %v256, 2
      %v443 = vsel %vm435, %v441, %v442
      %v444 = vrot.slane %v257, 2
      %v445 = vsel %vm435, %v442, %v444
      %v446 = vrot.slane %v258, 2
      %v447 = vrot.slane %v259, 2
      %v448 = vsel %vm435, %v446, %v447
      %v449 = vrot.slane %v260, 2
      %v450 = vsel %vm435, %v447, %v449
      %v451 = vrot.slane %v261, 2
      %v452 = vrot.slane %v262, 2
      %v453 = vsel %vm435, %v451, %v452
      %v454 = vrot.slane %v263, 2
      %v455 = vsel %vm435, %v452, %v454
      %v456 = vrot.slane %v264, 2
      %v457 = vrot.slane %v265, 2
      %v458 = vsel %vm435, %v456, %v457
      %v459 = vrot.slane %v266, 2
      %v460 = vsel %vm435, %v457, %v459
      %v461 = vrot.slane %v267, 2
      %v462 = vrot.slane %v268, 2
      %v463 = vsel %vm435, %v461, %v462
      %v464 = vrot.slane %v269, 2
      %v465 = vsel %vm435, %v462, %v464
      %v466 = vrot.slane %v270, 2
      %v467 = vrot.slane %v271, 2
      %v468 = vsel %vm435, %v466, %v467
      %v469 = vrot.slane %v272, 2
      %v470 = vsel %vm435, %v467, %v469
      %v471 = vrot.slane %v273, 2
      %v472 = vrot.slane %v274, 2
      %v473 = vsel %vm435, %v471, %v472
      %v474 = vrot.slane %v275, 2
      %v475 = vsel %vm435, %v472, %v474
      %v476 = vrot.slane %v276, 2
      %v477 = vrot.slane %v277, 2
      %v478 = vsel %vm435, %v476, %v477
      %v479 = vrot.slane %v278, 2
      %v480 = vsel %vm435, %v477, %v479
      %v481 = vrot.slane %v279, 2
      %v482 = vrot.slane %v280, 2
      %v483 = vsel %vm435, %v481, %v482
      %v484 = vrot.slane %v281, 2
      %v485 = vsel %vm435, %v482, %v484
      %v486 = vrot.slane %v282, 2
      %v487 = vrot.slane %v283, 2
      %v488 = vsel %vm435, %v486, %v487
      %v489 = vrot.slane %v284, 2
      %v490 = vsel %vm435, %v487, %v489
      %v491 = vrot.slane %v285, 2
      %v492 = vrot.slane %v286, 2
      %v493 = vsel %vm435, %v491, %v492
      %v494 = vrot.slane %v287, 2
      %v495 = vsel %vm435, %v492, %v494
      %v496 = vrot.slane %v288, 2
      %v497 = vrot.slane %v289, 2
      %v498 = vsel %vm435, %v496, %v497
      %v499 = vrot.slane %v290, 2
      %v500 = vsel %vm435, %v497, %v499
      %v501 = vrot.slane %v291, 2
      %v502 = vrot.slane %v292, 2
      %v503 = vsel %vm435, %v501, %v502
      %v504 = vrot.slane %v293, 2
      %v505 = vsel %vm435, %v502, %v504
      %v506 = vrot.slane %v294, 2
      %v507 = vrot.slane %v295, 2
      %v508 = vsel %vm435, %v506, %v507
      %v509 = vrot.slane %v296, 2
      %v510 = vsel %vm435, %v507, %v509
      %v511 = vrot.slane %v297, 2
      %v512 = vrot.slane %v298, 2
      %v513 = vsel %vm435, %v511, %v512
      %v514 = vrot.slane %v299, 2
      %v515 = vsel %vm435, %v512, %v514
      %v519 = vrot.slane %v300, 1
      %v520 = vrot.slane %v301, 1
      %v521 = vsel %vm354, %v519, %v520
      %v522 = vrot.slane %v302, 1
      %v523 = vsel %vm354, %v520, %v522
      %v524 = vrot.slane %v300, 2
      %v525 = vrot.slane %v301, 2
      %v526 = vsel %vm435, %v524, %v525
      %v527 = vrot.slane %v302, 2
      %v528 = vsel %vm435, %v525, %v527
      %v532 = vrot.slane %v303, 1
      %v533 = vrot.slane %v304, 1
      %v534 = vsel %vm354, %v532, %v533
      %v535 = vrot.slane %v305, 1
      %v536 = vsel %vm354, %v533, %v535
      %v537 = vrot.slane %v303, 2
      %v538 = vrot.slane %v304, 2
      %v539 = vsel %vm435, %v537, %v538
      %v540 = vrot.slane %v305, 2
      %v541 = vsel %vm435, %v538, %v540
      %542 = vrot.lane.b32.xlu0 %v357, 4
      %v543 = vpop.permute.xlu0 %542
      %544 = vrot.lane.b32.xlu0 %v359, 4
      %v545 = vpop.permute.xlu0 %544
      %546 = vrot.lane.b32.xlu0 %v362, 4
      %v547 = vpop.permute.xlu0 %546
      %548 = vrot.lane.b32.xlu0 %v364, 4
      %v549 = vpop.permute.xlu0 %548
      %550 = vrot.lane.b32.xlu0 %v367, 4
      %v551 = vpop.permute.xlu0 %550
      %552 = vrot.lane.b32.xlu0 %v369, 4
      %v553 = vpop.permute.xlu0 %552
      %554 = vrot.lane.b32.xlu0 %v372, 4
      %v555 = vpop.permute.xlu0 %554
      %556 = vrot.lane.b32.xlu0 %v374, 4
      %v557 = vpop.permute.xlu0 %556
      %558 = vrot.lane.b32.xlu0 %v377, 4
      %v559 = vpop.permute.xlu0 %558
      %560 = vrot.lane.b32.xlu0 %v379, 4
      %v561 = vpop.permute.xlu0 %560
      %562 = vrot.lane.b32.xlu0 %v382, 4
      %v563 = vpop.permute.xlu0 %562
      %564 = vrot.lane.b32.xlu0 %v384, 4
      %v565 = vpop.permute.xlu0 %564
      %566 = vrot.lane.b32.xlu0 %v387, 4
      %v567 = vpop.permute.xlu0 %566
      %568 = vrot.lane.b32.xlu0 %v389, 4
      %v569 = vpop.permute.xlu0 %568
      %570 = vrot.lane.b32.xlu0 %v392, 4
      %v571 = vpop.permute.xlu0 %570
      %572 = vrot.lane.b32.xlu0 %v394, 4
      %v573 = vpop.permute.xlu0 %572
      %574 = vrot.lane.b32.xlu0 %v397, 4
      %v575 = vpop.permute.xlu0 %574
      %576 = vrot.lane.b32.xlu0 %v399, 4
      %v577 = vpop.permute.xlu0 %576
      %578 = vrot.lane.b32.xlu0 %v402, 4
      %v579 = vpop.permute.xlu0 %578
      %580 = vrot.lane.b32.xlu0 %v404, 4
      %v581 = vpop.permute.xlu0 %580
      %582 = vrot.lane.b32.xlu0 %v407, 4
      %v583 = vpop.permute.xlu0 %582
      %584 = vrot.lane.b32.xlu0 %v409, 4
      %v585 = vpop.permute.xlu0 %584
      %586 = vrot.lane.b32.xlu0 %v412, 4
      %v587 = vpop.permute.xlu0 %586
      %588 = vrot.lane.b32.xlu0 %v414, 4
      %v589 = vpop.permute.xlu0 %588
      %590 = vrot.lane.b32.xlu0 %v417, 4
      %v591 = vpop.permute.xlu0 %590
      %592 = vrot.lane.b32.xlu0 %v419, 4
      %v593 = vpop.permute.xlu0 %592
      %594 = vrot.lane.b32.xlu0 %v422, 4
      %v595 = vpop.permute.xlu0 %594
      %596 = vrot.lane.b32.xlu0 %v424, 4
      %v597 = vpop.permute.xlu0 %596
      %598 = vrot.lane.b32.xlu0 %v427, 4
      %v599 = vpop.permute.xlu0 %598
      %600 = vrot.lane.b32.xlu0 %v429, 4
      %v601 = vpop.permute.xlu0 %600
      %602 = vrot.lane.b32.xlu0 %v432, 4
      %v603 = vpop.permute.xlu0 %602
      %604 = vrot.lane.b32.xlu0 %v434, 4
      %v605 = vpop.permute.xlu0 %604
      %638 = vrot.lane.b32.xlu0 %v438, 8
      %v639 = vpop.permute.xlu0 %638
      %640 = vrot.lane.b32.xlu0 %v440, 8
      %v641 = vpop.permute.xlu0 %640
      %642 = vrot.lane.b32.xlu0 %v443, 8
      %v643 = vpop.permute.xlu0 %642
      %644 = vrot.lane.b32.xlu0 %v445, 8
      %v645 = vpop.permute.xlu0 %644
      %646 = vrot.lane.b32.xlu0 %v448, 8
      %v647 = vpop.permute.xlu0 %646
      %648 = vrot.lane.b32.xlu0 %v450, 8
      %v649 = vpop.permute.xlu0 %648
      %650 = vrot.lane.b32.xlu0 %v453, 8
      %v651 = vpop.permute.xlu0 %650
      %652 = vrot.lane.b32.xlu0 %v455, 8
      %v653 = vpop.permute.xlu0 %652
      %654 = vrot.lane.b32.xlu0 %v458, 8
      %v655 = vpop.permute.xlu0 %654
      %656 = vrot.lane.b32.xlu0 %v460, 8
      %v657 = vpop.permute.xlu0 %656
      %658 = vrot.lane.b32.xlu0 %v463, 8
      %v659 = vpop.permute.xlu0 %658
      %660 = vrot.lane.b32.xlu0 %v465, 8
      %v661 = vpop.permute.xlu0 %660
      %662 = vrot.lane.b32.xlu0 %v468, 8
      %v663 = vpop.permute.xlu0 %662
      %664 = vrot.lane.b32.xlu0 %v470, 8
      %v665 = vpop.permute.xlu0 %664
      %666 = vrot.lane.b32.xlu0 %v473, 8
      %v667 = vpop.permute.xlu0 %666
      %668 = vrot.lane.b32.xlu0 %v475, 8
      %v669 = vpop.permute.xlu0 %668
      %670 = vrot.lane.b32.xlu0 %v478, 8
      %v671 = vpop.permute.xlu0 %670
      %672 = vrot.lane.b32.xlu0 %v480, 8
      %v673 = vpop.permute.xlu0 %672
      %674 = vrot.lane.b32.xlu0 %v483, 8
      %v675 = vpop.permute.xlu0 %674
      %676 = vrot.lane.b32.xlu0 %v485, 8
      %v677 = vpop.permute.xlu0 %676
      %678 = vrot.lane.b32.xlu0 %v488, 8
      %v679 = vpop.permute.xlu0 %678
      %680 = vrot.lane.b32.xlu0 %v490, 8
      %v681 = vpop.permute.xlu0 %680
      %682 = vrot.lane.b32.xlu0 %v493, 8
      %v683 = vpop.permute.xlu0 %682
      %684 = vrot.lane.b32.xlu0 %v495, 8
      %v685 = vpop.permute.xlu0 %684
      %686 = vrot.lane.b32.xlu0 %v498, 8
      %v687 = vpop.permute.xlu0 %686
      %688 = vrot.lane.b32.xlu0 %v500, 8
      %v689 = vpop.permute.xlu0 %688
      %690 = vrot.lane.b32.xlu0 %v503, 8
      %v691 = vpop.permute.xlu0 %690
      %692 = vrot.lane.b32.xlu0 %v505, 8
      %v693 = vpop.permute.xlu0 %692
      %694 = vrot.lane.b32.xlu0 %v508, 8
      %v695 = vpop.permute.xlu0 %694
      %696 = vrot.lane.b32.xlu0 %v510, 8
      %v697 = vpop.permute.xlu0 %696
      %698 = vrot.lane.b32.xlu0 %v513, 8
      %v699 = vpop.permute.xlu0 %698
      %700 = vrot.lane.b32.xlu0 %v515, 8
      %v701 = vpop.permute.xlu0 %700
      %734 = vrot.lane.b32.xlu0 %v255, 12
      %v735 = vpop.permute.xlu0 %734
      %736 = vrot.lane.b32.xlu0 %v256, 12
      %v737 = vpop.permute.xlu0 %736
      %738 = vrot.lane.b32.xlu0 %v258, 12
      %v739 = vpop.permute.xlu0 %738
      %740 = vrot.lane.b32.xlu0 %v259, 12
      %v741 = vpop.permute.xlu0 %740
      %742 = vrot.lane.b32.xlu0 %v261, 12
      %v743 = vpop.permute.xlu0 %742
      %744 = vrot.lane.b32.xlu0 %v262, 12
      %v745 = vpop.permute.xlu0 %744
      %746 = vrot.lane.b32.xlu0 %v264, 12
      %v747 = vpop.permute.xlu0 %746
      %748 = vrot.lane.b32.xlu0 %v265, 12
      %v749 = vpop.permute.xlu0 %748
      %750 = vrot.lane.b32.xlu0 %v267, 12
      %v751 = vpop.permute.xlu0 %750
      %752 = vrot.lane.b32.xlu0 %v268, 12
      %v753 = vpop.permute.xlu0 %752
      %754 = vrot.lane.b32.xlu0 %v270, 12
      %v755 = vpop.permute.xlu0 %754
      %756 = vrot.lane.b32.xlu0 %v271, 12
      %v757 = vpop.permute.xlu0 %756
      %758 = vrot.lane.b32.xlu0 %v273, 12
      %v759 = vpop.permute.xlu0 %758
      %760 = vrot.lane.b32.xlu0 %v274, 12
      %v761 = vpop.permute.xlu0 %760
      %762 = vrot.lane.b32.xlu0 %v276, 12
      %v763 = vpop.permute.xlu0 %762
      %764 = vrot.lane.b32.xlu0 %v277, 12
      %v765 = vpop.permute.xlu0 %764
      %766 = vrot.lane.b32.xlu0 %v279, 12
      %v767 = vpop.permute.xlu0 %766
      %768 = vrot.lane.b32.xlu0 %v280, 12
      %v769 = vpop.permute.xlu0 %768
      %770 = vrot.lane.b32.xlu0 %v282, 12
      %v771 = vpop.permute.xlu0 %770
      %772 = vrot.lane.b32.xlu0 %v283, 12
      %v773 = vpop.permute.xlu0 %772
      %774 = vrot.lane.b32.xlu0 %v285, 12
      %v775 = vpop.permute.xlu0 %774
      %776 = vrot.lane.b32.xlu0 %v286, 12
      %v777 = vpop.permute.xlu0 %776
      %778 = vrot.lane.b32.xlu0 %v288, 12
      %v779 = vpop.permute.xlu0 %778
      %780 = vrot.lane.b32.xlu0 %v289, 12
      %v781 = vpop.permute.xlu0 %780
      %782 = vrot.lane.b32.xlu0 %v291, 12
      %v783 = vpop.permute.xlu0 %782
      %784 = vrot.lane.b32.xlu0 %v292, 12
      %v785 = vpop.permute.xlu0 %784
      %786 = vrot.lane.b32.xlu0 %v294, 12
      %v787 = vpop.permute.xlu0 %786
      %788 = vrot.lane.b32.xlu0 %v295, 12
      %v789 = vpop.permute.xlu0 %788
      %790 = vrot.lane.b32.xlu0 %v297, 12
      %v791 = vpop.permute.xlu0 %790
      %792 = vrot.lane.b32.xlu0 %v298, 12
      %v793 = vpop.permute.xlu0 %792
      %794 = vrot.lane.b32.xlu0 %v300, 12
      %v795 = vpop.permute.xlu0 %794
      %796 = vrot.lane.b32.xlu0 %v301, 12
      %v797 = vpop.permute.xlu0 %796
      %830 = vrot.lane.b32.xlu0 %v362, 16
      %v831 = vpop.permute.xlu0 %830
      %832 = vrot.lane.b32.xlu0 %v364, 16
      %v833 = vpop.permute.xlu0 %832
      %834 = vrot.lane.b32.xlu0 %v367, 16
      %v835 = vpop.permute.xlu0 %834
      %836 = vrot.lane.b32.xlu0 %v369, 16
      %v837 = vpop.permute.xlu0 %836
      %838 = vrot.lane.b32.xlu0 %v372, 16
      %v839 = vpop.permute.xlu0 %838
      %840 = vrot.lane.b32.xlu0 %v374, 16
      %v841 = vpop.permute.xlu0 %840
      %842 = vrot.lane.b32.xlu0 %v377, 16
      %v843 = vpop.permute.xlu0 %842
      %844 = vrot.lane.b32.xlu0 %v379, 16
      %v845 = vpop.permute.xlu0 %844
      %846 = vrot.lane.b32.xlu0 %v382, 16
      %v847 = vpop.permute.xlu0 %846
      %848 = vrot.lane.b32.xlu0 %v384, 16
      %v849 = vpop.permute.xlu0 %848
      %850 = vrot.lane.b32.xlu0 %v387, 16
      %v851 = vpop.permute.xlu0 %850
      %852 = vrot.lane.b32.xlu0 %v389, 16
      %v853 = vpop.permute.xlu0 %852
      %854 = vrot.lane.b32.xlu0 %v392, 16
      %v855 = vpop.permute.xlu0 %854
      %856 = vrot.lane.b32.xlu0 %v394, 16
      %v857 = vpop.permute.xlu0 %856
      %858 = vrot.lane.b32.xlu0 %v397, 16
      %v859 = vpop.permute.xlu0 %858
      %860 = vrot.lane.b32.xlu0 %v399, 16
      %v861 = vpop.permute.xlu0 %860
      %862 = vrot.lane.b32.xlu0 %v402, 16
      %v863 = vpop.permute.xlu0 %862
      %864 = vrot.lane.b32.xlu0 %v404, 16
      %v865 = vpop.permute.xlu0 %864
      %866 = vrot.lane.b32.xlu0 %v407, 16
      %v867 = vpop.permute.xlu0 %866
      %868 = vrot.lane.b32.xlu0 %v409, 16
      %v869 = vpop.permute.xlu0 %868
      %870 = vrot.lane.b32.xlu0 %v412, 16
      %v871 = vpop.permute.xlu0 %870
      %872 = vrot.lane.b32.xlu0 %v414, 16
      %v873 = vpop.permute.xlu0 %872
      %874 = vrot.lane.b32.xlu0 %v417, 16
      %v875 = vpop.permute.xlu0 %874
      %876 = vrot.lane.b32.xlu0 %v419, 16
      %v877 = vpop.permute.xlu0 %876
      %878 = vrot.lane.b32.xlu0 %v422, 16
      %v879 = vpop.permute.xlu0 %878
      %880 = vrot.lane.b32.xlu0 %v424, 16
      %v881 = vpop.permute.xlu0 %880
      %882 = vrot.lane.b32.xlu0 %v427, 16
      %v883 = vpop.permute.xlu0 %882
      %884 = vrot.lane.b32.xlu0 %v429, 16
      %v885 = vpop.permute.xlu0 %884
      %886 = vrot.lane.b32.xlu0 %v432, 16
      %v887 = vpop.permute.xlu0 %886
      %888 = vrot.lane.b32.xlu0 %v434, 16
      %v889 = vpop.permute.xlu0 %888
      %890 = vrot.lane.b32.xlu0 %v521, 16
      %v891 = vpop.permute.xlu0 %890
      %892 = vrot.lane.b32.xlu0 %v523, 16
      %v893 = vpop.permute.xlu0 %892
      %926 = vrot.lane.b32.xlu0 %v443, 20
      %v927 = vpop.permute.xlu0 %926
      %928 = vrot.lane.b32.xlu0 %v445, 20
      %v929 = vpop.permute.xlu0 %928
      %930 = vrot.lane.b32.xlu0 %v448, 20
      %v931 = vpop.permute.xlu0 %930
      %932 = vrot.lane.b32.xlu0 %v450, 20
      %v933 = vpop.permute.xlu0 %932
      %934 = vrot.lane.b32.xlu0 %v453, 20
      %v935 = vpop.permute.xlu0 %934
      %936 = vrot.lane.b32.xlu0 %v455, 20
      %v937 = vpop.permute.xlu0 %936
      %938 = vrot.lane.b32.xlu0 %v458, 20
      %v939 = vpop.permute.xlu0 %938
      %940 = vrot.lane.b32.xlu0 %v460, 20
      %v941 = vpop.permute.xlu0 %940
      %942 = vrot.lane.b32.xlu0 %v463, 20
      %v943 = vpop.permute.xlu0 %942
      %944 = vrot.lane.b32.xlu0 %v465, 20
      %v945 = vpop.permute.xlu0 %944
      %946 = vrot.lane.b32.xlu0 %v468, 20
      %v947 = vpop.permute.xlu0 %946
      %948 = vrot.lane.b32.xlu0 %v470, 20
      %v949 = vpop.permute.xlu0 %948
      %950 = vrot.lane.b32.xlu0 %v473, 20
      %v951 = vpop.permute.xlu0 %950
      %952 = vrot.lane.b32.xlu0 %v475, 20
      %v953 = vpop.permute.xlu0 %952
      %954 = vrot.lane.b32.xlu0 %v478, 20
      %v955 = vpop.permute.xlu0 %954
      %956 = vrot.lane.b32.xlu0 %v480, 20
      %v957 = vpop.permute.xlu0 %956
      %958 = vrot.lane.b32.xlu0 %v483, 20
      %v959 = vpop.permute.xlu0 %958
      %960 = vrot.lane.b32.xlu0 %v485, 20
      %v961 = vpop.permute.xlu0 %960
      %962 = vrot.lane.b32.xlu0 %v488, 20
      %v963 = vpop.permute.xlu0 %962
      %964 = vrot.lane.b32.xlu0 %v490, 20
      %v965 = vpop.permute.xlu0 %964
      %966 = vrot.lane.b32.xlu0 %v493, 20
      %v967 = vpop.permute.xlu0 %966
      %968 = vrot.lane.b32.xlu0 %v495, 20
      %v969 = vpop.permute.xlu0 %968
      %970 = vrot.lane.b32.xlu0 %v498, 20
      %v971 = vpop.permute.xlu0 %970
      %972 = vrot.lane.b32.xlu0 %v500, 20
      %v973 = vpop.permute.xlu0 %972
      %974 = vrot.lane.b32.xlu0 %v503, 20
      %v975 = vpop.permute.xlu0 %974
      %976 = vrot.lane.b32.xlu0 %v505, 20
      %v977 = vpop.permute.xlu0 %976
      %978 = vrot.lane.b32.xlu0 %v508, 20
      %v979 = vpop.permute.xlu0 %978
      %980 = vrot.lane.b32.xlu0 %v510, 20
      %v981 = vpop.permute.xlu0 %980
      %982 = vrot.lane.b32.xlu0 %v513, 20
      %v983 = vpop.permute.xlu0 %982
      %984 = vrot.lane.b32.xlu0 %v515, 20
      %v985 = vpop.permute.xlu0 %984
      %986 = vrot.lane.b32.xlu0 %v526, 20
      %v987 = vpop.permute.xlu0 %986
      %988 = vrot.lane.b32.xlu0 %v528, 20
      %v989 = vpop.permute.xlu0 %988
      %1022 = vrot.lane.b32.xlu0 %v258, 24
      %v1023 = vpop.permute.xlu0 %1022
      %1024 = vrot.lane.b32.xlu0 %v259, 24
      %v1025 = vpop.permute.xlu0 %1024
      %1026 = vrot.lane.b32.xlu0 %v261, 24
      %v1027 = vpop.permute.xlu0 %1026
      %1028 = vrot.lane.b32.xlu0 %v262, 24
      %v1029 = vpop.permute.xlu0 %1028
      %1030 = vrot.lane.b32.xlu0 %v264, 24
      %v1031 = vpop.permute.xlu0 %1030
      %1032 = vrot.lane.b32.xlu0 %v265, 24
      %v1033 = vpop.permute.xlu0 %1032
      %1034 = vrot.lane.b32.xlu0 %v267, 24
      %v1035 = vpop.permute.xlu0 %1034
      %1036 = vrot.lane.b32.xlu0 %v268, 24
      %v1037 = vpop.permute.xlu0 %1036
      %1038 = vrot.lane.b32.xlu0 %v270, 24
      %v1039 = vpop.permute.xlu0 %1038
      %1040 = vrot.lane.b32.xlu0 %v271, 24
      %v1041 = vpop.permute.xlu0 %1040
      %1042 = vrot.lane.b32.xlu0 %v273, 24
      %v1043 = vpop.permute.xlu0 %1042
      %1044 = vrot.lane.b32.xlu0 %v274, 24
      %v1045 = vpop.permute.xlu0 %1044
      %1046 = vrot.lane.b32.xlu0 %v276, 24
      %v1047 = vpop.permute.xlu0 %1046
      %1048 = vrot.lane.b32.xlu0 %v277, 24
      %v1049 = vpop.permute.xlu0 %1048
      %1050 = vrot.lane.b32.xlu0 %v279, 24
      %v1051 = vpop.permute.xlu0 %1050
      %1052 = vrot.lane.b32.xlu0 %v280, 24
      %v1053 = vpop.permute.xlu0 %1052
      %1054 = vrot.lane.b32.xlu0 %v282, 24
      %v1055 = vpop.permute.xlu0 %1054
      %1056 = vrot.lane.b32.xlu0 %v283, 24
      %v1057 = vpop.permute.xlu0 %1056
      %1058 = vrot.lane.b32.xlu0 %v285, 24
      %v1059 = vpop.permute.xlu0 %1058
      %1060 = vrot.lane.b32.xlu0 %v286, 24
      %v1061 = vpop.permute.xlu0 %1060
      %1062 = vrot.lane.b32.xlu0 %v288, 24
      %v1063 = vpop.permute.xlu0 %1062
      %1064 = vrot.lane.b32.xlu0 %v289, 24
      %v1065 = vpop.permute.xlu0 %1064
      %1066 = vrot.lane.b32.xlu0 %v291, 24
      %v1067 = vpop.permute.xlu0 %1066
      %1068 = vrot.lane.b32.xlu0 %v292, 24
      %v1069 = vpop.permute.xlu0 %1068
      %1070 = vrot.lane.b32.xlu0 %v294, 24
      %v1071 = vpop.permute.xlu0 %1070
      %1072 = vrot.lane.b32.xlu0 %v295, 24
      %v1073 = vpop.permute.xlu0 %1072
      %1074 = vrot.lane.b32.xlu0 %v297, 24
      %v1075 = vpop.permute.xlu0 %1074
      %1076 = vrot.lane.b32.xlu0 %v298, 24
      %v1077 = vpop.permute.xlu0 %1076
      %1078 = vrot.lane.b32.xlu0 %v300, 24
      %v1079 = vpop.permute.xlu0 %1078
      %1080 = vrot.lane.b32.xlu0 %v301, 24
      %v1081 = vpop.permute.xlu0 %1080
      %1082 = vrot.lane.b32.xlu0 %v303, 24
      %v1083 = vpop.permute.xlu0 %1082
      %1084 = vrot.lane.b32.xlu0 %v304, 24
      %v1085 = vpop.permute.xlu0 %1084
      %1118 = vrot.lane.b32.xlu0 %v367, 28
      %v1119 = vpop.permute.xlu0 %1118
      %1120 = vrot.lane.b32.xlu0 %v369, 28
      %v1121 = vpop.permute.xlu0 %1120
      %1122 = vrot.lane.b32.xlu0 %v372, 28
      %v1123 = vpop.permute.xlu0 %1122
      %1124 = vrot.lane.b32.xlu0 %v374, 28
      %v1125 = vpop.permute.xlu0 %1124
      %1126 = vrot.lane.b32.xlu0 %v377, 28
      %v1127 = vpop.permute.xlu0 %1126
      %1128 = vrot.lane.b32.xlu0 %v379, 28
      %v1129 = vpop.permute.xlu0 %1128
      %1130 = vrot.lane.b32.xlu0 %v382, 28
      %v1131 = vpop.permute.xlu0 %1130
      %1132 = vrot.lane.b32.xlu0 %v384, 28
      %v1133 = vpop.permute.xlu0 %1132
      %1134 = vrot.lane.b32.xlu0 %v387, 28
      %v1135 = vpop.permute.xlu0 %1134
      %1136 = vrot.lane.b32.xlu0 %v389, 28
      %v1137 = vpop.permute.xlu0 %1136
      %1138 = vrot.lane.b32.xlu0 %v392, 28
      %v1139 = vpop.permute.xlu0 %1138
      %1140 = vrot.lane.b32.xlu0 %v394, 28
      %v1141 = vpop.permute.xlu0 %1140
      %1142 = vrot.lane.b32.xlu0 %v397, 28
      %v1143 = vpop.permute.xlu0 %1142
      %1144 = vrot.lane.b32.xlu0 %v399, 28
      %v1145 = vpop.permute.xlu0 %1144
      %1146 = vrot.lane.b32.xlu0 %v402, 28
      %v1147 = vpop.permute.xlu0 %1146
      %1148 = vrot.lane.b32.xlu0 %v404, 28
      %v1149 = vpop.permute.xlu0 %1148
      %1150 = vrot.lane.b32.xlu0 %v407, 28
      %v1151 = vpop.permute.xlu0 %1150
      %1152 = vrot.lane.b32.xlu0 %v409, 28
      %v1153 = vpop.permute.xlu0 %1152
      %1154 = vrot.lane.b32.xlu0 %v412, 28
      %v1155 = vpop.permute.xlu0 %1154
      %1156 = vrot.lane.b32.xlu0 %v414, 28
      %v1157 = vpop.permute.xlu0 %1156
      %1158 = vrot.lane.b32.xlu0 %v417, 28
      %v1159 = vpop.permute.xlu0 %1158
      %1160 = vrot.lane.b32.xlu0 %v419, 28
      %v1161 = vpop.permute.xlu0 %1160
      %1162 = vrot.lane.b32.xlu0 %v422, 28
      %v1163 = vpop.permute.xlu0 %1162
      %1164 = vrot.lane.b32.xlu0 %v424, 28
      %v1165 = vpop.permute.xlu0 %1164
      %1166 = vrot.lane.b32.xlu0 %v427, 28
      %v1167 = vpop.permute.xlu0 %1166
      %1168 = vrot.lane.b32.xlu0 %v429, 28
      %v1169 = vpop.permute.xlu0 %1168
      %1170 = vrot.lane.b32.xlu0 %v432, 28
      %v1171 = vpop.permute.xlu0 %1170
      %1172 = vrot.lane.b32.xlu0 %v434, 28
      %v1173 = vpop.permute.xlu0 %1172
      %1174 = vrot.lane.b32.xlu0 %v521, 28
      %v1175 = vpop.permute.xlu0 %1174
      %1176 = vrot.lane.b32.xlu0 %v523, 28
      %v1177 = vpop.permute.xlu0 %1176
      %1178 = vrot.lane.b32.xlu0 %v534, 28
      %v1179 = vpop.permute.xlu0 %1178
      %1180 = vrot.lane.b32.xlu0 %v536, 28
      %v1181 = vpop.permute.xlu0 %1180
      %1214 = vrot.lane.b32.xlu0 %v448, 32
      %v1215 = vpop.permute.xlu0 %1214
      %1216 = vrot.lane.b32.xlu0 %v450, 32
      %v1217 = vpop.permute.xlu0 %1216
      %1218 = vrot.lane.b32.xlu0 %v453, 32
      %v1219 = vpop.permute.xlu0 %1218
      %1220 = vrot.lane.b32.xlu0 %v455, 32
      %v1221 = vpop.permute.xlu0 %1220
      %1222 = vrot.lane.b32.xlu0 %v458, 32
      %v1223 = vpop.permute.xlu0 %1222
      %1224 = vrot.lane.b32.xlu0 %v460, 32
      %v1225 = vpop.permute.xlu0 %1224
      %1226 = vrot.lane.b32.xlu0 %v463, 32
      %v1227 = vpop.permute.xlu0 %1226
      %1228 = vrot.lane.b32.xlu0 %v465, 32
      %v1229 = vpop.permute.xlu0 %1228
      %1230 = vrot.lane.b32.xlu0 %v468, 32
      %v1231 = vpop.permute.xlu0 %1230
      %1232 = vrot.lane.b32.xlu0 %v470, 32
      %v1233 = vpop.permute.xlu0 %1232
      %1234 = vrot.lane.b32.xlu0 %v473, 32
      %v1235 = vpop.permute.xlu0 %1234
      %1236 = vrot.lane.b32.xlu0 %v475, 32
      %v1237 = vpop.permute.xlu0 %1236
      %1238 = vrot.lane.b32.xlu0 %v478, 32
      %v1239 = vpop.permute.xlu0 %1238
      %1240 = vrot.lane.b32.xlu0 %v480, 32
      %v1241 = vpop.permute.xlu0 %1240
      %1242 = vrot.lane.b32.xlu0 %v483, 32
      %v1243 = vpop.permute.xlu0 %1242
      %1244 = vrot.lane.b32.xlu0 %v485, 32
      %v1245 = vpop.permute.xlu0 %1244
      %1246 = vrot.lane.b32.xlu0 %v488, 32
      %v1247 = vpop.permute.xlu0 %1246
      %1248 = vrot.lane.b32.xlu0 %v490, 32
      %v1249 = vpop.permute.xlu0 %1248
      %1250 = vrot.lane.b32.xlu0 %v493, 32
      %v1251 = vpop.permute.xlu0 %1250
      %1252 = vrot.lane.b32.xlu0 %v495, 32
      %v1253 = vpop.permute.xlu0 %1252
      %1254 = vrot.lane.b32.xlu0 %v498, 32
      %v1255 = vpop.permute.xlu0 %1254
      %1256 = vrot.lane.b32.xlu0 %v500, 32
      %v1257 = vpop.permute.xlu0 %1256
      %1258 = vrot.lane.b32.xlu0 %v503, 32
      %v1259 = vpop.permute.xlu0 %1258
      %1260 = vrot.lane.b32.xlu0 %v505, 32
      %v1261 = vpop.permute.xlu0 %1260
      %1262 = vrot.lane.b32.xlu0 %v508, 32
      %v1263 = vpop.permute.xlu0 %1262
      %1264 = vrot.lane.b32.xlu0 %v510, 32
      %v1265 = vpop.permute.xlu0 %1264
      %1266 = vrot.lane.b32.xlu0 %v513, 32
      %v1267 = vpop.permute.xlu0 %1266
      %1268 = vrot.lane.b32.xlu0 %v515, 32
      %v1269 = vpop.permute.xlu0 %1268
      %1270 = vrot.lane.b32.xlu0 %v526, 32
      %v1271 = vpop.permute.xlu0 %1270
      %1272 = vrot.lane.b32.xlu0 %v528, 32
      %v1273 = vpop.permute.xlu0 %1272
      %1274 = vrot.lane.b32.xlu0 %v539, 32
      %v1275 = vpop.permute.xlu0 %1274
      %1276 = vrot.lane.b32.xlu0 %v541, 32
      %v1277 = vpop.permute.xlu0 %1276
      %vm1310 = vcmask 31744
      %v1311 = vsel %vm1310, %v252, %v543
      %v1312 = vsel %vm1310, %v253, %v545
      %v1313 = vsel %vm1310, %v255, %v547
      %v1314 = vsel %vm1310, %v256, %v549
      %v1315 = vsel %vm1310, %v258, %v551
      %v1316 = vsel %vm1310, %v259, %v553
      %v1317 = vsel %vm1310, %v261, %v555
      %v1318 = vsel %vm1310, %v262, %v557
      %v1319 = vsel %vm1310, %v264, %v559
      %v1320 = vsel %vm1310, %v265, %v561
      %v1321 = vsel %vm1310, %v267, %v563
      %v1322 = vsel %vm1310, %v268, %v565
      %v1323 = vsel %vm1310, %v270, %v567
      %v1324 = vsel %vm1310, %v271, %v569
      %v1325 = vsel %vm1310, %v273, %v571
      %v1326 = vsel %vm1310, %v274, %v573
      %v1327 = vsel %vm1310, %v276, %v575
      %v1328 = vsel %vm1310, %v277, %v577
      %v1329 = vsel %vm1310, %v279, %v579
      %v1330 = vsel %vm1310, %v280, %v581
      %v1331 = vsel %vm1310, %v282, %v583
      %v1332 = vsel %vm1310, %v283, %v585
      %v1333 = vsel %vm1310, %v285, %v587
      %v1334 = vsel %vm1310, %v286, %v589
      %v1335 = vsel %vm1310, %v288, %v591
      %v1336 = vsel %vm1310, %v289, %v593
      %v1337 = vsel %vm1310, %v291, %v595
      %v1338 = vsel %vm1310, %v292, %v597
      %v1339 = vsel %vm1310, %v294, %v599
      %v1340 = vsel %vm1310, %v295, %v601
      %v1341 = vsel %vm1310, %v297, %v603
      %v1342 = vsel %vm1310, %v298, %v605
      %vm1343 = vcmask 64512
      %v1344 = vsel %vm1343, %v1311, %v639
      %v1345 = vsel %vm1343, %v1312, %v641
      %v1346 = vsel %vm1343, %v1313, %v643
      %v1347 = vsel %vm1343, %v1314, %v645
      %v1348 = vsel %vm1343, %v1315, %v647
      %v1349 = vsel %vm1343, %v1316, %v649
      %v1350 = vsel %vm1343, %v1317, %v651
      %v1351 = vsel %vm1343, %v1318, %v653
      %v1352 = vsel %vm1343, %v1319, %v655
      %v1353 = vsel %vm1343, %v1320, %v657
      %v1354 = vsel %vm1343, %v1321, %v659
      %v1355 = vsel %vm1343, %v1322, %v661
      %v1356 = vsel %vm1343, %v1323, %v663
      %v1357 = vsel %vm1343, %v1324, %v665
      %v1358 = vsel %vm1343, %v1325, %v667
      %v1359 = vsel %vm1343, %v1326, %v669
      %v1360 = vsel %vm1343, %v1327, %v671
      %v1361 = vsel %vm1343, %v1328, %v673
      %v1362 = vsel %vm1343, %v1329, %v675
      %v1363 = vsel %vm1343, %v1330, %v677
      %v1364 = vsel %vm1343, %v1331, %v679
      %v1365 = vsel %vm1343, %v1332, %v681
      %v1366 = vsel %vm1343, %v1333, %v683
      %v1367 = vsel %vm1343, %v1334, %v685
      %v1368 = vsel %vm1343, %v1335, %v687
      %v1369 = vsel %vm1343, %v1336, %v689
      %v1370 = vsel %vm1343, %v1337, %v691
      %v1371 = vsel %vm1343, %v1338, %v693
      %v1372 = vsel %vm1343, %v1339, %v695
      %v1373 = vsel %vm1343, %v1340, %v697
      %v1374 = vsel %vm1343, %v1341, %v699
      %v1375 = vsel %vm1343, %v1342, %v701
      %vm1376 = vcmask 97280
      %v1377 = vsel %vm1376, %v1344, %v735
      %v1378 = vsel %vm1376, %v1345, %v737
      %v1379 = vsel %vm1376, %v1346, %v739
      %v1380 = vsel %vm1376, %v1347, %v741
      %v1381 = vsel %vm1376, %v1348, %v743
      %v1382 = vsel %vm1376, %v1349, %v745
      %v1383 = vsel %vm1376, %v1350, %v747
      %v1384 = vsel %vm1376, %v1351, %v749
      %v1385 = vsel %vm1376, %v1352, %v751
      %v1386 = vsel %vm1376, %v1353, %v753
      %v1387 = vsel %vm1376, %v1354, %v755
      %v1388 = vsel %vm1376, %v1355, %v757
      %v1389 = vsel %vm1376, %v1356, %v759
      %v1390 = vsel %vm1376, %v1357, %v761
      %v1391 = vsel %vm1376, %v1358, %v763
      %v1392 = vsel %vm1376, %v1359, %v765
      %v1393 = vsel %vm1376, %v1360, %v767
      %v1394 = vsel %vm1376, %v1361, %v769
      %v1395 = vsel %vm1376, %v1362, %v771
      %v1396 = vsel %vm1376, %v1363, %v773
      %v1397 = vsel %vm1376, %v1364, %v775
      %v1398 = vsel %vm1376, %v1365, %v777
      %v1399 = vsel %vm1376, %v1366, %v779
      %v1400 = vsel %vm1376, %v1367, %v781
      %v1401 = vsel %vm1376, %v1368, %v783
      %v1402 = vsel %vm1376, %v1369, %v785
      %v1403 = vsel %vm1376, %v1370, %v787
      %v1404 = vsel %vm1376, %v1371, %v789
      %v1405 = vsel %vm1376, %v1372, %v791
      %v1406 = vsel %vm1376, %v1373, %v793
      %v1407 = vsel %vm1376, %v1374, %v795
      %v1408 = vsel %vm1376, %v1375, %v797
      %vm1409 = vcmask 130048
      %v1410 = vsel %vm1409, %v1377, %v831
      %v1411 = vsel %vm1409, %v1378, %v833
      %v1412 = vsel %vm1409, %v1379, %v835
      %v1413 = vsel %vm1409, %v1380, %v837
      %v1414 = vsel %vm1409, %v1381, %v839
      %v1415 = vsel %vm1409, %v1382, %v841
      %v1416 = vsel %vm1409, %v1383, %v843
      %v1417 = vsel %vm1409, %v1384, %v845
      %v1418 = vsel %vm1409, %v1385, %v847
      %v1419 = vsel %vm1409, %v1386, %v849
      %v1420 = vsel %vm1409, %v1387, %v851
      %v1421 = vsel %vm1409, %v1388, %v853
      %v1422 = vsel %vm1409, %v1389, %v855
      %v1423 = vsel %vm1409, %v1390, %v857
      %v1424 = vsel %vm1409, %v1391, %v859
      %v1425 = vsel %vm1409, %v1392, %v861
      %v1426 = vsel %vm1409, %v1393, %v863
      %v1427 = vsel %vm1409, %v1394, %v865
      %v1428 = vsel %vm1409, %v1395, %v867
      %v1429 = vsel %vm1409, %v1396, %v869
      %v1430 = vsel %vm1409, %v1397, %v871
      %v1431 = vsel %vm1409, %v1398, %v873
      %v1432 = vsel %vm1409, %v1399, %v875
      %v1433 = vsel %vm1409, %v1400, %v877
      %v1434 = vsel %vm1409, %v1401, %v879
      %v1435 = vsel %vm1409, %v1402, %v881
      %v1436 = vsel %vm1409, %v1403, %v883
      %v1437 = vsel %vm1409, %v1404, %v885
      %v1438 = vsel %vm1409, %v1405, %v887
      %v1439 = vsel %vm1409, %v1406, %v889
      %v1440 = vsel %vm1409, %v1407, %v891
      %v1441 = vsel %vm1409, %v1408, %v893
      %vm1442 = vcmask 162816
      %v1443 = vsel %vm1442, %v1410, %v927
      %v1444 = vsel %vm1442, %v1411, %v929
      %v1445 = vsel %vm1442, %v1412, %v931
      %v1446 = vsel %vm1442, %v1413, %v933
      %v1447 = vsel %vm1442, %v1414, %v935
      %v1448 = vsel %vm1442, %v1415, %v937
      %v1449 = vsel %vm1442, %v1416, %v939
      %v1450 = vsel %vm1442, %v1417, %v941
      %v1451 = vsel %vm1442, %v1418, %v943
      %v1452 = vsel %vm1442, %v1419, %v945
      %v1453 = vsel %vm1442, %v1420, %v947
      %v1454 = vsel %vm1442, %v1421, %v949
      %v1455 = vsel %vm1442, %v1422, %v951
      %v1456 = vsel %vm1442, %v1423, %v953
      %v1457 = vsel %vm1442, %v1424, %v955
      %v1458 = vsel %vm1442, %v1425, %v957
      %v1459 = vsel %vm1442, %v1426, %v959
      %v1460 = vsel %vm1442, %v1427, %v961
      %v1461 = vsel %vm1442, %v1428, %v963
      %v1462 = vsel %vm1442, %v1429, %v965
      %v1463 = vsel %vm1442, %v1430, %v967
      %v1464 = vsel %vm1442, %v1431, %v969
      %v1465 = vsel %vm1442, %v1432, %v971
      %v1466 = vsel %vm1442, %v1433, %v973
      %v1467 = vsel %vm1442, %v1434, %v975
      %v1468 = vsel %vm1442, %v1435, %v977
      %v1469 = vsel %vm1442, %v1436, %v979
      %v1470 = vsel %vm1442, %v1437, %v981
      %v1471 = vsel %vm1442, %v1438, %v983
      %v1472 = vsel %vm1442, %v1439, %v985
      %v1473 = vsel %vm1442, %v1440, %v987
      %v1474 = vsel %vm1442, %v1441, %v989
      %vm1475 = vcmask 195584
      %v1476 = vsel %vm1475, %v1443, %v1023
      %v1477 = vsel %vm1475, %v1444, %v1025
      %v1478 = vsel %vm1475, %v1445, %v1027
      %v1479 = vsel %vm1475, %v1446, %v1029
      %v1480 = vsel %vm1475, %v1447, %v1031
      %v1481 = vsel %vm1475, %v1448, %v1033
      %v1482 = vsel %vm1475, %v1449, %v1035
      %v1483 = vsel %vm1475, %v1450, %v1037
      %v1484 = vsel %vm1475, %v1451, %v1039
      %v1485 = vsel %vm1475, %v1452, %v1041
      %v1486 = vsel %vm1475, %v1453, %v1043
      %v1487 = vsel %vm1475, %v1454, %v1045
      %v1488 = vsel %vm1475, %v1455, %v1047
      %v1489 = vsel %vm1475, %v1456, %v1049
      %v1490 = vsel %vm1475, %v1457, %v1051
      %v1491 = vsel %vm1475, %v1458, %v1053
      %v1492 = vsel %vm1475, %v1459, %v1055
      %v1493 = vsel %vm1475, %v1460, %v1057
      %v1494 = vsel %vm1475, %v1461, %v1059
      %v1495 = vsel %vm1475, %v1462, %v1061
      %v1496 = vsel %vm1475, %v1463, %v1063
      %v1497 = vsel %vm1475, %v1464, %v1065
      %v1498 = vsel %vm1475, %v1465, %v1067
      %v1499 = vsel %vm1475, %v1466, %v1069
      %v1500 = vsel %vm1475, %v1467, %v1071
      %v1501 = vsel %vm1475, %v1468, %v1073
      %v1502 = vsel %vm1475, %v1469, %v1075
      %v1503 = vsel %vm1475, %v1470, %v1077
      %v1504 = vsel %vm1475, %v1471, %v1079
      %v1505 = vsel %vm1475, %v1472, %v1081
      %v1506 = vsel %vm1475, %v1473, %v1083
      %v1507 = vsel %vm1475, %v1474, %v1085
      %vm1508 = vcmask 228352
      %v1509 = vsel %vm1508, %v1476, %v1119
      %v1510 = vsel %vm1508, %v1477, %v1121
      %v1511 = vsel %vm1508, %v1478, %v1123
      %v1512 = vsel %vm1508, %v1479, %v1125
      %v1513 = vsel %vm1508, %v1480, %v1127
      %v1514 = vsel %vm1508, %v1481, %v1129
      %v1515 = vsel %vm1508, %v1482, %v1131
      %v1516 = vsel %vm1508, %v1483, %v1133
      %v1517 = vsel %vm1508, %v1484, %v1135
      %v1518 = vsel %vm1508, %v1485, %v1137
      %v1519 = vsel %vm1508, %v1486, %v1139
      %v1520 = vsel %vm1508, %v1487, %v1141
      %v1521 = vsel %vm1508, %v1488, %v1143
      %v1522 = vsel %vm1508, %v1489, %v1145
      %v1523 = vsel %vm1508, %v1490, %v1147
      %v1524 = vsel %vm1508, %v1491, %v1149
      %v1525 = vsel %vm1508, %v1492, %v1151
      %v1526 = vsel %vm1508, %v1493, %v1153
      %v1527 = vsel %vm1508, %v1494, %v1155
      %v1528 = vsel %vm1508, %v1495, %v1157
      %v1529 = vsel %vm1508, %v1496, %v1159
      %v1530 = vsel %vm1508, %v1497, %v1161
      %v1531 = vsel %vm1508, %v1498, %v1163
      %v1532 = vsel %vm1508, %v1499, %v1165
      %v1533 = vsel %vm1508, %v1500, %v1167
      %v1534 = vsel %vm1508, %v1501, %v1169
      %v1535 = vsel %vm1508, %v1502, %v1171
      %v1536 = vsel %vm1508, %v1503, %v1173
      %v1537 = vsel %vm1508, %v1504, %v1175
      %v1538 = vsel %vm1508, %v1505, %v1177
      %v1539 = vsel %vm1508, %v1506, %v1179
      %v1540 = vsel %vm1508, %v1507, %v1181
      %vm1541 = vcmask 261120
      %v1542 = vsel %vm1541, %v1509, %v1215
      %v1543 = vsel %vm1541, %v1510, %v1217
      %v1544 = vsel %vm1541, %v1511, %v1219
      %v1545 = vsel %vm1541, %v1512, %v1221
      %v1546 = vsel %vm1541, %v1513, %v1223
      %v1547 = vsel %vm1541, %v1514, %v1225
      %v1548 = vsel %vm1541, %v1515, %v1227
      %v1549 = vsel %vm1541, %v1516, %v1229
      %v1550 = vsel %vm1541, %v1517, %v1231
      %v1551 = vsel %vm1541, %v1518, %v1233
      %v1552 = vsel %vm1541, %v1519, %v1235
      %v1553 = vsel %vm1541, %v1520, %v1237
      %v1554 = vsel %vm1541, %v1521, %v1239
      %v1555 = vsel %vm1541, %v1522, %v1241
      %v1556 = vsel %vm1541, %v1523, %v1243
      %v1557 = vsel %vm1541, %v1524, %v1245
      %v1558 = vsel %vm1541, %v1525, %v1247
      %v1559 = vsel %vm1541, %v1526, %v1249
      %v1560 = vsel %vm1541, %v1527, %v1251
      %v1561 = vsel %vm1541, %v1528, %v1253
      %v1562 = vsel %vm1541, %v1529, %v1255
      %v1563 = vsel %vm1541, %v1530, %v1257
      %v1564 = vsel %vm1541, %v1531, %v1259
      %v1565 = vsel %vm1541, %v1532, %v1261
      %v1566 = vsel %vm1541, %v1533, %v1263
      %v1567 = vsel %vm1541, %v1534, %v1265
      %v1568 = vsel %vm1541, %v1535, %v1267
      %v1569 = vsel %vm1541, %v1536, %v1269
      %v1570 = vsel %vm1541, %v1537, %v1271
      %v1571 = vsel %vm1541, %v1538, %v1273
      %v1572 = vsel %vm1541, %v1539, %v1275
      %v1573 = vsel %vm1541, %v1540, %v1277
      %v1574 = vld [vmem:[%s1] sm:$0xff]
      %v1575 = vld [vmem:[%s1 + $0x8] sm:$0xff]
      %v1576 = vld [vmem:[%s1 + $0x10] sm:$0xff]
      %v1577 = vld [vmem:[%s1 + $0x18] sm:$0xff]
      %v1578 = vld [vmem:[%s1 + $0x20] sm:$0xf]
      %v1579 = vld [vmem:[%s2] sm:$0x1]
      %v1581 = vlaneseq
      %v1582 = vshrl.u32 %v1581, 7
      %v1583 = vsub.s32 0, %v1582
      %v1584 = vrot.slane %v1579, %v1583
      %vm1586 = vcmask 293888
      %v1588 = vsel %vm1586, %v1542, 0
      %v1591 = vsel %vm1586, %v1543, 0
      %v1594 = vsel %vm1586, %v1544, 0
      %v1597 = vsel %vm1586, %v1545, 0
      %v1600 = vsel %vm1586, %v1546, 0
      %v1603 = vsel %vm1586, %v1547, 0
      %v1606 = vsel %vm1586, %v1548, 0
      %v1609 = vsel %vm1586, %v1549, 0
      %v1612 = vsel %vm1586, %v1550, 0
      %v1615 = vsel %vm1586, %v1551, 0
      %v1618 = vsel %vm1586, %v1552, 0
      %v1621 = vsel %vm1586, %v1553, 0
      %v1624 = vsel %vm1586, %v1554, 0
      %v1627 = vsel %vm1586, %v1555, 0
      %v1630 = vsel %vm1586, %v1556, 0
      %v1633 = vsel %vm1586, %v1557, 0
      %v1636 = vsel %vm1586, %v1558, 0
      %v1639 = vsel %vm1586, %v1559, 0
      %v1642 = vsel %vm1586, %v1560, 0
      %v1645 = vsel %vm1586, %v1561, 0
      %v1648 = vsel %vm1586, %v1562, 0
      %v1651 = vsel %vm1586, %v1563, 0
      %v1654 = vsel %vm1586, %v1564, 0
      %v1657 = vsel %vm1586, %v1565, 0
      %v1660 = vsel %vm1586, %v1566, 0
      %v1663 = vsel %vm1586, %v1567, 0
      %v1666 = vsel %vm1586, %v1568, 0
      %v1669 = vsel %vm1586, %v1569, 0
      %v1672 = vsel %vm1586, %v1570, 0
      %v1675 = vsel %vm1586, %v1571, 0
      %v1678 = vsel %vm1586, %v1572, 0
      %v1681 = vsel %vm1586, %v1573, 0
      %vm1683 = vcmask 1043456
      %v1685 = vsel %vm1683, %v1578, 0
      %1687 = vmatprep.subr.mxu0 0.0
      %1688 = vmatpush1.msra.mxu0 0.0
      %1689 = vmatprep.subr.mxu0 0.0
      %1690 = vmatpush1.msra.mxu0 0.0
      %1691 = vmatprep.subr.mxu0 0.0
      %1692 = vmatpush1.msra.mxu0 0.0
      %1693 = vmatprep.subr.mxu0 0.0
      %1694 = vmatpush1.msra.mxu0 0.0
      %1695 = vmatprep.subr.mxu0 0.0
      %1696 = vmatpush1.msra.mxu0 0.0
      %1697 = vmatprep.subr.mxu0 0.0
      %1698 = vmatpush1.msra.mxu0 0.0
      %1699 = vmatprep.subr.mxu0 0.0
      %1700 = vmatpush1.msra.mxu0 0.0
      %1701 = vmatprep.subr.mxu0 0.0
      %1702 = vmatpush1.msra.mxu0 0.0
      %1703 = vmatprep.subr.mxu0 0.0
      %1704 = vmatpush1.msra.mxu0 0.0
      %1705 = vmatprep.subr.mxu0 0.0
      %1706 = vmatpush1.msra.mxu0 0.0
      %1707 = vmatprep.subr.mxu0 0.0
      %1708 = vmatpush1.msra.mxu0 0.0
      %1709 = vmatprep.subr.mxu0 0.0
      %1710 = vmatpush1.msra.mxu0 %v1685
      %1711 = vmatprep.subr.mxu0 0.0
      %1712 = vmatpush1.msra.mxu0 %v1577
      %1713 = vmatprep.subr.mxu0 0.0
      %1714 = vmatpush1.msra.mxu0 %v1576
      %1715 = vmatprep.subr.mxu0 0.0
      %1716 = vmatpush1.msra.mxu0 %v1575
      %1717 = vmatprep.subr.mxu0 0.0
      %1718 = vmatpush1.msra.mxu0 %v1574
      %1719 = vmatprep.subr.mxu0 0.0
      %1720 = vmatpush2.msra.mxu0 0.0
      %1721 = vmatprep.subr.mxu0 0.0
      %1722 = vmatpush2.msra.mxu0 0.0
      %1723 = vmatprep.subr.mxu0 0.0
      %1724 = vmatpush2.msra.mxu0 0.0
      %1725 = vmatprep.subr.mxu0 0.0
      %1726 = vmatpush2.msra.mxu0 0.0
      %1727 = vmatprep.subr.mxu0 0.0
      %1728 = vmatpush2.msra.mxu0 0.0
      %1729 = vmatprep.subr.mxu0 0.0
      %1730 = vmatpush2.msra.mxu0 0.0
      %1731 = vmatprep.subr.mxu0 0.0
      %1732 = vmatpush2.msra.mxu0 0.0
      %1733 = vmatprep.subr.mxu0 0.0
      %1734 = vmatpush2.msra.mxu0 0.0
      %1735 = vmatprep.subr.mxu0 0.0
      %1736 = vmatpush2.msra.mxu0 0.0
      %1737 = vmatprep.subr.mxu0 0.0
      %1738 = vmatpush2.msra.mxu0 0.0
      %1739 = vmatprep.subr.mxu0 0.0
      %1740 = vmatpush2.msra.mxu0 0.0
      %1741 = vmatprep.subr.mxu0 0.0
      %1742 = vmatpush2.msra.mxu0 0.0
      %1743 = vmatprep.subr.mxu0 0.0
      %1744 = vmatpush2.msra.mxu0 0.0
      %1745 = vmatprep.subr.mxu0 0.0
      %1746 = vmatpush2.msra.mxu0 0.0
      %1747 = vmatprep.subr.mxu0 0.0
      %1748 = vmatpush2.msra.mxu0 0.0
      %1749 = vmatprep.subr.mxu0 0.0
      %1750 = vmatpush2.msra.mxu0 0.0
      %1751 = vmatprep.mubr.f32.mxu0 0.0
      %1752 = vmatmul.mubr.f32.gmra.mxu0 %v1588
      %v1753 = vpop.f32.mrf.mxu0
      %v1754 = vadd.f32 %v1584, %v1753
      %v1755 = vpop.f32.mrf.mxu0
      %1756 = vmatprep.mubr.f32.mxu0 0.0
      %1757 = vmatmul.mubr.f32.gmra.mxu0 %v1591
      %v1758 = vpop.f32.mrf.mxu0
      %v1759 = vadd.f32 %v1584, %v1758
      %v1760 = vpop.f32.mrf.mxu0
      %1761 = vmatprep.mubr.f32.mxu0 0.0
      %1762 = vmatmul.mubr.f32.gmra.mxu0 %v1594
      %v1763 = vpop.f32.mrf.mxu0
      %v1764 = vadd.f32 %v1584, %v1763
      %v1765 = vpop.f32.mrf.mxu0
      %1766 = vmatprep.mubr.f32.mxu0 0.0
      %1767 = vmatmul.mubr.f32.gmra.mxu0 %v1597
      %v1768 = vpop.f32.mrf.mxu0
      %v1769 = vadd.f32 %v1584, %v1768
      %v1770 = vpop.f32.mrf.mxu0
      %1771 = vmatprep.mubr.f32.mxu0 0.0
      %1772 = vmatmul.mubr.f32.gmra.mxu0 %v1600
      %v1773 = vpop.f32.mrf.mxu0
      %v1774 = vadd.f32 %v1584, %v1773
      %v1775 = vpop.f32.mrf.mxu0
      %1776 = vmatprep.mubr.f32.mxu0 0.0
      %1777 = vmatmul.mubr.f32.gmra.mxu0 %v1603
      %v1778 = vpop.f32.mrf.mxu0
      %v1779 = vadd.f32 %v1584, %v1778
      %v1780 = vpop.f32.mrf.mxu0
      %1781 = vmatprep.mubr.f32.mxu0 0.0
      %1782 = vmatmul.mubr.f32.gmra.mxu0 %v1606
      %v1783 = vpop.f32.mrf.mxu0
      %v1784 = vadd.f32 %v1584, %v1783
      %v1785 = vpop.f32.mrf.mxu0
      %1786 = vmatprep.mubr.f32.mxu0 0.0
      %1787 = vmatmul.mubr.f32.gmra.mxu0 %v1609
      %v1788 = vpop.f32.mrf.mxu0
      %v1789 = vadd.f32 %v1584, %v1788
      %v1790 = vpop.f32.mrf.mxu0
      %1791 = vmatprep.mubr.f32.mxu0 0.0
      %1792 = vmatmul.mubr.f32.gmra.mxu0 %v1612
      %v1793 = vpop.f32.mrf.mxu0
      %v1794 = vadd.f32 %v1584, %v1793
      %v1795 = vpop.f32.mrf.mxu0
      %1796 = vmatprep.mubr.f32.mxu0 0.0
      %1797 = vmatmul.mubr.f32.gmra.mxu0 %v1615
      %v1798 = vpop.f32.mrf.mxu0
      %v1799 = vadd.f32 %v1584, %v1798
      %v1800 = vpop.f32.mrf.mxu0
      %1801 = vmatprep.mubr.f32.mxu0 0.0
      %1802 = vmatmul.mubr.f32.gmra.mxu0 %v1618
      %v1803 = vpop.f32.mrf.mxu0
      %v1804 = vadd.f32 %v1584, %v1803
      %v1805 = vpop.f32.mrf.mxu0
      %1806 = vmatprep.mubr.f32.mxu0 0.0
      %1807 = vmatmul.mubr.f32.gmra.mxu0 %v1621
      %v1808 = vpop.f32.mrf.mxu0
      %v1809 = vadd.f32 %v1584, %v1808
      %v1810 = vpop.f32.mrf.mxu0
      %1811 = vmatprep.mubr.f32.mxu0 0.0
      %1812 = vmatmul.mubr.f32.gmra.mxu0 %v1624
      %v1813 = vpop.f32.mrf.mxu0
      %v1814 = vadd.f32 %v1584, %v1813
      %v1815 = vpop.f32.mrf.mxu0
      %1816 = vmatprep.mubr.f32.mxu0 0.0
      %1817 = vmatmul.mubr.f32.gmra.mxu0 %v1627
      %v1818 = vpop.f32.mrf.mxu0
      %v1819 = vadd.f32 %v1584, %v1818
      %v1820 = vpop.f32.mrf.mxu0
      %1821 = vmatprep.mubr.f32.mxu0 0.0
      %1822 = vmatmul.mubr.f32.gmra.mxu0 %v1630
      %v1823 = vpop.f32.mrf.mxu0
      %v1824 = vadd.f32 %v1584, %v1823
      %v1825 = vpop.f32.mrf.mxu0
      %1826 = vmatprep.mubr.f32.mxu0 0.0
      %1827 = vmatmul.mubr.f32.gmra.mxu0 %v1633
      %v1828 = vpop.f32.mrf.mxu0
      %v1829 = vadd.f32 %v1584, %v1828
      %v1830 = vpop.f32.mrf.mxu0
      %1831 = vmatprep.mubr.f32.mxu0 0.0
      %1832 = vmatmul.mubr.f32.gmra.mxu0 %v1636
      %v1833 = vpop.f32.mrf.mxu0
      %v1834 = vadd.f32 %v1584, %v1833
      %v1835 = vpop.f32.mrf.mxu0
      %1836 = vmatprep.mubr.f32.mxu0 0.0
      %1837 = vmatmul.mubr.f32.gmra.mxu0 %v1639
      %v1838 = vpop.f32.mrf.mxu0
      %v1839 = vadd.f32 %v1584, %v1838
      %v1840 = vpop.f32.mrf.mxu0
      %1841 = vmatprep.mubr.f32.mxu0 0.0
      %1842 = vmatmul.mubr.f32.gmra.mxu0 %v1642
      %v1843 = vpop.f32.mrf.mxu0
      %v1844 = vadd.f32 %v1584, %v1843
      %v1845 = vpop.f32.mrf.mxu0
      %1846 = vmatprep.mubr.f32.mxu0 0.0
      %1847 = vmatmul.mubr.f32.gmra.mxu0 %v1645
      %v1848 = vpop.f32.mrf.mxu0
      %v1849 = vadd.f32 %v1584, %v1848
      %v1850 = vpop.f32.mrf.mxu0
      %1851 = vmatprep.mubr.f32.mxu0 0.0
      %1852 = vmatmul.mubr.f32.gmra.mxu0 %v1648
      %v1853 = vpop.f32.mrf.mxu0
      %v1854 = vadd.f32 %v1584, %v1853
      %v1855 = vpop.f32.mrf.mxu0
      %1856 = vmatprep.mubr.f32.mxu0 0.0
      %1857 = vmatmul.mubr.f32.gmra.mxu0 %v1651
      %v1858 = vpop.f32.mrf.mxu0
      %v1859 = vadd.f32 %v1584, %v1858
      %v1860 = vpop.f32.mrf.mxu0
      %1861 = vmatprep.mubr.f32.mxu0 0.0
      %1862 = vmatmul.mubr.f32.gmra.mxu0 %v1654
      %v1863 = vpop.f32.mrf.mxu0
      %v1864 = vadd.f32 %v1584, %v1863
      %v1865 = vpop.f32.mrf.mxu0
      %1866 = vmatprep.mubr.f32.mxu0 0.0
      %1867 = vmatmul.mubr.f32.gmra.mxu0 %v1657
      %v1868 = vpop.f32.mrf.mxu0
      %v1869 = vadd.f32 %v1584, %v1868
      %v1870 = vpop.f32.mrf.mxu0
      %1871 = vmatprep.mubr.f32.mxu0 0.0
      %1872 = vmatmul.mubr.f32.gmra.mxu0 %v1660
      %v1873 = vpop.f32.mrf.mxu0
      %v1874 = vadd.f32 %v1584, %v1873
      %v1875 = vpop.f32.mrf.mxu0
      %1876 = vmatprep.mubr.f32.mxu0 0.0
      %1877 = vmatmul.mubr.f32.gmra.mxu0 %v1663
      %v1878 = vpop.f32.mrf.mxu0
      %v1879 = vadd.f32 %v1584, %v1878
      %v1880 = vpop.f32.mrf.mxu0
      %1881 = vmatprep.mubr.f32.mxu0 0.0
      %1882 = vmatmul.mubr.f32.gmra.mxu0 %v1666
      %v1883 = vpop.f32.mrf.mxu0
      %v1884 = vadd.f32 %v1584, %v1883
      %v1885 = vpop.f32.mrf.mxu0
      %1886 = vmatprep.mubr.f32.mxu0 0.0
      %1887 = vmatmul.mubr.f32.gmra.mxu0 %v1669
      %v1888 = vpop.f32.mrf.mxu0
      %v1889 = vadd.f32 %v1584, %v1888
      %v1890 = vpop.f32.mrf.mxu0
      %1891 = vmatprep.mubr.f32.mxu0 0.0
      %1892 = vmatmul.mubr.f32.gmra.mxu0 %v1672
      %v1893 = vpop.f32.mrf.mxu0
      %v1894 = vadd.f32 %v1584, %v1893
      %v1895 = vpop.f32.mrf.mxu0
      %1896 = vmatprep.mubr.f32.mxu0 0.0
      %1897 = vmatmul.mubr.f32.gmra.mxu0 %v1675
      %v1898 = vpop.f32.mrf.mxu0
      %v1899 = vadd.f32 %v1584, %v1898
      %v1900 = vpop.f32.mrf.mxu0
      %1901 = vmatprep.mubr.f32.mxu0 0.0
      %1902 = vmatmul.mubr.f32.gmra.mxu0 %v1678
      %v1903 = vpop.f32.mrf.mxu0
      %v1904 = vadd.f32 %v1584, %v1903
      %v1905 = vpop.f32.mrf.mxu0
      %1906 = vmatprep.mubr.f32.mxu0 0.0
      %1907 = vmatmul.mubr.f32.gmra.mxu0 %v1681
      %v1908 = vpop.f32.mrf.mxu0
      %v1909 = vadd.f32 %v1584, %v1908
      %v1910 = vpop.f32.mrf.mxu0
      %1911 = vdwg.mxu0
      %v1912 = vsel %vm1343, %v1754, 0.0
      %v1913 = vsel %vm1343, %v1759, 0.0
      %v1914 = vadd.f32 %v1912, %v1913
      %v1915 = vsel %vm1343, %v1764, 0.0
      %v1916 = vadd.f32 %v1914, %v1915
      %v1917 = vsel %vm1343, %v1769, 0.0
      %v1918 = vadd.f32 %v1916, %v1917
      %v1919 = vsel %vm1343, %v1774, 0.0
      %v1920 = vadd.f32 %v1918, %v1919
      %v1921 = vsel %vm1343, %v1779, 0.0
      %v1922 = vadd.f32 %v1920, %v1921
      %v1923 = vsel %vm1343, %v1784, 0.0
      %v1924 = vadd.f32 %v1922, %v1923
      %v1925 = vsel %vm1343, %v1789, 0.0
      %v1926 = vadd.f32 %v1924, %v1925
      %v1927 = vsel %vm1343, %v1794, 0.0
      %v1928 = vadd.f32 %v1926, %v1927
      %v1929 = vsel %vm1343, %v1799, 0.0
      %v1930 = vadd.f32 %v1928, %v1929
      %v1931 = vsel %vm1343, %v1804, 0.0
      %v1932 = vadd.f32 %v1930, %v1931
      %v1933 = vsel %vm1343, %v1809, 0.0
      %v1934 = vadd.f32 %v1932, %v1933
      %v1935 = vsel %vm1343, %v1814, 0.0
      %v1936 = vadd.f32 %v1934, %v1935
      %v1937 = vsel %vm1343, %v1819, 0.0
      %v1938 = vadd.f32 %v1936, %v1937
      %v1939 = vsel %vm1343, %v1824, 0.0
      %v1940 = vadd.f32 %v1938, %v1939
      %v1941 = vsel %vm1343, %v1829, 0.0
      %v1942 = vadd.f32 %v1940, %v1941
      %v1943 = vsel %vm1343, %v1834, 0.0
      %v1944 = vadd.f32 %v1942, %v1943
      %v1945 = vsel %vm1343, %v1839, 0.0
      %v1946 = vadd.f32 %v1944, %v1945
      %v1947 = vsel %vm1343, %v1844, 0.0
      %v1948 = vadd.f32 %v1946, %v1947
      %v1949 = vsel %vm1343, %v1849, 0.0
      %v1950 = vadd.f32 %v1948, %v1949
      %v1951 = vsel %vm1343, %v1854, 0.0
      %v1952 = vadd.f32 %v1950, %v1951
      %v1953 = vsel %vm1343, %v1859, 0.0
      %v1954 = vadd.f32 %v1952, %v1953
      %v1955 = vsel %vm1343, %v1864, 0.0
      %v1956 = vadd.f32 %v1954, %v1955
      %v1957 = vsel %vm1343, %v1869, 0.0
      %v1958 = vadd.f32 %v1956, %v1957
      %v1959 = vsel %vm1343, %v1874, 0.0
      %v1960 = vadd.f32 %v1958, %v1959
      %v1961 = vsel %vm1343, %v1879, 0.0
      %v1962 = vadd.f32 %v1960, %v1961
      %v1963 = vsel %vm1343, %v1884, 0.0
      %v1964 = vadd.f32 %v1962, %v1963
      %v1965 = vsel %vm1343, %v1889, 0.0
      %v1966 = vadd.f32 %v1964, %v1965
      %v1967 = vsel %vm1343, %v1894, 0.0
      %v1968 = vadd.f32 %v1966, %v1967
      %v1969 = vsel %vm1343, %v1899, 0.0
      %v1970 = vadd.f32 %v1968, %v1969
      %v1971 = vsel %vm1343, %v1904, 0.0
      %v1972 = vadd.f32 %v1970, %v1971
      %v1973 = vsel %vm1343, %v1909, 0.0
      %v1974 = vadd.f32 %v1972, %v1973
      %v1975 = vrot.slane %v1974, 4
      %v1976 = vadd.f32 %v1974, %v1975
      %v1977 = vrot.slane %v1976, 2
      %v1978 = vadd.f32 %v1976, %v1977
      %v1979 = vrot.slane %v1978, 1
      %v1980 = vadd.f32 %v1978, %v1979
      %v1981 = vld [vmem:[%s5] sm:$0xff]
      %v1983 = vsel %vm1343, %v1980, 0
      %1985 = vmatprep.subr.mxu0 0.0
      %1986 = vmatpush1.msra.mxu0 0.0
      %1987 = vmatprep.subr.mxu0 0.0
      %1988 = vmatpush1.msra.mxu0 0.0
      %1989 = vmatprep.subr.mxu0 0.0
      %1990 = vmatpush1.msra.mxu0 0.0
      %1991 = vmatprep.subr.mxu0 0.0
      %1992 = vmatpush1.msra.mxu0 0.0
      %1993 = vmatprep.subr.mxu0 0.0
      %1994 = vmatpush1.msra.mxu0 0.0
      %1995 = vmatprep.subr.mxu0 0.0
      %1996 = vmatpush1.msra.mxu0 0.0
      %1997 = vmatprep.subr.mxu0 0.0
      %1998 = vmatpush1.msra.mxu0 0.0
      %1999 = vmatprep.subr.mxu0 0.0
      %2000 = vmatpush1.msra.mxu0 0.0
      %2001 = vmatprep.subr.mxu0 0.0
      %2002 = vmatpush1.msra.mxu0 0.0
      %2003 = vmatprep.subr.mxu0 0.0
      %2004 = vmatpush1.msra.mxu0 0.0
      %2005 = vmatprep.subr.mxu0 0.0
      %2006 = vmatpush1.msra.mxu0 0.0
      %2007 = vmatprep.subr.mxu0 0.0
      %2008 = vmatpush1.msra.mxu0 0.0
      %2009 = vmatprep.subr.mxu0 0.0
      %2010 = vmatpush1.msra.mxu0 0.0
      %2011 = vmatprep.subr.mxu0 0.0
      %2012 = vmatpush1.msra.mxu0 0.0
      %2013 = vmatprep.subr.mxu0 0.0
      %2014 = vmatpush1.msra.mxu0 0.0
      %2015 = vmatprep.subr.mxu0 0.0
      %2016 = vmatpush1.msra.mxu0 %v1981
      %2017 = vmatprep.subr.mxu0 0.0
      %2018 = vmatpush2.msra.mxu0 0.0
      %2019 = vmatprep.subr.mxu0 0.0
      %2020 = vmatpush2.msra.mxu0 0.0
      %2021 = vmatprep.subr.mxu0 0.0
      %2022 = vmatpush2.msra.mxu0 0.0
      %2023 = vmatprep.subr.mxu0 0.0
      %2024 = vmatpush2.msra.mxu0 0.0
      %2025 = vmatprep.subr.mxu0 0.0
      %2026 = vmatpush2.msra.mxu0 0.0
      %2027 = vmatprep.subr.mxu0 0.0
      %2028 = vmatpush2.msra.mxu0 0.0
      %2029 = vmatprep.subr.mxu0 0.0
      %2030 = vmatpush2.msra.mxu0 0.0
      %2031 = vmatprep.subr.mxu0 0.0
      %2032 = vmatpush2.msra.mxu0 0.0
      %2033 = vmatprep.subr.mxu0 0.0
      %2034 = vmatpush2.msra.mxu0 0.0
      %2035 = vmatprep.subr.mxu0 0.0
      %2036 = vmatpush2.msra.mxu0 0.0
      %2037 = vmatprep.subr.mxu0 0.0
      %2038 = vmatpush2.msra.mxu0 0.0
      %2039 = vmatprep.subr.mxu0 0.0
      %2040 = vmatpush2.msra.mxu0 0.0
      %2041 = vmatprep.subr.mxu0 0.0
      %2042 = vmatpush2.msra.mxu0 0.0
      %2043 = vmatprep.subr.mxu0 0.0
      %2044 = vmatpush2.msra.mxu0 0.0
      %2045 = vmatprep.subr.mxu0 0.0
      %2046 = vmatpush2.msra.mxu0 0.0
      %2047 = vmatprep.subr.mxu0 0.0
      %2048 = vmatpush2.msra.mxu0 0.0
      %2049 = vmatprep.mubr.f32.mxu0 0.0
      %2050 = vmatmul.mubr.f32.gmra.mxu0 %v1983
      %v2051 = vpop.f32.mrf.mxu0
      %v2052 = vadd.f32 0.0, %v2051
      %v2053 = vpop.f32.mrf.mxu0
      %2054 = vdwg.mxu0
      %v2055 = vlaneseq
      %v2056 = vshrl.u32 %v2055, 7
      %v2057 = vsub.s32 0, %v2056
      %v2058 = vrot.slane %v2052, %v2057
      %v2059 = vsub.f32 %v1754, %v2058
      %v2060 = vsub.f32 %v1759, %v2058
      %v2061 = vsub.f32 %v1764, %v2058
      %v2062 = vsub.f32 %v1769, %v2058
      %v2063 = vsub.f32 %v1774, %v2058
      %v2064 = vsub.f32 %v1779, %v2058
      %v2065 = vsub.f32 %v1784, %v2058
      %v2066 = vsub.f32 %v1789, %v2058
      %v2067 = vsub.f32 %v1794, %v2058
      %v2068 = vsub.f32 %v1799, %v2058
      %v2069 = vsub.f32 %v1804, %v2058
      %v2070 = vsub.f32 %v1809, %v2058
      %v2071 = vsub.f32 %v1814, %v2058
      %v2072 = vsub.f32 %v1819, %v2058
      %v2073 = vsub.f32 %v1824, %v2058
      %v2074 = vsub.f32 %v1829, %v2058
      %v2075 = vsub.f32 %v1834, %v2058
      %v2076 = vsub.f32 %v1839, %v2058
      %v2077 = vsub.f32 %v1844, %v2058
      %v2078 = vsub.f32 %v1849, %v2058
      %v2079 = vsub.f32 %v1854, %v2058
      %v2080 = vsub.f32 %v1859, %v2058
      %v2081 = vsub.f32 %v1864, %v2058
      %v2082 = vsub.f32 %v1869, %v2058
      %v2083 = vsub.f32 %v1874, %v2058
      %v2084 = vsub.f32 %v1879, %v2058
      %v2085 = vsub.f32 %v1884, %v2058
      %v2086 = vsub.f32 %v1889, %v2058
      %v2087 = vsub.f32 %v1894, %v2058
      %v2088 = vsub.f32 %v1899, %v2058
      %v2089 = vsub.f32 %v1904, %v2058
      %v2090 = vsub.f32 %v1909, %v2058
      %v2091 = vmul.f32 %v2059, %v2059
      %v2092 = vmul.f32 %v2060, %v2060
      %v2093 = vmul.f32 %v2061, %v2061
      %v2094 = vmul.f32 %v2062, %v2062
      %v2095 = vmul.f32 %v2063, %v2063
      %v2096 = vmul.f32 %v2064, %v2064
      %v2097 = vmul.f32 %v2065, %v2065
      %v2098 = vmul.f32 %v2066, %v2066
      %v2099 = vmul.f32 %v2067, %v2067
      %v2100 = vmul.f32 %v2068, %v2068
      %v2101 = vmul.f32 %v2069, %v2069
      %v2102 = vmul.f32 %v2070, %v2070
      %v2103 = vmul.f32 %v2071, %v2071
      %v2104 = vmul.f32 %v2072, %v2072
      %v2105 = vmul.f32 %v2073, %v2073
      %v2106 = vmul.f32 %v2074, %v2074
      %v2107 = vmul.f32 %v2075, %v2075
      %v2108 = vmul.f32 %v2076, %v2076
      %v2109 = vmul.f32 %v2077, %v2077
      %v2110 = vmul.f32 %v2078, %v2078
      %v2111 = vmul.f32 %v2079, %v2079
      %v2112 = vmul.f32 %v2080, %v2080
      %v2113 = vmul.f32 %v2081, %v2081
      %v2114 = vmul.f32 %v2082, %v2082
      %v2115 = vmul.f32 %v2083, %v2083
      %v2116 = vmul.f32 %v2084, %v2084
      %v2117 = vmul.f32 %v2085, %v2085
      %v2118 = vmul.f32 %v2086, %v2086
      %v2119 = vmul.f32 %v2087, %v2087
      %v2120 = vmul.f32 %v2088, %v2088
      %v2121 = vmul.f32 %v2089, %v2089
      %v2122 = vmul.f32 %v2090, %v2090
      %v2123 = vsel %vm1343, %v2091, 0.0
      %v2124 = vsel %vm1343, %v2092, 0.0
      %v2125 = vadd.f32 %v2123, %v2124
      %v2126 = vsel %vm1343, %v2093, 0.0
      %v2127 = vadd.f32 %v2125, %v2126
      %v2128 = vsel %vm1343, %v2094, 0.0
      %v2129 = vadd.f32 %v2127, %v2128
      %v2130 = vsel %vm1343, %v2095, 0.0
      %v2131 = vadd.f32 %v2129, %v2130
      %v2132 = vsel %vm1343, %v2096, 0.0
      %v2133 = vadd.f32 %v2131, %v2132
      %v2134 = vsel %vm1343, %v2097, 0.0
      %v2135 = vadd.f32 %v2133, %v2134
      %v2136 = vsel %vm1343, %v2098, 0.0
      %v2137 = vadd.f32 %v2135, %v2136
      %v2138 = vsel %vm1343, %v2099, 0.0
      %v2139 = vadd.f32 %v2137, %v2138
      %v2140 = vsel %vm1343, %v2100, 0.0
      %v2141 = vadd.f32 %v2139, %v2140
      %v2142 = vsel %vm1343, %v2101, 0.0
      %v2143 = vadd.f32 %v2141, %v2142
      %v2144 = vsel %vm1343, %v2102, 0.0
      %v2145 = vadd.f32 %v2143, %v2144
      %v2146 = vsel %vm1343, %v2103, 0.0
      %v2147 = vadd.f32 %v2145, %v2146
      %v2148 = vsel %vm1343, %v2104, 0.0
      %v2149 = vadd.f32 %v2147, %v2148
      %v2150 = vsel %vm1343, %v2105, 0.0
      %v2151 = vadd.f32 %v2149, %v2150
      %v2152 = vsel %vm1343, %v2106, 0.0
      %v2153 = vadd.f32 %v2151, %v2152
      %v2154 = vsel %vm1343, %v2107, 0.0
      %v2155 = vadd.f32 %v2153, %v2154
      %v2156 = vsel %vm1343, %v2108, 0.0
      %v2157 = vadd.f32 %v2155, %v2156
      %v2158 = vsel %vm1343, %v2109, 0.0
      %v2159 = vadd.f32 %v2157, %v2158
      %v2160 = vsel %vm1343, %v2110, 0.0
      %v2161 = vadd.f32 %v2159, %v2160
      %v2162 = vsel %vm1343, %v2111, 0.0
      %v2163 = vadd.f32 %v2161, %v2162
      %v2164 = vsel %vm1343, %v2112, 0.0
      %v2165 = vadd.f32 %v2163, %v2164
      %v2166 = vsel %vm1343, %v2113, 0.0
      %v2167 = vadd.f32 %v2165, %v2166
      %v2168 = vsel %vm1343, %v2114, 0.0
      %v2169 = vadd.f32 %v2167, %v2168
      %v2170 = vsel %vm1343, %v2115, 0.0
      %v2171 = vadd.f32 %v2169, %v2170
      %v2172 = vsel %vm1343, %v2116, 0.0
      %v2173 = vadd.f32 %v2171, %v2172
      %v2174 = vsel %vm1343, %v2117, 0.0
      %v2175 = vadd.f32 %v2173, %v2174
      %v2176 = vsel %vm1343, %v2118, 0.0
      %v2177 = vadd.f32 %v2175, %v2176
      %v2178 = vsel %vm1343, %v2119, 0.0
      %v2179 = vadd.f32 %v2177, %v2178
      %v2180 = vsel %vm1343, %v2120, 0.0
      %v2181 = vadd.f32 %v2179, %v2180
      %v2182 = vsel %vm1343, %v2121, 0.0
      %v2183 = vadd.f32 %v2181, %v2182
      %v2184 = vsel %vm1343, %v2122, 0.0
      %v2185 = vadd.f32 %v2183, %v2184
      %v2186 = vrot.slane %v2185, 4
      %v2187 = vadd.f32 %v2185, %v2186
      %v2188 = vrot.slane %v2187, 2
      %v2189 = vadd.f32 %v2187, %v2188
      %v2190 = vrot.slane %v2189, 1
      %v2191 = vadd.f32 %v2189, %v2190
      %v2193 = vsel %vm1343, %v2191, 0
      %2195 = vmatprep.subr.mxu0 0.0
      %2196 = vmatpush1.msra.mxu0 0.0
      %2197 = vmatprep.subr.mxu0 0.0
      %2198 = vmatpush1.msra.mxu0 0.0
      %2199 = vmatprep.subr.mxu0 0.0
      %2200 = vmatpush1.msra.mxu0 0.0
      %2201 = vmatprep.subr.mxu0 0.0
      %2202 = vmatpush1.msra.mxu0 0.0
      %2203 = vmatprep.subr.mxu0 0.0
      %2204 = vmatpush1.msra.mxu0 0.0
      %2205 = vmatprep.subr.mxu0 0.0
      %2206 = vmatpush1.msra.mxu0 0.0
      %2207 = vmatprep.subr.mxu0 0.0
      %2208 = vmatpush1.msra.mxu0 0.0
      %2209 = vmatprep.subr.mxu0 0.0
      %2210 = vmatpush1.msra.mxu0 0.0
      %2211 = vmatprep.subr.mxu0 0.0
      %2212 = vmatpush1.msra.mxu0 0.0
      %2213 = vmatprep.subr.mxu0 0.0
      %2214 = vmatpush1.msra.mxu0 0.0
      %2215 = vmatprep.subr.mxu0 0.0
      %2216 = vmatpush1.msra.mxu0 0.0
      %2217 = vmatprep.subr.mxu0 0.0
      %2218 = vmatpush1.msra.mxu0 0.0
      %2219 = vmatprep.subr.mxu0 0.0
      %2220 = vmatpush1.msra.mxu0 0.0
      %2221 = vmatprep.subr.mxu0 0.0
      %2222 = vmatpush1.msra.mxu0 0.0
      %2223 = vmatprep.subr.mxu0 0.0
      %2224 = vmatpush1.msra.mxu0 0.0
      %2225 = vmatprep.subr.mxu0 0.0
      %2226 = vmatpush1.msra.mxu0 %v1981
      %2227 = vmatprep.subr.mxu0 0.0
      %2228 = vmatpush2.msra.mxu0 0.0
      %2229 = vmatprep.subr.mxu0 0.0
      %2230 = vmatpush2.msra.mxu0 0.0
      %2231 = vmatprep.subr.mxu0 0.0
      %2232 = vmatpush2.msra.mxu0 0.0
      %2233 = vmatprep.subr.mxu0 0.0
      %2234 = vmatpush2.msra.mxu0 0.0
      %2235 = vmatprep.subr.mxu0 0.0
      %2236 = vmatpush2.msra.mxu0 0.0
      %2237 = vmatprep.subr.mxu0 0.0
      %2238 = vmatpush2.msra.mxu0 0.0
      %2239 = vmatprep.subr.mxu0 0.0
      %2240 = vmatpush2.msra.mxu0 0.0
      %2241 = vmatprep.subr.mxu0 0.0
      %2242 = vmatpush2.msra.mxu0 0.0
      %2243 = vmatprep.subr.mxu0 0.0
      %2244 = vmatpush2.msra.mxu0 0.0
      %2245 = vmatprep.subr.mxu0 0.0
      %2246 = vmatpush2.msra.mxu0 0.0
      %2247 = vmatprep.subr.mxu0 0.0
      %2248 = vmatpush2.msra.mxu0 0.0
      %2249 = vmatprep.subr.mxu0 0.0
      %2250 = vmatpush2.msra.mxu0 0.0
      %2251 = vmatprep.subr.mxu0 0.0
      %2252 = vmatpush2.msra.mxu0 0.0
      %2253 = vmatprep.subr.mxu0 0.0
      %2254 = vmatpush2.msra.mxu0 0.0
      %2255 = vmatprep.subr.mxu0 0.0
      %2256 = vmatpush2.msra.mxu0 0.0
      %2257 = vmatprep.subr.mxu0 0.0
      %2258 = vmatpush2.msra.mxu0 0.0
      %2259 = vmatprep.mubr.f32.mxu0 0.0
      %2260 = vmatmul.mubr.f32.gmra.mxu0 %v2193
      %v2261 = vpop.f32.mrf.mxu0
      %v2262 = vadd.f32 1e-05, %v2261
      %v2263 = vpop.f32.mrf.mxu0
      %2264 = vdwg.mxu0
      %v2265 = vrsqrt.pop %v2262
      %v2266 = vlaneseq
      %v2267 = vshrl.u32 %v2266, 7
      %v2268 = vsub.s32 0, %v2267
      %v2269 = vrot.slane %v2265, %v2268
      %v2270 = vmul.f32 %v2059, %v2269
      %v2271 = vmul.f32 %v2060, %v2269
      %v2272 = vmul.f32 %v2061, %v2269
      %v2273 = vmul.f32 %v2062, %v2269
      %v2274 = vmul.f32 %v2063, %v2269
      %v2275 = vmul.f32 %v2064, %v2269
      %v2276 = vmul.f32 %v2065, %v2269
      %v2277 = vmul.f32 %v2066, %v2269
      %v2278 = vmul.f32 %v2067, %v2269
      %v2279 = vmul.f32 %v2068, %v2269
      %v2280 = vmul.f32 %v2069, %v2269
      %v2281 = vmul.f32 %v2070, %v2269
      %v2282 = vmul.f32 %v2071, %v2269
      %v2283 = vmul.f32 %v2072, %v2269
      %v2284 = vmul.f32 %v2073, %v2269
      %v2285 = vmul.f32 %v2074, %v2269
      %v2286 = vmul.f32 %v2075, %v2269
      %v2287 = vmul.f32 %v2076, %v2269
      %v2288 = vmul.f32 %v2077, %v2269
      %v2289 = vmul.f32 %v2078, %v2269
      %v2290 = vmul.f32 %v2079, %v2269
      %v2291 = vmul.f32 %v2080, %v2269
      %v2292 = vmul.f32 %v2081, %v2269
      %v2293 = vmul.f32 %v2082, %v2269
      %v2294 = vmul.f32 %v2083, %v2269
      %v2295 = vmul.f32 %v2084, %v2269
      %v2296 = vmul.f32 %v2085, %v2269
      %v2297 = vmul.f32 %v2086, %v2269
      %v2298 = vmul.f32 %v2087, %v2269
      %v2299 = vmul.f32 %v2088, %v2269
      %v2300 = vmul.f32 %v2089, %v2269
      %v2301 = vmul.f32 %v2090, %v2269
      %v2302 = vld [vmem:[%s3] sm:$0x1]
      %v2304 = vlaneseq
      %v2305 = vshrl.u32 %v2304, 7
      %v2306 = vsub.s32 0, %v2305
      %v2307 = vrot.slane %v2302, %v2306
      %v2309 = vmul.f32 %v2270, %v2307
      %v2310 = vmul.f32 %v2271, %v2307
      %v2311 = vmul.f32 %v2272, %v2307
      %v2312 = vmul.f32 %v2273, %v2307
      %v2313 = vmul.f32 %v2274, %v2307
      %v2314 = vmul.f32 %v2275, %v2307
      %v2315 = vmul.f32 %v2276, %v2307
      %v2316 = vmul.f32 %v2277, %v2307
      %v2317 = vmul.f32 %v2278, %v2307
      %v2318 = vmul.f32 %v2279, %v2307
      %v2319 = vmul.f32 %v2280, %v2307
      %v2320 = vmul.f32 %v2281, %v2307
      %v2321 = vmul.f32 %v2282, %v2307
      %v2322 = vmul.f32 %v2283, %v2307
      %v2323 = vmul.f32 %v2284, %v2307
      %v2324 = vmul.f32 %v2285, %v2307
      %v2325 = vmul.f32 %v2286, %v2307
      %v2326 = vmul.f32 %v2287, %v2307
      %v2327 = vmul.f32 %v2288, %v2307
      %v2328 = vmul.f32 %v2289, %v2307
      %v2329 = vmul.f32 %v2290, %v2307
      %v2330 = vmul.f32 %v2291, %v2307
      %v2331 = vmul.f32 %v2292, %v2307
      %v2332 = vmul.f32 %v2293, %v2307
      %v2333 = vmul.f32 %v2294, %v2307
      %v2334 = vmul.f32 %v2295, %v2307
      %v2335 = vmul.f32 %v2296, %v2307
      %v2336 = vmul.f32 %v2297, %v2307
      %v2337 = vmul.f32 %v2298, %v2307
      %v2338 = vmul.f32 %v2299, %v2307
      %v2339 = vmul.f32 %v2300, %v2307
      %v2340 = vmul.f32 %v2301, %v2307
      %v2341 = vld [vmem:[%s4] sm:$0x1]
      %v2343 = vlaneseq
      %v2344 = vshrl.u32 %v2343, 7
      %v2345 = vsub.s32 0, %v2344
      %v2346 = vrot.slane %v2341, %v2345
      %v2348 = vadd.f32 %v2309, %v2346
      %v2349 = vadd.f32 %v2310, %v2346
      %v2350 = vadd.f32 %v2311, %v2346
      %v2351 = vadd.f32 %v2312, %v2346
      %v2352 = vadd.f32 %v2313, %v2346
      %v2353 = vadd.f32 %v2314, %v2346
      %v2354 = vadd.f32 %v2315, %v2346
      %v2355 = vadd.f32 %v2316, %v2346
      %v2356 = vadd.f32 %v2317, %v2346
      %v2357 = vadd.f32 %v2318, %v2346
      %v2358 = vadd.f32 %v2319, %v2346
      %v2359 = vadd.f32 %v2320, %v2346
      %v2360 = vadd.f32 %v2321, %v2346
      %v2361 = vadd.f32 %v2322, %v2346
      %v2362 = vadd.f32 %v2323, %v2346
      %v2363 = vadd.f32 %v2324, %v2346
      %v2364 = vadd.f32 %v2325, %v2346
      %v2365 = vadd.f32 %v2326, %v2346
      %v2366 = vadd.f32 %v2327, %v2346
      %v2367 = vadd.f32 %v2328, %v2346
      %v2368 = vadd.f32 %v2329, %v2346
      %v2369 = vadd.f32 %v2330, %v2346
      %v2370 = vadd.f32 %v2331, %v2346
      %v2371 = vadd.f32 %v2332, %v2346
      %v2372 = vadd.f32 %v2333, %v2346
      %v2373 = vadd.f32 %v2334, %v2346
      %v2374 = vadd.f32 %v2335, %v2346
      %v2375 = vadd.f32 %v2336, %v2346
      %v2376 = vadd.f32 %v2337, %v2346
      %v2377 = vadd.f32 %v2338, %v2346
      %v2378 = vadd.f32 %v2339, %v2346
      %v2379 = vadd.f32 %v2340, %v2346
      %v2380 = vmax.f32 %v2348, 0.0
      %v2381 = vmax.f32 %v2349, 0.0
      %v2382 = vmax.f32 %v2350, 0.0
      %v2383 = vmax.f32 %v2351, 0.0
      %v2384 = vmax.f32 %v2352, 0.0
      %v2385 = vmax.f32 %v2353, 0.0
      %v2386 = vmax.f32 %v2354, 0.0
      %v2387 = vmax.f32 %v2355, 0.0
      %v2388 = vmax.f32 %v2356, 0.0
      %v2389 = vmax.f32 %v2357, 0.0
      %v2390 = vmax.f32 %v2358, 0.0
      %v2391 = vmax.f32 %v2359, 0.0
      %v2392 = vmax.f32 %v2360, 0.0
      %v2393 = vmax.f32 %v2361, 0.0
      %v2394 = vmax.f32 %v2362, 0.0
      %v2395 = vmax.f32 %v2363, 0.0
      %v2396 = vmax.f32 %v2364, 0.0
      %v2397 = vmax.f32 %v2365, 0.0
      %v2398 = vmax.f32 %v2366, 0.0
      %v2399 = vmax.f32 %v2367, 0.0
      %v2400 = vmax.f32 %v2368, 0.0
      %v2401 = vmax.f32 %v2369, 0.0
      %v2402 = vmax.f32 %v2370, 0.0
      %v2403 = vmax.f32 %v2371, 0.0
      %v2404 = vmax.f32 %v2372, 0.0
      %v2405 = vmax.f32 %v2373, 0.0
      %v2406 = vmax.f32 %v2374, 0.0
      %v2407 = vmax.f32 %v2375, 0.0
      %v2408 = vmax.f32 %v2376, 0.0
      %v2409 = vmax.f32 %v2377, 0.0
      %v2410 = vmax.f32 %v2378, 0.0
      %v2411 = vmax.f32 %v2379, 0.0
      %v2412 = vmul.f32 %v2380, 0.75
      %v2413 = vmul.f32 %v2381, 0.75
      %v2414 = vmul.f32 %v2382, 0.75
      %v2415 = vmul.f32 %v2383, 0.75
      %v2416 = vmul.f32 %v2384, 0.75
      %v2417 = vmul.f32 %v2385, 0.75
      %v2418 = vmul.f32 %v2386, 0.75
      %v2419 = vmul.f32 %v2387, 0.75
      %v2420 = vmul.f32 %v2388, 0.75
      %v2421 = vmul.f32 %v2389, 0.75
      %v2422 = vmul.f32 %v2390, 0.75
      %v2423 = vmul.f32 %v2391, 0.75
      %v2424 = vmul.f32 %v2392, 0.75
      %v2425 = vmul.f32 %v2393, 0.75
      %v2426 = vmul.f32 %v2394, 0.75
      %v2427 = vmul.f32 %v2395, 0.75
      %v2428 = vmul.f32 %v2396, 0.75
      %v2429 = vmul.f32 %v2397, 0.75
      %v2430 = vmul.f32 %v2398, 0.75
      %v2431 = vmul.f32 %v2399, 0.75
      %v2432 = vmul.f32 %v2400, 0.75
      %v2433 = vmul.f32 %v2401, 0.75
      %v2434 = vmul.f32 %v2402, 0.75
      %v2435 = vmul.f32 %v2403, 0.75
      %v2436 = vmul.f32 %v2404, 0.75
      %v2437 = vmul.f32 %v2405, 0.75
      %v2438 = vmul.f32 %v2406, 0.75
      %v2439 = vmul.f32 %v2407, 0.75
      %v2440 = vmul.f32 %v2408, 0.75
      %v2441 = vmul.f32 %v2409, 0.75
      %v2442 = vmul.f32 %v2410, 0.75
      %v2443 = vmul.f32 %v2411, 0.75
      %v2444 = vmul.f32 %v2380, 0.25
      %v2445 = vmul.f32 %v2381, 0.25
      %v2446 = vmul.f32 %v2382, 0.25
      %v2447 = vmul.f32 %v2383, 0.25
      %v2448 = vmul.f32 %v2384, 0.25
      %v2449 = vmul.f32 %v2385, 0.25
      %v2450 = vmul.f32 %v2386, 0.25
      %v2451 = vmul.f32 %v2387, 0.25
      %v2452 = vmul.f32 %v2388, 0.25
      %v2453 = vmul.f32 %v2389, 0.25
      %v2454 = vmul.f32 %v2390, 0.25
      %v2455 = vmul.f32 %v2391, 0.25
      %v2456 = vmul.f32 %v2392, 0.25
      %v2457 = vmul.f32 %v2393, 0.25
      %v2458 = vmul.f32 %v2394, 0.25
      %v2459 = vmul.f32 %v2395, 0.25
      %v2460 = vmul.f32 %v2396, 0.25
      %v2461 = vmul.f32 %v2397, 0.25
      %v2462 = vmul.f32 %v2398, 0.25
      %v2463 = vmul.f32 %v2399, 0.25
      %v2464 = vmul.f32 %v2400, 0.25
      %v2465 = vmul.f32 %v2401, 0.25
      %v2466 = vmul.f32 %v2402, 0.25
      %v2467 = vmul.f32 %v2403, 0.25
      %v2468 = vmul.f32 %v2404, 0.25
      %v2469 = vmul.f32 %v2405, 0.25
      %v2470 = vmul.f32 %v2406, 0.25
      %v2471 = vmul.f32 %v2407, 0.25
      %v2472 = vmul.f32 %v2408, 0.25
      %v2473 = vmul.f32 %v2409, 0.25
      %v2474 = vadd.f32 %v2412, %v2444
      %v2475 = vadd.f32 %v2413, %v2445
      %v2476 = vadd.f32 %v2414, %v2444
      %v2477 = vadd.f32 %v2415, %v2445
      %v2478 = vadd.f32 %v2416, %v2446
      %v2479 = vadd.f32 %v2417, %v2447
      %v2480 = vadd.f32 %v2418, %v2448
      %v2481 = vadd.f32 %v2419, %v2449
      %v2482 = vadd.f32 %v2420, %v2450
      %v2483 = vadd.f32 %v2421, %v2451
      %v2484 = vadd.f32 %v2422, %v2452
      %v2485 = vadd.f32 %v2423, %v2453
      %v2486 = vadd.f32 %v2424, %v2454
      %v2487 = vadd.f32 %v2425, %v2455
      %v2488 = vadd.f32 %v2426, %v2456
      %v2489 = vadd.f32 %v2427, %v2457
      %v2490 = vadd.f32 %v2428, %v2458
      %v2491 = vadd.f32 %v2429, %v2459
      %v2492 = vadd.f32 %v2430, %v2460
      %v2493 = vadd.f32 %v2431, %v2461
      %v2494 = vadd.f32 %v2432, %v2462
      %v2495 = vadd.f32 %v2433, %v2463
      %v2496 = vadd.f32 %v2434, %v2464
      %v2497 = vadd.f32 %v2435, %v2465
      %v2498 = vadd.f32 %v2436, %v2466
      %v2499 = vadd.f32 %v2437, %v2467
      %v2500 = vadd.f32 %v2438, %v2468
      %v2501 = vadd.f32 %v2439, %v2469
      %v2502 = vadd.f32 %v2440, %v2470
      %v2503 = vadd.f32 %v2441, %v2471
      %v2504 = vadd.f32 %v2442, %v2472
      %v2505 = vadd.f32 %v2443, %v2473
      %v2506 = vmul.f32 %v2410, 0.25
      %v2507 = vmul.f32 %v2411, 0.25
      %v2508 = vadd.f32 %v2412, %v2446
      %v2509 = vadd.f32 %v2413, %v2447
      %v2510 = vadd.f32 %v2414, %v2448
      %v2511 = vadd.f32 %v2415, %v2449
      %v2512 = vadd.f32 %v2416, %v2450
      %v2513 = vadd.f32 %v2417, %v2451
      %v2514 = vadd.f32 %v2418, %v2452
      %v2515 = vadd.f32 %v2419, %v2453
      %v2516 = vadd.f32 %v2420, %v2454
      %v2517 = vadd.f32 %v2421, %v2455
      %v2518 = vadd.f32 %v2422, %v2456
      %v2519 = vadd.f32 %v2423, %v2457
      %v2520 = vadd.f32 %v2424, %v2458
      %v2521 = vadd.f32 %v2425, %v2459
      %v2522 = vadd.f32 %v2426, %v2460
      %v2523 = vadd.f32 %v2427, %v2461
      %v2524 = vadd.f32 %v2428, %v2462
      %v2525 = vadd.f32 %v2429, %v2463
      %v2526 = vadd.f32 %v2430, %v2464
      %v2527 = vadd.f32 %v2431, %v2465
      %v2528 = vadd.f32 %v2432, %v2466
      %v2529 = vadd.f32 %v2433, %v2467
      %v2530 = vadd.f32 %v2434, %v2468
      %v2531 = vadd.f32 %v2435, %v2469
      %v2532 = vadd.f32 %v2436, %v2470
      %v2533 = vadd.f32 %v2437, %v2471
      %v2534 = vadd.f32 %v2438, %v2472
      %v2535 = vadd.f32 %v2439, %v2473
      %v2536 = vadd.f32 %v2440, %v2506
      %v2537 = vadd.f32 %v2441, %v2507
      %v2538 = vadd.f32 %v2442, %v2506
      %v2539 = vadd.f32 %v2443, %v2507
      %vm2604 = vcmask 1040384
      %v2605 = vrot.slane %v2474, 7
      %v2606 = vrot.slane %v2475, 7
      %v2607 = vsel %vm2604, %v2605, %v2606
      %v2608 = vrot.slane %v2508, 7
      %v2609 = vrot.slane %v2509, 7
      %v2610 = vsel %vm2604, %v2608, %v2609
      %v2611 = vrot.slane %v2476, 7
      %v2612 = vrot.slane %v2477, 7
      %v2613 = vsel %vm2604, %v2611, %v2612
      %v2614 = vrot.slane %v2510, 7
      %v2615 = vrot.slane %v2511, 7
      %v2616 = vsel %vm2604, %v2614, %v2615
      %v2617 = vrot.slane %v2478, 7
      %v2618 = vrot.slane %v2479, 7
      %v2619 = vsel %vm2604, %v2617, %v2618
      %v2620 = vrot.slane %v2512, 7
      %v2621 = vrot.slane %v2513, 7
      %v2622 = vsel %vm2604, %v2620, %v2621
      %v2623 = vrot.slane %v2480, 7
      %v2624 = vrot.slane %v2481, 7
      %v2625 = vsel %vm2604, %v2623, %v2624
      %v2626 = vrot.slane %v2514, 7
      %v2627 = vrot.slane %v2515, 7
      %v2628 = vsel %vm2604, %v2626, %v2627
      %v2629 = vrot.slane %v2482, 7
      %v2630 = vrot.slane %v2483, 7
      %v2631 = vsel %vm2604, %v2629, %v2630
      %v2632 = vrot.slane %v2516, 7
      %v2633 = vrot.slane %v2517, 7
      %v2634 = vsel %vm2604, %v2632, %v2633
      %v2635 = vrot.slane %v2484, 7
      %v2636 = vrot.slane %v2485, 7
      %v2637 = vsel %vm2604, %v2635, %v2636
      %v2638 = vrot.slane %v2518, 7
      %v2639 = vrot.slane %v2519, 7
      %v2640 = vsel %vm2604, %v2638, %v2639
      %v2641 = vrot.slane %v2486, 7
      %v2642 = vrot.slane %v2487, 7
      %v2643 = vsel %vm2604, %v2641, %v2642
      %v2644 = vrot.slane %v2520, 7
      %v2645 = vrot.slane %v2521, 7
      %v2646 = vsel %vm2604, %v2644, %v2645
      %v2647 = vrot.slane %v2488, 7
      %v2648 = vrot.slane %v2489, 7
      %v2649 = vsel %vm2604, %v2647, %v2648
      %v2650 = vrot.slane %v2522, 7
      %v2651 = vrot.slane %v2523, 7
      %v2652 = vsel %vm2604, %v2650, %v2651
      %v2653 = vrot.slane %v2490, 7
      %v2654 = vrot.slane %v2491, 7
      %v2655 = vsel %vm2604, %v2653, %v2654
      %v2656 = vrot.slane %v2524, 7
      %v2657 = vrot.slane %v2525, 7
      %v2658 = vsel %vm2604, %v2656, %v2657
      %v2659 = vrot.slane %v2492, 7
      %v2660 = vrot.slane %v2493, 7
      %v2661 = vsel %vm2604, %v2659, %v2660
      %v2662 = vrot.slane %v2526, 7
      %v2663 = vrot.slane %v2527, 7
      %v2664 = vsel %vm2604, %v2662, %v2663
      %v2665 = vrot.slane %v2494, 7
      %v2666 = vrot.slane %v2495, 7
      %v2667 = vsel %vm2604, %v2665, %v2666
      %v2668 = vrot.slane %v2528, 7
      %v2669 = vrot.slane %v2529, 7
      %v2670 = vsel %vm2604, %v2668, %v2669
      %v2671 = vrot.slane %v2496, 7
      %v2672 = vrot.slane %v2497, 7
      %v2673 = vsel %vm2604, %v2671, %v2672
      %v2674 = vrot.slane %v2530, 7
      %v2675 = vrot.slane %v2531, 7
      %v2676 = vsel %vm2604, %v2674, %v2675
      %v2677 = vrot.slane %v2498, 7
      %v2678 = vrot.slane %v2499, 7
      %v2679 = vsel %vm2604, %v2677, %v2678
      %v2680 = vrot.slane %v2532, 7
      %v2681 = vrot.slane %v2533, 7
      %v2682 = vsel %vm2604, %v2680, %v2681
      %v2683 = vrot.slane %v2500, 7
      %v2684 = vrot.slane %v2501, 7
      %v2685 = vsel %vm2604, %v2683, %v2684
      %v2686 = vrot.slane %v2534, 7
      %v2687 = vrot.slane %v2535, 7
      %v2688 = vsel %vm2604, %v2686, %v2687
      %v2689 = vrot.slane %v2502, 7
      %v2690 = vrot.slane %v2503, 7
      %v2691 = vsel %vm2604, %v2689, %v2690
      %v2692 = vrot.slane %v2536, 7
      %v2693 = vrot.slane %v2537, 7
      %v2694 = vsel %vm2604, %v2692, %v2693
      %v2695 = vrot.slane %v2504, 7
      %v2696 = vrot.slane %v2505, 7
      %v2697 = vsel %vm2604, %v2695, %v2696
      %v2698 = vrot.slane %v2538, 7
      %v2699 = vrot.slane %v2539, 7
      %v2700 = vsel %vm2604, %v2698, %v2699
      %v2765 = vsel %vm2604, %v2474, %v2605
      %v2766 = vsel %vm2604, %v2508, %v2608
      %v2767 = vsel %vm2604, %v2476, %v2611
      %v2768 = vsel %vm2604, %v2510, %v2614
      %v2769 = vsel %vm2604, %v2478, %v2617
      %v2770 = vsel %vm2604, %v2512, %v2620
      %v2771 = vsel %vm2604, %v2480, %v2623
      %v2772 = vsel %vm2604, %v2514, %v2626
      %v2773 = vsel %vm2604, %v2482, %v2629
      %v2774 = vsel %vm2604, %v2516, %v2632
      %v2775 = vsel %vm2604, %v2484, %v2635
      %v2776 = vsel %vm2604, %v2518, %v2638
      %v2777 = vsel %vm2604, %v2486, %v2641
      %v2778 = vsel %vm2604, %v2520, %v2644
      %v2779 = vsel %vm2604, %v2488, %v2647
      %v2780 = vsel %vm2604, %v2522, %v2650
      %v2781 = vsel %vm2604, %v2490, %v2653
      %v2782 = vsel %vm2604, %v2524, %v2656
      %v2783 = vsel %vm2604, %v2492, %v2659
      %v2784 = vsel %vm2604, %v2526, %v2662
      %v2785 = vsel %vm2604, %v2494, %v2665
      %v2786 = vsel %vm2604, %v2528, %v2668
      %v2787 = vsel %vm2604, %v2496, %v2671
      %v2788 = vsel %vm2604, %v2530, %v2674
      %v2789 = vsel %vm2604, %v2498, %v2677
      %v2790 = vsel %vm2604, %v2532, %v2680
      %v2791 = vsel %vm2604, %v2500, %v2683
      %v2792 = vsel %vm2604, %v2534, %v2686
      %v2793 = vsel %vm2604, %v2502, %v2689
      %v2794 = vsel %vm2604, %v2536, %v2692
      %v2795 = vsel %vm2604, %v2504, %v2695
      %v2796 = vsel %vm2604, %v2538, %v2698
      %v2797 = vrot.slane %v2474, 1
      %v2798 = vrot.slane %v2475, 1
      %v2799 = vsel %vm354, %v2797, %v2798
      %v2800 = vrot.slane %v2508, 1
      %v2801 = vrot.slane %v2509, 1
      %v2802 = vsel %vm354, %v2800, %v2801
      %v2803 = vrot.slane %v2476, 1
      %v2804 = vrot.slane %v2477, 1
      %v2805 = vsel %vm354, %v2803, %v2804
      %v2806 = vrot.slane %v2510, 1
      %v2807 = vrot.slane %v2511, 1
      %v2808 = vsel %vm354, %v2806, %v2807
      %v2809 = vrot.slane %v2478, 1
      %v2810 = vrot.slane %v2479, 1
      %v2811 = vsel %vm354, %v2809, %v2810
      %v2812 = vrot.slane %v2512, 1
      %v2813 = vrot.slane %v2513, 1
      %v2814 = vsel %vm354, %v2812, %v2813
      %v2815 = vrot.slane %v2480, 1
      %v2816 = vrot.slane %v2481, 1
      %v2817 = vsel %vm354, %v2815, %v2816
      %v2818 = vrot.slane %v2514, 1
      %v2819 = vrot.slane %v2515, 1
      %v2820 = vsel %vm354, %v2818, %v2819
      %v2821 = vrot.slane %v2482, 1
      %v2822 = vrot.slane %v2483, 1
      %v2823 = vsel %vm354, %v2821, %v2822
      %v2824 = vrot.slane %v2516, 1
      %v2825 = vrot.slane %v2517, 1
      %v2826 = vsel %vm354, %v2824, %v2825
      %v2827 = vrot.slane %v2484, 1
      %v2828 = vrot.slane %v2485, 1
      %v2829 = vsel %vm354, %v2827, %v2828
      %v2830 = vrot.slane %v2518, 1
      %v2831 = vrot.slane %v2519, 1
      %v2832 = vsel %vm354, %v2830, %v2831
      %v2833 = vrot.slane %v2486, 1
      %v2834 = vrot.slane %v2487, 1
      %v2835 = vsel %vm354, %v2833, %v2834
      %v2836 = vrot.slane %v2520, 1
      %v2837 = vrot.slane %v2521, 1
      %v2838 = vsel %vm354, %v2836, %v2837
      %v2839 = vrot.slane %v2488, 1
      %v2840 = vrot.slane %v2489, 1
      %v2841 = vsel %vm354, %v2839, %v2840
      %v2842 = vrot.slane %v2522, 1
      %v2843 = vrot.slane %v2523, 1
      %v2844 = vsel %vm354, %v2842, %v2843
      %v2845 = vrot.slane %v2490, 1
      %v2846 = vrot.slane %v2491, 1
      %v2847 = vsel %vm354, %v2845, %v2846
      %v2848 = vrot.slane %v2524, 1
      %v2849 = vrot.slane %v2525, 1
      %v2850 = vsel %vm354, %v2848, %v2849
      %v2851 = vrot.slane %v2492, 1
      %v2852 = vrot.slane %v2493, 1
      %v2853 = vsel %vm354, %v2851, %v2852
      %v2854 = vrot.slane %v2526, 1
      %v2855 = vrot.slane %v2527, 1
      %v2856 = vsel %vm354, %v2854, %v2855
      %v2857 = vrot.slane %v2494, 1
      %v2858 = vrot.slane %v2495, 1
      %v2859 = vsel %vm354, %v2857, %v2858
      %v2860 = vrot.slane %v2528, 1
      %v2861 = vrot.slane %v2529, 1
      %v2862 = vsel %vm354, %v2860, %v2861
      %v2863 = vrot.slane %v2496, 1
      %v2864 = vrot.slane %v2497, 1
      %v2865 = vsel %vm354, %v2863, %v2864
      %v2866 = vrot.slane %v2530, 1
      %v2867 = vrot.slane %v2531, 1
      %v2868 = vsel %vm354, %v2866, %v2867
      %v2869 = vrot.slane %v2498, 1
      %v2870 = vrot.slane %v2499, 1
      %v2871 = vsel %vm354, %v2869, %v2870
      %v2872 = vrot.slane %v2532, 1
      %v2873 = vrot.slane %v2533, 1
      %v2874 = vsel %vm354, %v2872, %v2873
      %v2875 = vrot.slane %v2500, 1
      %v2876 = vrot.slane %v2501, 1
      %v2877 = vsel %vm354, %v2875, %v2876
      %v2878 = vrot.slane %v2534, 1
      %v2879 = vrot.slane %v2535, 1
      %v2880 = vsel %vm354, %v2878, %v2879
      %v2881 = vrot.slane %v2502, 1
      %v2882 = vrot.slane %v2503, 1
      %v2883 = vsel %vm354, %v2881, %v2882
      %v2884 = vrot.slane %v2536, 1
      %v2885 = vrot.slane %v2537, 1
      %v2886 = vsel %vm354, %v2884, %v2885
      %v2887 = vrot.slane %v2504, 1
      %v2888 = vrot.slane %v2505, 1
      %v2889 = vsel %vm354, %v2887, %v2888
      %v2890 = vrot.slane %v2538, 1
      %v2891 = vrot.slane %v2539, 1
      %v2892 = vsel %vm354, %v2890, %v2891
      %v2957 = vsel %vm354, %v2798, %v2475
      %v2958 = vsel %vm354, %v2801, %v2509
      %v2959 = vsel %vm354, %v2804, %v2477
      %v2960 = vsel %vm354, %v2807, %v2511
      %v2961 = vsel %vm354, %v2810, %v2479
      %v2962 = vsel %vm354, %v2813, %v2513
      %v2963 = vsel %vm354, %v2816, %v2481
      %v2964 = vsel %vm354, %v2819, %v2515
      %v2965 = vsel %vm354, %v2822, %v2483
      %v2966 = vsel %vm354, %v2825, %v2517
      %v2967 = vsel %vm354, %v2828, %v2485
      %v2968 = vsel %vm354, %v2831, %v2519
      %v2969 = vsel %vm354, %v2834, %v2487
      %v2970 = vsel %vm354, %v2837, %v2521
      %v2971 = vsel %vm354, %v2840, %v2489
      %v2972 = vsel %vm354, %v2843, %v2523
      %v2973 = vsel %vm354, %v2846, %v2491
      %v2974 = vsel %vm354, %v2849, %v2525
      %v2975 = vsel %vm354, %v2852, %v2493
      %v2976 = vsel %vm354, %v2855, %v2527
      %v2977 = vsel %vm354, %v2858, %v2495
      %v2978 = vsel %vm354, %v2861, %v2529
      %v2979 = vsel %vm354, %v2864, %v2497
      %v2980 = vsel %vm354, %v2867, %v2531
      %v2981 = vsel %vm354, %v2870, %v2499
      %v2982 = vsel %vm354, %v2873, %v2533
      %v2983 = vsel %vm354, %v2876, %v2501
      %v2984 = vsel %vm354, %v2879, %v2535
      %v2985 = vsel %vm354, %v2882, %v2503
      %v2986 = vsel %vm354, %v2885, %v2537
      %v2987 = vsel %vm354, %v2888, %v2505
      %v2988 = vsel %vm354, %v2891, %v2539
      %v2989 = vmul.f32 %v2474, 0.75
      %v2990 = vmul.f32 %v2475, 0.75
      %v2991 = vmul.f32 %v2508, 0.75
      %v2992 = vmul.f32 %v2509, 0.75
      %v2993 = vmul.f32 %v2476, 0.75
      %v2994 = vmul.f32 %v2477, 0.75
      %v2995 = vmul.f32 %v2510, 0.75
      %v2996 = vmul.f32 %v2511, 0.75
      %v2997 = vmul.f32 %v2478, 0.75
      %v2998 = vmul.f32 %v2479, 0.75
      %v2999 = vmul.f32 %v2512, 0.75
      %v3000 = vmul.f32 %v2513, 0.75
      %v3001 = vmul.f32 %v2480, 0.75
      %v3002 = vmul.f32 %v2481, 0.75
      %v3003 = vmul.f32 %v2514, 0.75
      %v3004 = vmul.f32 %v2515, 0.75
      %v3005 = vmul.f32 %v2482, 0.75
      %v3006 = vmul.f32 %v2483, 0.75
      %v3007 = vmul.f32 %v2516, 0.75
      %v3008 = vmul.f32 %v2517, 0.75
      %v3009 = vmul.f32 %v2484, 0.75
      %v3010 = vmul.f32 %v2485, 0.75
      %v3011 = vmul.f32 %v2518, 0.75
      %v3012 = vmul.f32 %v2519, 0.75
      %v3013 = vmul.f32 %v2486, 0.75
      %v3014 = vmul.f32 %v2487, 0.75
      %v3015 = vmul.f32 %v2520, 0.75
      %v3016 = vmul.f32 %v2521, 0.75
      %v3017 = vmul.f32 %v2488, 0.75
      %v3018 = vmul.f32 %v2489, 0.75
      %v3019 = vmul.f32 %v2522, 0.75
      %v3020 = vmul.f32 %v2523, 0.75
      %v3021 = vmul.f32 %v2490, 0.75
      %v3022 = vmul.f32 %v2491, 0.75
      %v3023 = vmul.f32 %v2524, 0.75
      %v3024 = vmul.f32 %v2525, 0.75
      %v3025 = vmul.f32 %v2492, 0.75
      %v3026 = vmul.f32 %v2493, 0.75
      %v3027 = vmul.f32 %v2526, 0.75
      %v3028 = vmul.f32 %v2527, 0.75
      %v3029 = vmul.f32 %v2494, 0.75
      %v3030 = vmul.f32 %v2495, 0.75
      %v3031 = vmul.f32 %v2528, 0.75
      %v3032 = vmul.f32 %v2529, 0.75
      %v3033 = vmul.f32 %v2496, 0.75
      %v3034 = vmul.f32 %v2497, 0.75
      %v3035 = vmul.f32 %v2530, 0.75
      %v3036 = vmul.f32 %v2531, 0.75
      %v3037 = vmul.f32 %v2498, 0.75
      %v3038 = vmul.f32 %v2499, 0.75
      %v3039 = vmul.f32 %v2532, 0.75
      %v3040 = vmul.f32 %v2533, 0.75
      %v3041 = vmul.f32 %v2500, 0.75
      %v3042 = vmul.f32 %v2501, 0.75
      %v3043 = vmul.f32 %v2534, 0.75
      %v3044 = vmul.f32 %v2535, 0.75
      %v3045 = vmul.f32 %v2502, 0.75
      %v3046 = vmul.f32 %v2503, 0.75
      %v3047 = vmul.f32 %v2536, 0.75
      %v3048 = vmul.f32 %v2537, 0.75
      %v3049 = vmul.f32 %v2504, 0.75
      %v3050 = vmul.f32 %v2505, 0.75
      %v3051 = vmul.f32 %v2538, 0.75
      %v3052 = vmul.f32 %v2539, 0.75
      %v3053 = vmul.f32 %v2765, 0.25
      %v3054 = vmul.f32 %v2607, 0.25
      %v3055 = vmul.f32 %v2766, 0.25
      %v3056 = vmul.f32 %v2610, 0.25
      %v3057 = vmul.f32 %v2767, 0.25
      %v3058 = vmul.f32 %v2613, 0.25
      %v3059 = vmul.f32 %v2768, 0.25
      %v3060 = vmul.f32 %v2616, 0.25
      %v3061 = vmul.f32 %v2769, 0.25
      %v3062 = vmul.f32 %v2619, 0.25
      %v3063 = vmul.f32 %v2770, 0.25
      %v3064 = vmul.f32 %v2622, 0.25
      %v3065 = vmul.f32 %v2771, 0.25
      %v3066 = vmul.f32 %v2625, 0.25
      %v3067 = vmul.f32 %v2772, 0.25
      %v3068 = vmul.f32 %v2628, 0.25
      %v3069 = vmul.f32 %v2773, 0.25
      %v3070 = vmul.f32 %v2631, 0.25
      %v3071 = vmul.f32 %v2774, 0.25
      %v3072 = vmul.f32 %v2634, 0.25
      %v3073 = vmul.f32 %v2775, 0.25
      %v3074 = vmul.f32 %v2637, 0.25
      %v3075 = vmul.f32 %v2776, 0.25
      %v3076 = vmul.f32 %v2640, 0.25
      %v3077 = vmul.f32 %v2777, 0.25
      %v3078 = vmul.f32 %v2643, 0.25
      %v3079 = vmul.f32 %v2778, 0.25
      %v3080 = vmul.f32 %v2646, 0.25
      %v3081 = vmul.f32 %v2779, 0.25
      %v3082 = vmul.f32 %v2649, 0.25
      %v3083 = vmul.f32 %v2780, 0.25
      %v3084 = vmul.f32 %v2652, 0.25
      %v3085 = vmul.f32 %v2781, 0.25
      %v3086 = vmul.f32 %v2655, 0.25
      %v3087 = vmul.f32 %v2782, 0.25
      %v3088 = vmul.f32 %v2658, 0.25
      %v3089 = vmul.f32 %v2783, 0.25
      %v3090 = vmul.f32 %v2661, 0.25
      %v3091 = vmul.f32 %v2784, 0.25
      %v3092 = vmul.f32 %v2664, 0.25
      %v3093 = vmul.f32 %v2785, 0.25
      %v3094 = vmul.f32 %v2667, 0.25
      %v3095 = vmul.f32 %v2786, 0.25
      %v3096 = vmul.f32 %v2670, 0.25
      %v3097 = vmul.f32 %v2787, 0.25
      %v3098 = vmul.f32 %v2673, 0.25
      %v3099 = vmul.f32 %v2788, 0.25
      %v3100 = vmul.f32 %v2676, 0.25
      %v3101 = vmul.f32 %v2789, 0.25
      %v3102 = vmul.f32 %v2679, 0.25
      %v3103 = vmul.f32 %v2790, 0.25
      %v3104 = vmul.f32 %v2682, 0.25
      %v3105 = vmul.f32 %v2791, 0.25
      %v3106 = vmul.f32 %v2685, 0.25
      %v3107 = vmul.f32 %v2792, 0.25
      %v3108 = vmul.f32 %v2688, 0.25
      %v3109 = vmul.f32 %v2793, 0.25
      %v3110 = vmul.f32 %v2691, 0.25
      %v3111 = vmul.f32 %v2794, 0.25
      %v3112 = vmul.f32 %v2694, 0.25
      %v3113 = vmul.f32 %v2795, 0.25
      %v3114 = vmul.f32 %v2697, 0.25
      %v3115 = vmul.f32 %v2796, 0.25
      %v3116 = vmul.f32 %v2700, 0.25
      %v3117 = vadd.f32 %v2989, %v3053
      %v3118 = vadd.f32 %v2990, %v3054
      %v3119 = vadd.f32 %v2991, %v3055
      %v3120 = vadd.f32 %v2992, %v3056
      %v3121 = vadd.f32 %v2993, %v3057
      %v3122 = vadd.f32 %v2994, %v3058
      %v3123 = vadd.f32 %v2995, %v3059
      %v3124 = vadd.f32 %v2996, %v3060
      %v3125 = vadd.f32 %v2997, %v3061
      %v3126 = vadd.f32 %v2998, %v3062
      %v3127 = vadd.f32 %v2999, %v3063
      %v3128 = vadd.f32 %v3000, %v3064
      %v3129 = vadd.f32 %v3001, %v3065
      %v3130 = vadd.f32 %v3002, %v3066
      %v3131 = vadd.f32 %v3003, %v3067
      %v3132 = vadd.f32 %v3004, %v3068
      %v3133 = vadd.f32 %v3005, %v3069
      %v3134 = vadd.f32 %v3006, %v3070
      %v3135 = vadd.f32 %v3007, %v3071
      %v3136 = vadd.f32 %v3008, %v3072
      %v3137 = vadd.f32 %v3009, %v3073
      %v3138 = vadd.f32 %v3010, %v3074
      %v3139 = vadd.f32 %v3011, %v3075
      %v3140 = vadd.f32 %v3012, %v3076
      %v3141 = vadd.f32 %v3013, %v3077
      %v3142 = vadd.f32 %v3014, %v3078
      %v3143 = vadd.f32 %v3015, %v3079
      %v3144 = vadd.f32 %v3016, %v3080
      %v3145 = vadd.f32 %v3017, %v3081
      %v3146 = vadd.f32 %v3018, %v3082
      %v3147 = vadd.f32 %v3019, %v3083
      %v3148 = vadd.f32 %v3020, %v3084
      %v3149 = vadd.f32 %v3021, %v3085
      %v3150 = vadd.f32 %v3022, %v3086
      %v3151 = vadd.f32 %v3023, %v3087
      %v3152 = vadd.f32 %v3024, %v3088
      %v3153 = vadd.f32 %v3025, %v3089
      %v3154 = vadd.f32 %v3026, %v3090
      %v3155 = vadd.f32 %v3027, %v3091
      %v3156 = vadd.f32 %v3028, %v3092
      %v3157 = vadd.f32 %v3029, %v3093
      %v3158 = vadd.f32 %v3030, %v3094
      %v3159 = vadd.f32 %v3031, %v3095
      %v3160 = vadd.f32 %v3032, %v3096
      %v3161 = vadd.f32 %v3033, %v3097
      %v3162 = vadd.f32 %v3034, %v3098
      %v3163 = vadd.f32 %v3035, %v3099
      %v3164 = vadd.f32 %v3036, %v3100
      %v3165 = vadd.f32 %v3037, %v3101
      %v3166 = vadd.f32 %v3038, %v3102
      %v3167 = vadd.f32 %v3039, %v3103
      %v3168 = vadd.f32 %v3040, %v3104
      %v3169 = vadd.f32 %v3041, %v3105
      %v3170 = vadd.f32 %v3042, %v3106
      %v3171 = vadd.f32 %v3043, %v3107
      %v3172 = vadd.f32 %v3044, %v3108
      %v3173 = vadd.f32 %v3045, %v3109
      %v3174 = vadd.f32 %v3046, %v3110
      %v3175 = vadd.f32 %v3047, %v3111
      %v3176 = vadd.f32 %v3048, %v3112
      %v3177 = vadd.f32 %v3049, %v3113
      %v3178 = vadd.f32 %v3050, %v3114
      %v3179 = vadd.f32 %v3051, %v3115
      %v3180 = vadd.f32 %v3052, %v3116
      %v3181 = vmul.f32 %v2799, 0.25
      %v3182 = vmul.f32 %v2957, 0.25
      %v3183 = vmul.f32 %v2802, 0.25
      %v3184 = vmul.f32 %v2958, 0.25
      %v3185 = vmul.f32 %v2805, 0.25
      %v3186 = vmul.f32 %v2959, 0.25
      %v3187 = vmul.f32 %v2808, 0.25
      %v3188 = vmul.f32 %v2960, 0.25
      %v3189 = vmul.f32 %v2811, 0.25
      %v3190 = vmul.f32 %v2961, 0.25
      %v3191 = vmul.f32 %v2814, 0.25
      %v3192 = vmul.f32 %v2962, 0.25
      %v3193 = vmul.f32 %v2817, 0.25
      %v3194 = vmul.f32 %v2963, 0.25
      %v3195 = vmul.f32 %v2820, 0.25
      %v3196 = vmul.f32 %v2964, 0.25
      %v3197 = vmul.f32 %v2823, 0.25
      %v3198 = vmul.f32 %v2965, 0.25
      %v3199 = vmul.f32 %v2826, 0.25
      %v3200 = vmul.f32 %v2966, 0.25
      %v3201 = vmul.f32 %v2829, 0.25
      %v3202 = vmul.f32 %v2967, 0.25
      %v3203 = vmul.f32 %v2832, 0.25
      %v3204 = vmul.f32 %v2968, 0.25
      %v3205 = vmul.f32 %v2835, 0.25
      %v3206 = vmul.f32 %v2969, 0.25
      %v3207 = vmul.f32 %v2838, 0.25
      %v3208 = vmul.f32 %v2970, 0.25
      %v3209 = vmul.f32 %v2841, 0.25
      %v3210 = vmul.f32 %v2971, 0.25
      %v3211 = vmul.f32 %v2844, 0.25
      %v3212 = vmul.f32 %v2972, 0.25
      %v3213 = vmul.f32 %v2847, 0.25
      %v3214 = vmul.f32 %v2973, 0.25
      %v3215 = vmul.f32 %v2850, 0.25
      %v3216 = vmul.f32 %v2974, 0.25
      %v3217 = vmul.f32 %v2853, 0.25
      %v3218 = vmul.f32 %v2975, 0.25
      %v3219 = vmul.f32 %v2856, 0.25
      %v3220 = vmul.f32 %v2976, 0.25
      %v3221 = vmul.f32 %v2859, 0.25
      %v3222 = vmul.f32 %v2977, 0.25
      %v3223 = vmul.f32 %v2862, 0.25
      %v3224 = vmul.f32 %v2978, 0.25
      %v3225 = vmul.f32 %v2865, 0.25
      %v3226 = vmul.f32 %v2979, 0.25
      %v3227 = vmul.f32 %v2868, 0.25
      %v3228 = vmul.f32 %v2980, 0.25
      %v3229 = vmul.f32 %v2871, 0.25
      %v3230 = vmul.f32 %v2981, 0.25
      %v3231 = vmul.f32 %v2874, 0.25
      %v3232 = vmul.f32 %v2982, 0.25
      %v3233 = vmul.f32 %v2877, 0.25
      %v3234 = vmul.f32 %v2983, 0.25
      %v3235 = vmul.f32 %v2880, 0.25
      %v3236 = vmul.f32 %v2984, 0.25
      %v3237 = vmul.f32 %v2883, 0.25
      %v3238 = vmul.f32 %v2985, 0.25
      %v3239 = vmul.f32 %v2886, 0.25
      %v3240 = vmul.f32 %v2986, 0.25
      %v3241 = vmul.f32 %v2889, 0.25
      %v3242 = vmul.f32 %v2987, 0.25
      %v3243 = vmul.f32 %v2892, 0.25
      %v3244 = vmul.f32 %v2988, 0.25
      %v3245 = vadd.f32 %v2989, %v3181
      %v3246 = vadd.f32 %v2990, %v3182
      %v3247 = vadd.f32 %v2991, %v3183
      %v3248 = vadd.f32 %v2992, %v3184
      %v3249 = vadd.f32 %v2993, %v3185
      %v3250 = vadd.f32 %v2994, %v3186
      %v3251 = vadd.f32 %v2995, %v3187
      %v3252 = vadd.f32 %v2996, %v3188
      %v3253 = vadd.f32 %v2997, %v3189
      %v3254 = vadd.f32 %v2998, %v3190
      %v3255 = vadd.f32 %v2999, %v3191
      %v3256 = vadd.f32 %v3000, %v3192
      %v3257 = vadd.f32 %v3001, %v3193
      %v3258 = vadd.f32 %v3002, %v3194
      %v3259 = vadd.f32 %v3003, %v3195
      %v3260 = vadd.f32 %v3004, %v3196
      %v3261 = vadd.f32 %v3005, %v3197
      %v3262 = vadd.f32 %v3006, %v3198
      %v3263 = vadd.f32 %v3007, %v3199
      %v3264 = vadd.f32 %v3008, %v3200
      %v3265 = vadd.f32 %v3009, %v3201
      %v3266 = vadd.f32 %v3010, %v3202
      %v3267 = vadd.f32 %v3011, %v3203
      %v3268 = vadd.f32 %v3012, %v3204
      %v3269 = vadd.f32 %v3013, %v3205
      %v3270 = vadd.f32 %v3014, %v3206
      %v3271 = vadd.f32 %v3015, %v3207
      %v3272 = vadd.f32 %v3016, %v3208
      %v3273 = vadd.f32 %v3017, %v3209
      %v3274 = vadd.f32 %v3018, %v3210
      %v3275 = vadd.f32 %v3019, %v3211
      %v3276 = vadd.f32 %v3020, %v3212
      %v3277 = vadd.f32 %v3021, %v3213
      %v3278 = vadd.f32 %v3022, %v3214
      %v3279 = vadd.f32 %v3023, %v3215
      %v3280 = vadd.f32 %v3024, %v3216
      %v3281 = vadd.f32 %v3025, %v3217
      %v3282 = vadd.f32 %v3026, %v3218
      %v3283 = vadd.f32 %v3027, %v3219
      %v3284 = vadd.f32 %v3028, %v3220
      %v3285 = vadd.f32 %v3029, %v3221
      %v3286 = vadd.f32 %v3030, %v3222
      %v3287 = vadd.f32 %v3031, %v3223
      %v3288 = vadd.f32 %v3032, %v3224
      %v3289 = vadd.f32 %v3033, %v3225
      %v3290 = vadd.f32 %v3034, %v3226
      %v3291 = vadd.f32 %v3035, %v3227
      %v3292 = vadd.f32 %v3036, %v3228
      %v3293 = vadd.f32 %v3037, %v3229
      %v3294 = vadd.f32 %v3038, %v3230
      %v3295 = vadd.f32 %v3039, %v3231
      %v3296 = vadd.f32 %v3040, %v3232
      %v3297 = vadd.f32 %v3041, %v3233
      %v3298 = vadd.f32 %v3042, %v3234
      %v3299 = vadd.f32 %v3043, %v3235
      %v3300 = vadd.f32 %v3044, %v3236
      %v3301 = vadd.f32 %v3045, %v3237
      %v3302 = vadd.f32 %v3046, %v3238
      %v3303 = vadd.f32 %v3047, %v3239
      %v3304 = vadd.f32 %v3048, %v3240
      %v3305 = vadd.f32 %v3049, %v3241
      %v3306 = vadd.f32 %v3050, %v3242
      %v3307 = vadd.f32 %v3051, %v3243
      %v3308 = vadd.f32 %v3052, %v3244
      %3373 = vrot.lane.b32.xlu0 %v3245, 8
      %v3374 = vpop.permute.xlu0 %3373
      %3375 = vrot.lane.b32.xlu0 %v3246, 8
      %v3376 = vpop.permute.xlu0 %3375
      %3377 = vrot.lane.b32.xlu0 %v3247, 8
      %v3378 = vpop.permute.xlu0 %3377
      %3379 = vrot.lane.b32.xlu0 %v3248, 8
      %v3380 = vpop.permute.xlu0 %3379
      %3381 = vrot.lane.b32.xlu0 %v3249, 8
      %v3382 = vpop.permute.xlu0 %3381
      %3383 = vrot.lane.b32.xlu0 %v3250, 8
      %v3384 = vpop.permute.xlu0 %3383
      %3385 = vrot.lane.b32.xlu0 %v3251, 8
      %v3386 = vpop.permute.xlu0 %3385
      %3387 = vrot.lane.b32.xlu0 %v3252, 8
      %v3388 = vpop.permute.xlu0 %3387
      %3389 = vrot.lane.b32.xlu0 %v3253, 8
      %v3390 = vpop.permute.xlu0 %3389
      %3391 = vrot.lane.b32.xlu0 %v3254, 8
      %v3392 = vpop.permute.xlu0 %3391
      %3393 = vrot.lane.b32.xlu0 %v3255, 8
      %v3394 = vpop.permute.xlu0 %3393
      %3395 = vrot.lane.b32.xlu0 %v3256, 8
      %v3396 = vpop.permute.xlu0 %3395
      %3397 = vrot.lane.b32.xlu0 %v3257, 8
      %v3398 = vpop.permute.xlu0 %3397
      %3399 = vrot.lane.b32.xlu0 %v3258, 8
      %v3400 = vpop.permute.xlu0 %3399
      %3401 = vrot.lane.b32.xlu0 %v3259, 8
      %v3402 = vpop.permute.xlu0 %3401
      %3403 = vrot.lane.b32.xlu0 %v3260, 8
      %v3404 = vpop.permute.xlu0 %3403
      %3405 = vrot.lane.b32.xlu0 %v3261, 8
      %v3406 = vpop.permute.xlu0 %3405
      %3407 = vrot.lane.b32.xlu0 %v3262, 8
      %v3408 = vpop.permute.xlu0 %3407
      %3409 = vrot.lane.b32.xlu0 %v3263, 8
      %v3410 = vpop.permute.xlu0 %3409
      %3411 = vrot.lane.b32.xlu0 %v3264, 8
      %v3412 = vpop.permute.xlu0 %3411
      %3413 = vrot.lane.b32.xlu0 %v3265, 8
      %v3414 = vpop.permute.xlu0 %3413
      %3415 = vrot.lane.b32.xlu0 %v3266, 8
      %v3416 = vpop.permute.xlu0 %3415
      %3417 = vrot.lane.b32.xlu0 %v3267, 8
      %v3418 = vpop.permute.xlu0 %3417
      %3419 = vrot.lane.b32.xlu0 %v3268, 8
      %v3420 = vpop.permute.xlu0 %3419
      %3421 = vrot.lane.b32.xlu0 %v3269, 8
      %v3422 = vpop.permute.xlu0 %3421
      %3423 = vrot.lane.b32.xlu0 %v3270, 8
      %v3424 = vpop.permute.xlu0 %3423
      %3425 = vrot.lane.b32.xlu0 %v3271, 8
      %v3426 = vpop.permute.xlu0 %3425
      %3427 = vrot.lane.b32.xlu0 %v3272, 8
      %v3428 = vpop.permute.xlu0 %3427
      %3429 = vrot.lane.b32.xlu0 %v3273, 8
      %v3430 = vpop.permute.xlu0 %3429
      %3431 = vrot.lane.b32.xlu0 %v3274, 8
      %v3432 = vpop.permute.xlu0 %3431
      %3433 = vrot.lane.b32.xlu0 %v3275, 8
      %v3434 = vpop.permute.xlu0 %3433
      %3435 = vrot.lane.b32.xlu0 %v3276, 8
      %v3436 = vpop.permute.xlu0 %3435
      %3437 = vrot.lane.b32.xlu0 %v3277, 8
      %v3438 = vpop.permute.xlu0 %3437
      %3439 = vrot.lane.b32.xlu0 %v3278, 8
      %v3440 = vpop.permute.xlu0 %3439
      %3441 = vrot.lane.b32.xlu0 %v3279, 8
      %v3442 = vpop.permute.xlu0 %3441
      %3443 = vrot.lane.b32.xlu0 %v3280, 8
      %v3444 = vpop.permute.xlu0 %3443
      %3445 = vrot.lane.b32.xlu0 %v3281, 8
      %v3446 = vpop.permute.xlu0 %3445
      %3447 = vrot.lane.b32.xlu0 %v3282, 8
      %v3448 = vpop.permute.xlu0 %3447
      %3449 = vrot.lane.b32.xlu0 %v3283, 8
      %v3450 = vpop.permute.xlu0 %3449
      %3451 = vrot.lane.b32.xlu0 %v3284, 8
      %v3452 = vpop.permute.xlu0 %3451
      %3453 = vrot.lane.b32.xlu0 %v3285, 8
      %v3454 = vpop.permute.xlu0 %3453
      %3455 = vrot.lane.b32.xlu0 %v3286, 8
      %v3456 = vpop.permute.xlu0 %3455
      %3457 = vrot.lane.b32.xlu0 %v3287, 8
      %v3458 = vpop.permute.xlu0 %3457
      %3459 = vrot.lane.b32.xlu0 %v3288, 8
      %v3460 = vpop.permute.xlu0 %3459
      %3461 = vrot.lane.b32.xlu0 %v3289, 8
      %v3462 = vpop.permute.xlu0 %3461
      %3463 = vrot.lane.b32.xlu0 %v3290, 8
      %v3464 = vpop.permute.xlu0 %3463
      %3465 = vrot.lane.b32.xlu0 %v3291, 8
      %v3466 = vpop.permute.xlu0 %3465
      %3467 = vrot.lane.b32.xlu0 %v3292, 8
      %v3468 = vpop.permute.xlu0 %3467
      %3469 = vrot.lane.b32.xlu0 %v3293, 8
      %v3470 = vpop.permute.xlu0 %3469
      %3471 = vrot.lane.b32.xlu0 %v3294, 8
      %v3472 = vpop.permute.xlu0 %3471
      %3473 = vrot.lane.b32.xlu0 %v3295, 8
      %v3474 = vpop.permute.xlu0 %3473
      %3475 = vrot.lane.b32.xlu0 %v3296, 8
      %v3476 = vpop.permute.xlu0 %3475
      %3477 = vrot.lane.b32.xlu0 %v3297, 8
      %v3478 = vpop.permute.xlu0 %3477
      %3479 = vrot.lane.b32.xlu0 %v3298, 8
      %v3480 = vpop.permute.xlu0 %3479
      %3481 = vrot.lane.b32.xlu0 %v3299, 8
      %v3482 = vpop.permute.xlu0 %3481
      %3483 = vrot.lane.b32.xlu0 %v3300, 8
      %v3484 = vpop.permute.xlu0 %3483
      %3485 = vrot.lane.b32.xlu0 %v3301, 8
      %v3486 = vpop.permute.xlu0 %3485
      %3487 = vrot.lane.b32.xlu0 %v3302, 8
      %v3488 = vpop.permute.xlu0 %3487
      %3489 = vrot.lane.b32.xlu0 %v3303, 8
      %v3490 = vpop.permute.xlu0 %3489
      %3491 = vrot.lane.b32.xlu0 %v3304, 8
      %v3492 = vpop.permute.xlu0 %3491
      %3493 = vrot.lane.b32.xlu0 %v3305, 8
      %v3494 = vpop.permute.xlu0 %3493
      %3495 = vrot.lane.b32.xlu0 %v3306, 8
      %v3496 = vpop.permute.xlu0 %3495
      %3497 = vrot.lane.b32.xlu0 %v3307, 8
      %v3498 = vpop.permute.xlu0 %3497
      %3499 = vrot.lane.b32.xlu0 %v3308, 8
      %v3500 = vpop.permute.xlu0 %3499
      %v3565 = vsel %vm1343, %v3117, %v3374
      %v3566 = vsel %vm1343, %v3118, %v3376
      %v3567 = vsel %vm1343, %v3119, %v3378
      %v3568 = vsel %vm1343, %v3120, %v3380
      %v3569 = vsel %vm1343, %v3121, %v3382
      %v3570 = vsel %vm1343, %v3122, %v3384
      %v3571 = vsel %vm1343, %v3123, %v3386
      %v3572 = vsel %vm1343, %v3124, %v3388
      %v3573 = vsel %vm1343, %v3125, %v3390
      %v3574 = vsel %vm1343, %v3126, %v3392
      %v3575 = vsel %vm1343, %v3127, %v3394
      %v3576 = vsel %vm1343, %v3128, %v3396
      %v3577 = vsel %vm1343, %v3129, %v3398
      %v3578 = vsel %vm1343, %v3130, %v3400
      %v3579 = vsel %vm1343, %v3131, %v3402
      %v3580 = vsel %vm1343, %v3132, %v3404
      %v3581 = vsel %vm1343, %v3133, %v3406
      %v3582 = vsel %vm1343, %v3134, %v3408
      %v3583 = vsel %vm1343, %v3135, %v3410
      %v3584 = vsel %vm1343, %v3136, %v3412
      %v3585 = vsel %vm1343, %v3137, %v3414
      %v3586 = vsel %vm1343, %v3138, %v3416
      %v3587 = vsel %vm1343, %v3139, %v3418
      %v3588 = vsel %vm1343, %v3140, %v3420
      %v3589 = vsel %vm1343, %v3141, %v3422
      %v3590 = vsel %vm1343, %v3142, %v3424
      %v3591 = vsel %vm1343, %v3143, %v3426
      %v3592 = vsel %vm1343, %v3144, %v3428
      %v3593 = vsel %vm1343, %v3145, %v3430
      %v3594 = vsel %vm1343, %v3146, %v3432
      %v3595 = vsel %vm1343, %v3147, %v3434
      %v3596 = vsel %vm1343, %v3148, %v3436
      %v3597 = vsel %vm1343, %v3149, %v3438
      %v3598 = vsel %vm1343, %v3150, %v3440
      %v3599 = vsel %vm1343, %v3151, %v3442
      %v3600 = vsel %vm1343, %v3152, %v3444
      %v3601 = vsel %vm1343, %v3153, %v3446
      %v3602 = vsel %vm1343, %v3154, %v3448
      %v3603 = vsel %vm1343, %v3155, %v3450
      %v3604 = vsel %vm1343, %v3156, %v3452
      %v3605 = vsel %vm1343, %v3157, %v3454
      %v3606 = vsel %vm1343, %v3158, %v3456
      %v3607 = vsel %vm1343, %v3159, %v3458
      %v3608 = vsel %vm1343, %v3160, %v3460
      %v3609 = vsel %vm1343, %v3161, %v3462
      %v3610 = vsel %vm1343, %v3162, %v3464
      %v3611 = vsel %vm1343, %v3163, %v3466
      %v3612 = vsel %vm1343, %v3164, %v3468
      %v3613 = vsel %vm1343, %v3165, %v3470
      %v3614 = vsel %vm1343, %v3166, %v3472
      %v3615 = vsel %vm1343, %v3167, %v3474
      %v3616 = vsel %vm1343, %v3168, %v3476
      %v3617 = vsel %vm1343, %v3169, %v3478
      %v3618 = vsel %vm1343, %v3170, %v3480
      %v3619 = vsel %vm1343, %v3171, %v3482
      %v3620 = vsel %vm1343, %v3172, %v3484
      %v3621 = vsel %vm1343, %v3173, %v3486
      %v3622 = vsel %vm1343, %v3174, %v3488
      %v3623 = vsel %vm1343, %v3175, %v3490
      %v3624 = vsel %vm1343, %v3176, %v3492
      %v3625 = vsel %vm1343, %v3177, %v3494
      %v3626 = vsel %vm1343, %v3178, %v3496
      %v3627 = vsel %vm1343, %v3179, %v3498
      %v3628 = vsel %vm1343, %v3180, %v3500
      %3629 = vst.msk [vmem:[%s251] sm:$0xff] %vm1409, %v3565
      %3630 = vst.msk [vmem:[%s251 + $0x8] sm:$0xff] %vm1409, %v3566
      %3631 = vst.msk [vmem:[%s251 + $0x10] sm:$0xff] %vm1409, %v3567
      %3632 = vst.msk [vmem:[%s251 + $0x18] sm:$0xff] %vm1409, %v3568
      %3633 = vst.msk [vmem:[%s251 + $0x20] sm:$0xff] %vm1409, %v3569
      %3634 = vst.msk [vmem:[%s251 + $0x28] sm:$0xff] %vm1409, %v3570
      %3635 = vst.msk [vmem:[%s251 + $0x30] sm:$0xff] %vm1409, %v3571
      %3636 = vst.msk [vmem:[%s251 + $0x38] sm:$0xff] %vm1409, %v3572
      %3637 = vst.msk [vmem:[%s251 + $0x40] sm:$0xff] %vm1409, %v3573
      %3638 = vst.msk [vmem:[%s251 + $0x48] sm:$0xff] %vm1409, %v3574
      %3639 = vst.msk [vmem:[%s251 + $0x50] sm:$0xff] %vm1409, %v3575
      %3640 = vst.msk [vmem:[%s251 + $0x58] sm:$0xff] %vm1409, %v3576
      %3641 = vst.msk [vmem:[%s251 + $0x60] sm:$0xff] %vm1409, %v3577
      %3642 = vst.msk [vmem:[%s251 + $0x68] sm:$0xff] %vm1409, %v3578
      %3643 = vst.msk [vmem:[%s251 + $0x70] sm:$0xff] %vm1409, %v3579
      %3644 = vst.msk [vmem:[%s251 + $0x78] sm:$0xff] %vm1409, %v3580
      %3645 = vst.msk [vmem:[%s251 + $0x80] sm:$0xff] %vm1409, %v3581
      %3646 = vst.msk [vmem:[%s251 + $0x88] sm:$0xff] %vm1409, %v3582
      %3647 = vst.msk [vmem:[%s251 + $0x90] sm:$0xff] %vm1409, %v3583
      %3648 = vst.msk [vmem:[%s251 + $0x98] sm:$0xff] %vm1409, %v3584
      %3649 = vst.msk [vmem:[%s251 + $0xa0] sm:$0xff] %vm1409, %v3585
      %3650 = vst.msk [vmem:[%s251 + $0xa8] sm:$0xff] %vm1409, %v3586
      %3651 = vst.msk [vmem:[%s251 + $0xb0] sm:$0xff] %vm1409, %v3587
      %3652 = vst.msk [vmem:[%s251 + $0xb8] sm:$0xff] %vm1409, %v3588
      %3653 = vst.msk [vmem:[%s251 + $0xc0] sm:$0xff] %vm1409, %v3589
      %3654 = vst.msk [vmem:[%s251 + $0xc8] sm:$0xff] %vm1409, %v3590
      %3655 = vst.msk [vmem:[%s251 + $0xd0] sm:$0xff] %vm1409, %v3591
      %3656 = vst.msk [vmem:[%s251 + $0xd8] sm:$0xff] %vm1409, %v3592
      %3657 = vst.msk [vmem:[%s251 + $0xe0] sm:$0xff] %vm1409, %v3593
      %3658 = vst.msk [vmem:[%s251 + $0xe8] sm:$0xff] %vm1409, %v3594
      %3659 = vst.msk [vmem:[%s251 + $0xf0] sm:$0xff] %vm1409, %v3595
      %3660 = vst.msk [vmem:[%s251 + $0xf8] sm:$0xff] %vm1409, %v3596
      %3661 = vst.msk [vmem:[%s251 + $0x100] sm:$0xff] %vm1409, %v3597
      %3662 = vst.msk [vmem:[%s251 + $0x108] sm:$0xff] %vm1409, %v3598
      %3663 = vst.msk [vmem:[%s251 + $0x110] sm:$0xff] %vm1409, %v3599
      %3664 = vst.msk [vmem:[%s251 + $0x118] sm:$0xff] %vm1409, %v3600
      %3665 = vst.msk [vmem:[%s251 + $0x120] sm:$0xff] %vm1409, %v3601
      %3666 = vst.msk [vmem:[%s251 + $0x128] sm:$0xff] %vm1409, %v3602
      %3667 = vst.msk [vmem:[%s251 + $0x130] sm:$0xff] %vm1409, %v3603
      %3668 = vst.msk [vmem:[%s251 + $0x138] sm:$0xff] %vm1409, %v3604
      %3669 = vst.msk [vmem:[%s251 + $0x140] sm:$0xff] %vm1409, %v3605
      %3670 = vst.msk [vmem:[%s251 + $0x148] sm:$0xff] %vm1409, %v3606
      %3671 = vst.msk [vmem:[%s251 + $0x150] sm:$0xff] %vm1409, %v3607
      %3672 = vst.msk [vmem:[%s251 + $0x158] sm:$0xff] %vm1409, %v3608
      %3673 = vst.msk [vmem:[%s251 + $0x160] sm:$0xff] %vm1409, %v3609
      %3674 = vst.msk [vmem:[%s251 + $0x168] sm:$0xff] %vm1409, %v3610
      %3675 = vst.msk [vmem:[%s251 + $0x170] sm:$0xff] %vm1409, %v3611
      %3676 = vst.msk [vmem:[%s251 + $0x178] sm:$0xff] %vm1409, %v3612
      %3677 = vst.msk [vmem:[%s251 + $0x180] sm:$0xff] %vm1409, %v3613
      %3678 = vst.msk [vmem:[%s251 + $0x188] sm:$0xff] %vm1409, %v3614
      %3679 = vst.msk [vmem:[%s251 + $0x190] sm:$0xff] %vm1409, %v3615
      %3680 = vst.msk [vmem:[%s251 + $0x198] sm:$0xff] %vm1409, %v3616
      %3681 = vst.msk [vmem:[%s251 + $0x1a0] sm:$0xff] %vm1409, %v3617
      %3682 = vst.msk [vmem:[%s251 + $0x1a8] sm:$0xff] %vm1409, %v3618
      %3683 = vst.msk [vmem:[%s251 + $0x1b0] sm:$0xff] %vm1409, %v3619
      %3684 = vst.msk [vmem:[%s251 + $0x1b8] sm:$0xff] %vm1409, %v3620
      %3685 = vst.msk [vmem:[%s251 + $0x1c0] sm:$0xff] %vm1409, %v3621
      %3686 = vst.msk [vmem:[%s251 + $0x1c8] sm:$0xff] %vm1409, %v3622
      %3687 = vst.msk [vmem:[%s251 + $0x1d0] sm:$0xff] %vm1409, %v3623
      %3688 = vst.msk [vmem:[%s251 + $0x1d8] sm:$0xff] %vm1409, %v3624
      %3689 = vst.msk [vmem:[%s251 + $0x1e0] sm:$0xff] %vm1409, %v3625
      %3690 = vst.msk [vmem:[%s251 + $0x1e8] sm:$0xff] %vm1409, %v3626
      %3691 = vst.msk [vmem:[%s251 + $0x1f0] sm:$0xff] %vm1409, %v3627
      %3692 = vst.msk [vmem:[%s251 + $0x1f8] sm:$0xff] %vm1409, %v3628
      %p3693 = scmp.lt.s32.totalorder %s17, 1
      %s3694 = scalar_select %p3693, %s17, 1
      %s3695 = smul.addr %s3694, 64
      %s3696 = smul.addr %s3695, 8
      %s3697 = scalar_lea.vmem %s6, %s3696
      // Predicated region
      $region45: #{tpu_custom_call.1} parent=43 // pred_check
        %p3698 = pneg %p166
      $region46: #{tpu_custom_call.1} parent=43 // pred_check_branch
        %3700 = sbr.rel (%p3698) target = $region48
      $region47: #{tpu_custom_call.1} parent=43 // pred_region
        _
      $region48: #{tpu_custom_call.1} parent=43 // pred_fallthru
        _
    $region44: #{tpu_custom_call.1} parent=5 // pred_fallthru
      _
    %p3701 = scmp.le.s32.totalorder 2, %s12
    // Predicated region
    $region49: #{tpu_custom_call.1} parent=5 // pred_check
      %p3702 = pneg %p3701
    $region50: #{tpu_custom_call.1} parent=5 // pred_check_branch
      %3704 = sbr.rel (%p3702) target = $region52
    $region51: #{tpu_custom_call.1} parent=5 // pred_region
      %s3705 = ssub.s32 %s12, 2
      // Predicated region
      $region53: #{tpu_custom_call.1} parent=51 // pred_check
        %p3706 = pneg %p172
      $region54: #{tpu_custom_call.1} parent=51 // pred_check_branch
        %3708 = sbr.rel (%p3706) target = $region56
      $region55: #{tpu_custom_call.1} parent=51 // pred_region
        %p3709 = scmp.lt.s32.totalorder %s18, 1
        %s3710 = scalar_select %p3709, %s18, 1
        %s3711 = smul.addr %s3710, 64
        %s3712 = smul.addr %s3711, 8
        %s3713 = scalar_lea.vmem %s6, %s3712
      $region56: #{tpu_custom_call.1} parent=51 // pred_fallthru
        _
    $region52: #{tpu_custom_call.1} parent=5 // pred_fallthru
      _
  $region6: #{tpu_custom_call.1} parent=0 // loop_footer
    %s16 = sadd.s32 1, %s12
  $region7: #{tpu_custom_call.1} parent=0 // loop_footer_branch
    %11 = sbr.rel target = $region3
  $region8: #{tpu_custom_call.1} parent=0 // loop_exit
    _

</llo_original>
